<compile_context>
chip_gen: v7x
topology: tpu7x:2x2x1
jax: 0.10.0
libtpu: 0.0.40
codegen_flags: <defaults>
</compile_context>

<pallas_src>
import jax
import jax.numpy as jnp
from jax.experimental import pallas as pl
from jax.experimental.pallas import tpu as pltpu


def _sigmoid(v):
    return 1.0 / (1.0 + jnp.exp(-v))


def _zero_pad_hw(x):
    """Zero-pad a (B, H, W, C) VALUE by 1 pixel on each side of H and W.

    Pure value-level op (concatenate with zero borders), VMEM resident — no
    scratch zero-fill / masked partial store / reload."""
    B, H, W, C = x.shape
    zrow = jnp.zeros((B, 1, W, C), x.dtype)
    x = jnp.concatenate([zrow, x, zrow], axis=1)          # pad H (leading dim)
    zcol = jnp.zeros((B, H + 2, 1, C), x.dtype)
    return jnp.concatenate([zcol, x, zcol], axis=2)       # pad W (sublane dim)


def _conv3x3_relu_pool(x, w_ref, b_ref):
    """x: (B, H, W, Cin) value; w_ref: (9*Cin, Cout); b_ref: (1, Cout).

    conv3x3(pad=1) + bias + ReLU + 2x2/stride-2 max-pool, all VMEM resident.
    The 9 shifted taps are concatenated along the lane axis so the whole conv
    is ONE MXU matmul with K = 9*Cin."""
    B, H, W, Cin = x.shape
    Cout = w_ref.shape[-1]
    src = _zero_pad_hw(x)                                 # (B, H+2, W+2, Cin)
    pieces = [src[:, di:di + H, dj:dj + W, :].reshape(B * H * W, Cin)
              for di in range(3) for dj in range(3)]
    patches = jnp.concatenate(pieces, axis=-1)            # (B*H*W, 9*Cin)
    y = jnp.dot(patches, w_ref[...], preferred_element_type=jnp.float32)
    y = jnp.maximum(y + b_ref[...], 0.0).reshape(B, H, W, Cout)
    # fused 2x2 max-pool (stride 2): slices + elementwise max only.
    z = y.reshape(B, H, W // 2, 2, Cout)
    y = jnp.maximum(z[:, :, :, 0, :], z[:, :, :, 1, :])   # pool along W
    z = y.reshape(B, H // 2, 2, W // 2, Cout)
    return jnp.maximum(z[:, :, 0, :, :], z[:, :, 1, :, :])  # pool along H


# ------------------------------ fused kernel --------------------------------

def _music_encoder_kernel(x_ref, w1_ref, b1_ref, w2_ref, b2_ref,
                          wi_ref, wh_ref, bi_ref, bh_ref, wo_ref, bo_ref,
                          o_ref):
    x = x_ref[...]                                        # (1, H, W, Cin)

    # ---- MCB: two conv3x3(pad=1)+ReLU+maxpool2 stages, each ONE matmul ----
    p1 = _conv3x3_relu_pool(x, w1_ref, b1_ref)            # (1, H/2, W/2, C1)
    p2 = _conv3x3_relu_pool(p1, w2_ref, b2_ref)           # (1, T,  W2,  C2)
    B, T, W2, C2 = p2.shape
    Hh = wh_ref.shape[0]

    # ---- GRU input projection for ALL timesteps: ONE K=Din matmul ----
    gi = jnp.dot(p2.reshape(B * T, W2 * C2), wi_ref[...],
                 preferred_element_type=jnp.float32) + bi_ref[...]
    gi = gi.reshape(B, T, 3, Hh)                          # gate-major layout
    bh3 = bh_ref[...].reshape(1, 3, Hh)

    # ---- GRU recurrence (tiny static T -> full unroll) ----
    # t == 0: h == 0, so gh == bh and the z*h term vanishes (exact).
    gi_t = gi[:, 0]
    r = _sigmoid(gi_t[:, 0] + bh3[:, 0])
    z = _sigmoid(gi_t[:, 1] + bh3[:, 1])
    n = jnp.tanh(gi_t[:, 2] + r * bh3[:, 2])
    h = (1.0 - z) * n
    hs = [h]
    # TODO(synk): for realistic T use lax.fori_loop(unroll=k) with carried h
    # and a head accumulator (o_acc += h @ wo[t]) instead of a Python unroll.
    for t in range(1, T):
        gh = (jnp.dot(h, wh_ref[...], preferred_element_type=jnp.float32)
              + bh_ref[...]).reshape(B, 3, Hh)
        gi_t = gi[:, t]
        r = _sigmoid(gi_t[:, 0] + gh[:, 0])
        z = _sigmoid(gi_t[:, 1] + gh[:, 1])
        n = jnp.tanh(gi_t[:, 2] + r * gh[:, 2])
        h = (1.0 - z) * n + z * h
        hs.append(h)

    # ---- head: hidden flatten(-2) + (projection -> fc) folded into ONE linear
    hidden = jnp.concatenate(hs, axis=-1)                 # (1, T*Hh)
    out = jnp.dot(hidden, wo_ref[...],
                  preferred_element_type=jnp.float32) + bo_ref[...]
    o_ref[...] = out.reshape(o_ref.shape)                 # (1, 1, F)


# ------------------------------- wrapper -------------------------------------

def music_encoder_forward(params, x_nchw, GRUdims):
    # TODO(synk): at realistic sizes fold this NCHW->NHWC relayout into the
    # kernel's first load instead of materialising a transposed HBM copy.
    x = jnp.transpose(x_nchw, (0, 2, 3, 1)).astype(jnp.float32)   # NHWC
    B, H, W, Cin = x.shape
    assert H % 4 == 0 and W % 4 == 0, "H and W must be divisible by 4 (two 2x pools)"

    (w1, b1), (w2, b2) = params["mcb"]
    g = params["gru"]
    T, Din = GRUdims[0]
    Hh = GRUdims[-1][1]
    C1, C2 = w1.shape[-1], w2.shape[-1]
    assert (H // 4, (W // 4) * C2) == (T, Din), "MCB output inconsistent with GRUdims"

    # flatten conv weights (tap-major, channel-minor) -> single K=9*Cin matmul
    w1f = w1.reshape(9 * Cin, C1)
    w2f = w2.reshape(9 * C1, C2)
    # flatten fused GRU input weights -> single K=Din matmul
    wif = g["wi"].reshape(Din, 3 * Hh)

    # fold projection -> fc into one linear (valid: no nonlinearity between them)
    wp, bp = params["proj"]
    wf, bf = params["fc"]
    wo = wp @ wf                                          # (T*Hh, F)
    bo = bp @ wf + bf                                     # (1, F)
    feature_dim = wf.shape[1]

    def full(a):
        nd = a.ndim
        return pl.BlockSpec(a.shape, lambda b: (0,) * nd)

    inputs = (x, w1f, b1, w2f, b2, wif, g["wh"], g["bi"], g["bh"], wo, bo)
    in_specs = [pl.BlockSpec((1, H, W, Cin), lambda b: (b, 0, 0, 0))]
    in_specs += [full(a) for a in inputs[1:]]

    out = pl.pallas_call(
        _music_encoder_kernel,
        grid=(B,),                                        # batch-parallel (2 TCs on v7x)
        out_shape=jax.ShapeDtypeStruct((B, 1, feature_dim), jnp.float32),
        in_specs=in_specs,
        out_specs=pl.BlockSpec((1, 1, feature_dim), lambda b: (b, 0, 0)),
        compiler_params=pltpu.CompilerParams(
            dimension_semantics=("parallel",),
            vmem_limit_bytes=32 * 1024 * 1024),
    )(*inputs)
    return out[:, 0, :]


# ------------------------ deterministic param init ---------------------------

def init_params(key, MCBdims, GRUdims, feature_dim=32):
    keys = iter(jax.random.split(key, 16))

    def u(shape, bound):
        return jax.random.uniform(next(keys), shape, jnp.float32, -bound, bound)

    params = {}
    mcb = []
    for cin, cout in zip(MCBdims[:-1], MCBdims[1:]):
        bound = (cin * 9) ** -0.5
        mcb.append((u((9, cin, cout), bound), u((1, cout), bound)))
    params["mcb"] = mcb

    T, Din = GRUdims[0]
    Hh = GRUdims[-1][1]
    C2 = MCBdims[-1]
    W2 = Din // C2
    gb = Hh ** -0.5
    params["gru"] = dict(
        wi=u((W2, C2, 3 * Hh), gb),   # fused input weights [r | z | n]
        wh=u((Hh, 3 * Hh), gb),       # fused recurrent weights [r | z | n]
        bi=u((1, 3 * Hh), gb),        # b_ih (fused)
        bh=u((1, 3 * Hh), gb))        # b_hh (fused)

    pin = GRUdims[-1][0] * GRUdims[-1][1]
    pb = pin ** -0.5
    params["proj"] = (u((pin, feature_dim), pb), u((1, feature_dim), pb))
    fb = feature_dim ** -0.5
    params["fc"] = (u((feature_dim, feature_dim), fb), u((1, feature_dim), fb))
    return params


# ----------------------------- plain-JAX reference ---------------------------

def reference_forward(params, x_nchw, GRUdims):
    x = jnp.transpose(x_nchw, (0, 2, 3, 1)).astype(jnp.float32)
    for w, b in params["mcb"]:
        B, H, W, Cin = x.shape
        Cout = w.shape[-1]
        xp = jnp.pad(x, ((0, 0), (1, 1), (1, 1), (0, 0)))
        pat = jnp.concatenate([xp[:, i:i + H, j:j + W, :]
                               for i in range(3) for j in range(3)], axis=-1)
        y = jnp.maximum(pat.reshape(B * H * W, 9 * Cin) @ w.reshape(9 * Cin, Cout)
                        + b, 0.0).reshape(B, H, W, Cout)
        x = jnp.max(y.reshape(B, H // 2, 2, W // 2, 2, Cout), axis=(2, 4))
    B = x.shape[0]
    T, Din = GRUdims[0]
    Hh = GRUdims[-1][1]
    g = params["gru"]
    seq = x.reshape(B, T, Din)                            # time = H', feat = (W', C')
    gi = seq.reshape(B * T, Din) @ g["wi"].reshape(Din, 3 * Hh) + g["bi"]
    gi = gi.reshape(B, T, 3 * Hh)
    h = jnp.zeros((B, Hh), jnp.float32)
    outs = []
    for t in range(T):
        gh = h @ g["wh"] + g["bh"]
        r = jax.nn.sigmoid(gi[:, t, :Hh] + gh[:, :Hh])
        z = jax.nn.sigmoid(gi[:, t, Hh:2 * Hh] + gh[:, Hh:2 * Hh])
        n = jnp.tanh(gi[:, t, 2 * Hh:] + r * gh[:, 2 * Hh:])
        h = (1.0 - z) * n + z * h
        outs.append(h)
    hidden = jnp.stack(outs, axis=1).reshape(B, T * Hh)
    wp, bp = params["proj"]
    wf, bf = params["fc"]
    return (hidden @ wp + bp) @ wf + bf


if __name__ == "__main__":
    MCBdims = [4, 8, 16]            # conv channels: 4 -> 8 -> 16
    GRUdims = [(4, 64), (4, 16)]    # (T, Din) -> (T, H)
    feature_dim = 32

    key = jax.random.PRNGKey(0)
    pkey, xkey = jax.random.split(key)
    params = init_params(pkey, MCBdims, GRUdims, feature_dim)
    x = jax.random.normal(xkey, (2, 4, 16, 16), jnp.float32)     # NCHW like PyTorch

    fwd = jax.jit(lambda p, xx: music_encoder_forward(p, xx, GRUdims))
    out = jax.block_until_ready(fwd(params, x))

    ref = reference_forward(params, x, GRUdims)
    assert out.shape == (2, feature_dim), out.shape
    assert bool(jnp.allclose(out, ref, atol=2e-3, rtol=2e-3)), "mismatch vs reference"
    print("KERNEL_OK")
</pallas_src>

<mosaic_0001>
module attributes {stable_mosaic.version = 11 : i64} {
  func.func @_music_encoder_kernel(%arg0: i32, %arg1: memref<1x16x16x4xf32, #tpu.memory_space<vmem>>, %arg2: memref<36x8xf32, #tpu.memory_space<vmem>>, %arg3: memref<1x8xf32, #tpu.memory_space<vmem>>, %arg4: memref<72x16xf32, #tpu.memory_space<vmem>>, %arg5: memref<1x16xf32, #tpu.memory_space<vmem>>, %arg6: memref<64x48xf32, #tpu.memory_space<vmem>>, %arg7: memref<16x48xf32, #tpu.memory_space<vmem>>, %arg8: memref<1x48xf32, #tpu.memory_space<vmem>>, %arg9: memref<1x48xf32, #tpu.memory_space<vmem>>, %arg10: memref<64x32xf32, #tpu.memory_space<vmem>>, %arg11: memref<1x32xf32, #tpu.memory_space<vmem>>, %arg12: memref<1x1x32xf32, #tpu.memory_space<vmem>>) attributes {dimension_semantics = [#tpu.dimension_semantics<parallel>], iteration_bounds = array<i64: 2>, scalar_prefetch = 0 : i64, scratch_operands = 0 : i64, tpu.core_type = #tpu.core_type<tc>, window_params = [{transform_indices = @transform_0, window_bounds = array<i64: 1, 16, 16, 4>}, {pipeline_mode = #tpu.pipeline_mode<synchronous>, transform_indices = @transform_1, window_bounds = array<i64: 36, 8>}, {pipeline_mode = #tpu.pipeline_mode<synchronous>, transform_indices = @transform_2, window_bounds = array<i64: 1, 8>}, {pipeline_mode = #tpu.pipeline_mode<synchronous>, transform_indices = @transform_3, window_bounds = array<i64: 72, 16>}, {pipeline_mode = #tpu.pipeline_mode<synchronous>, transform_indices = @transform_4, window_bounds = array<i64: 1, 16>}, {pipeline_mode = #tpu.pipeline_mode<synchronous>, transform_indices = @transform_5, window_bounds = array<i64: 64, 48>}, {pipeline_mode = #tpu.pipeline_mode<synchronous>, transform_indices = @transform_6, window_bounds = array<i64: 16, 48>}, {pipeline_mode = #tpu.pipeline_mode<synchronous>, transform_indices = @transform_7, window_bounds = array<i64: 1, 48>}, {pipeline_mode = #tpu.pipeline_mode<synchronous>, transform_indices = @transform_8, window_bounds = array<i64: 1, 48>}, {pipeline_mode = #tpu.pipeline_mode<synchronous>, transform_indices = @transform_9, window_bounds = array<i64: 64, 32>}, {pipeline_mode = #tpu.pipeline_mode<synchronous>, transform_indices = @transform_10, window_bounds = array<i64: 1, 32>}, {transform_indices = @transform_11, window_bounds = array<i64: 1, 1, 32>}]} {
    %c0 = arith.constant 0 : index
    %c0_0 = arith.constant 0 : index
    %c0_1 = arith.constant 0 : index
    %c0_2 = arith.constant 0 : index
    %0 = vector.load %arg1[%c0, %c0_0, %c0_1, %c0_2] : memref<1x16x16x4xf32, #tpu.memory_space<vmem>>, vector<1x16x16x4xf32>
    %cst = arith.constant 0.000000e+00 : f32
    %1 = vector.broadcast %cst : f32 to vector<1x1x16x4xf32>
    %2 = tpu.concatenate %1, %0, %1 in 1 : vector<1x1x16x4xf32>, vector<1x16x16x4xf32>, vector<1x1x16x4xf32> -> vector<1x18x16x4xf32>
    %cst_3 = arith.constant 0.000000e+00 : f32
    %3 = vector.broadcast %cst_3 : f32 to vector<1x18x1x4xf32>
    %4 = tpu.concatenate %3, %2, %3 in 2 : vector<1x18x1x4xf32>, vector<1x18x16x4xf32>, vector<1x18x1x4xf32> -> vector<1x18x18x4xf32>
    %5 = vector.extract_strided_slice %4 {offsets = [0, 0, 0, 0], sizes = [1, 16, 16, 4], strides = [1, 1, 1, 1]} : vector<1x18x18x4xf32> to vector<1x16x16x4xf32>
    %6 = vector.shape_cast %5 : vector<1x16x16x4xf32> to vector<256x4xf32>
    %7 = vector.extract_strided_slice %4 {offsets = [0, 0, 1, 0], sizes = [1, 16, 16, 4], strides = [1, 1, 1, 1]} : vector<1x18x18x4xf32> to vector<1x16x16x4xf32>
    %8 = vector.shape_cast %7 : vector<1x16x16x4xf32> to vector<256x4xf32>
    %9 = vector.extract_strided_slice %4 {offsets = [0, 0, 2, 0], sizes = [1, 16, 16, 4], strides = [1, 1, 1, 1]} : vector<1x18x18x4xf32> to vector<1x16x16x4xf32>
    %10 = vector.shape_cast %9 : vector<1x16x16x4xf32> to vector<256x4xf32>
    %11 = vector.extract_strided_slice %4 {offsets = [0, 1, 0, 0], sizes = [1, 16, 16, 4], strides = [1, 1, 1, 1]} : vector<1x18x18x4xf32> to vector<1x16x16x4xf32>
    %12 = vector.shape_cast %11 : vector<1x16x16x4xf32> to vector<256x4xf32>
    %13 = vector.extract_strided_slice %4 {offsets = [0, 1, 1, 0], sizes = [1, 16, 16, 4], strides = [1, 1, 1, 1]} : vector<1x18x18x4xf32> to vector<1x16x16x4xf32>
    %14 = vector.shape_cast %13 : vector<1x16x16x4xf32> to vector<256x4xf32>
    %15 = vector.extract_strided_slice %4 {offsets = [0, 1, 2, 0], sizes = [1, 16, 16, 4], strides = [1, 1, 1, 1]} : vector<1x18x18x4xf32> to vector<1x16x16x4xf32>
    %16 = vector.shape_cast %15 : vector<1x16x16x4xf32> to vector<256x4xf32>
    %17 = vector.extract_strided_slice %4 {offsets = [0, 2, 0, 0], sizes = [1, 16, 16, 4], strides = [1, 1, 1, 1]} : vector<1x18x18x4xf32> to vector<1x16x16x4xf32>
    %18 = vector.shape_cast %17 : vector<1x16x16x4xf32> to vector<256x4xf32>
    %19 = vector.extract_strided_slice %4 {offsets = [0, 2, 1, 0], sizes = [1, 16, 16, 4], strides = [1, 1, 1, 1]} : vector<1x18x18x4xf32> to vector<1x16x16x4xf32>
    %20 = vector.shape_cast %19 : vector<1x16x16x4xf32> to vector<256x4xf32>
    %21 = vector.extract_strided_slice %4 {offsets = [0, 2, 2, 0], sizes = [1, 16, 16, 4], strides = [1, 1, 1, 1]} : vector<1x18x18x4xf32> to vector<1x16x16x4xf32>
    %22 = vector.shape_cast %21 : vector<1x16x16x4xf32> to vector<256x4xf32>
    %23 = tpu.concatenate %6, %8, %10, %12, %14, %16, %18, %20, %22 in 1 : vector<256x4xf32>, vector<256x4xf32>, vector<256x4xf32>, vector<256x4xf32>, vector<256x4xf32>, vector<256x4xf32>, vector<256x4xf32>, vector<256x4xf32>, vector<256x4xf32> -> vector<256x36xf32>
    %c0_4 = arith.constant 0 : index
    %c0_5 = arith.constant 0 : index
    %24 = vector.load %arg2[%c0_4, %c0_5] : memref<36x8xf32, #tpu.memory_space<vmem>>, vector<36x8xf32>
    %cst_6 = arith.constant dense<0.000000e+00> : vector<256x8xf32>
    %25 = tpu.matmul %23, %24, %cst_6 {dimension_numbers = #tpu.dot_dimension_numbers<[1], [0], [0], [1], [0, 0, 1, 1], [], []>} : vector<256x36xf32>, vector<36x8xf32>, vector<256x8xf32> -> vector<256x8xf32>
    %c0_7 = arith.constant 0 : index
    %c0_8 = arith.constant 0 : index
    %26 = vector.load %arg3[%c0_7, %c0_8] : memref<1x8xf32, #tpu.memory_space<vmem>>, vector<1x8xf32>
    %27 = vector.broadcast %26 : vector<1x8xf32> to vector<256x8xf32>
    %28 = arith.addf %25, %27 : vector<256x8xf32>
    %cst_9 = arith.constant 0.000000e+00 : f32
    %29 = vector.broadcast %cst_9 : f32 to vector<256x8xf32>
    %30 = arith.maximumf %28, %29 : vector<256x8xf32>
    %31 = vector.shape_cast %30 : vector<256x8xf32> to vector<1x16x16x8xf32>
    %32 = vector.shape_cast %31 : vector<1x16x16x8xf32> to vector<1x16x8x2x8xf32>
    %33 = vector.extract_strided_slice %32 {offsets = [0, 0, 0, 0, 0], sizes = [1, 16, 8, 1, 8], strides = [1, 1, 1, 1, 1]} : vector<1x16x8x2x8xf32> to vector<1x16x8x1x8xf32>
    %34 = vector.shape_cast %33 : vector<1x16x8x1x8xf32> to vector<1x16x8x8xf32>
    %35 = vector.extract_strided_slice %32 {offsets = [0, 0, 0, 1, 0], sizes = [1, 16, 8, 1, 8], strides = [1, 1, 1, 1, 1]} : vector<1x16x8x2x8xf32> to vector<1x16x8x1x8xf32>
    %36 = vector.shape_cast %35 : vector<1x16x8x1x8xf32> to vector<1x16x8x8xf32>
    %37 = arith.maximumf %34, %36 : vector<1x16x8x8xf32>
    %38 = vector.shape_cast %37 : vector<1x16x8x8xf32> to vector<1x8x2x8x8xf32>
    %39 = vector.extract_strided_slice %38 {offsets = [0, 0, 0, 0, 0], sizes = [1, 8, 1, 8, 8], strides = [1, 1, 1, 1, 1]} : vector<1x8x2x8x8xf32> to vector<1x8x1x8x8xf32>
    %40 = vector.shape_cast %39 : vector<1x8x1x8x8xf32> to vector<1x8x8x8xf32>
    %41 = vector.extract_strided_slice %38 {offsets = [0, 0, 1, 0, 0], sizes = [1, 8, 1, 8, 8], strides = [1, 1, 1, 1, 1]} : vector<1x8x2x8x8xf32> to vector<1x8x1x8x8xf32>
    %42 = vector.shape_cast %41 : vector<1x8x1x8x8xf32> to vector<1x8x8x8xf32>
    %43 = arith.maximumf %40, %42 : vector<1x8x8x8xf32>
    %cst_10 = arith.constant 0.000000e+00 : f32
    %44 = vector.broadcast %cst_10 : f32 to vector<1x1x8x8xf32>
    %45 = tpu.concatenate %44, %43, %44 in 1 : vector<1x1x8x8xf32>, vector<1x8x8x8xf32>, vector<1x1x8x8xf32> -> vector<1x10x8x8xf32>
    %cst_11 = arith.constant 0.000000e+00 : f32
    %46 = vector.broadcast %cst_11 : f32 to vector<1x10x1x8xf32>
    %47 = tpu.concatenate %46, %45, %46 in 2 : vector<1x10x1x8xf32>, vector<1x10x8x8xf32>, vector<1x10x1x8xf32> -> vector<1x10x10x8xf32>
    %48 = vector.extract_strided_slice %47 {offsets = [0, 0, 0, 0], sizes = [1, 8, 8, 8], strides = [1, 1, 1, 1]} : vector<1x10x10x8xf32> to vector<1x8x8x8xf32>
    %49 = vector.shape_cast %48 : vector<1x8x8x8xf32> to vector<64x8xf32>
    %50 = vector.extract_strided_slice %47 {offsets = [0, 0, 1, 0], sizes = [1, 8, 8, 8], strides = [1, 1, 1, 1]} : vector<1x10x10x8xf32> to vector<1x8x8x8xf32>
    %51 = vector.shape_cast %50 : vector<1x8x8x8xf32> to vector<64x8xf32>
    %52 = vector.extract_strided_slice %47 {offsets = [0, 0, 2, 0], sizes = [1, 8, 8, 8], strides = [1, 1, 1, 1]} : vector<1x10x10x8xf32> to vector<1x8x8x8xf32>
    %53 = vector.shape_cast %52 : vector<1x8x8x8xf32> to vector<64x8xf32>
    %54 = vector.extract_strided_slice %47 {offsets = [0, 1, 0, 0], sizes = [1, 8, 8, 8], strides = [1, 1, 1, 1]} : vector<1x10x10x8xf32> to vector<1x8x8x8xf32>
    %55 = vector.shape_cast %54 : vector<1x8x8x8xf32> to vector<64x8xf32>
    %56 = vector.extract_strided_slice %47 {offsets = [0, 1, 1, 0], sizes = [1, 8, 8, 8], strides = [1, 1, 1, 1]} : vector<1x10x10x8xf32> to vector<1x8x8x8xf32>
    %57 = vector.shape_cast %56 : vector<1x8x8x8xf32> to vector<64x8xf32>
    %58 = vector.extract_strided_slice %47 {offsets = [0, 1, 2, 0], sizes = [1, 8, 8, 8], strides = [1, 1, 1, 1]} : vector<1x10x10x8xf32> to vector<1x8x8x8xf32>
    %59 = vector.shape_cast %58 : vector<1x8x8x8xf32> to vector<64x8xf32>
    %60 = vector.extract_strided_slice %47 {offsets = [0, 2, 0, 0], sizes = [1, 8, 8, 8], strides = [1, 1, 1, 1]} : vector<1x10x10x8xf32> to vector<1x8x8x8xf32>
    %61 = vector.shape_cast %60 : vector<1x8x8x8xf32> to vector<64x8xf32>
    %62 = vector.extract_strided_slice %47 {offsets = [0, 2, 1, 0], sizes = [1, 8, 8, 8], strides = [1, 1, 1, 1]} : vector<1x10x10x8xf32> to vector<1x8x8x8xf32>
    %63 = vector.shape_cast %62 : vector<1x8x8x8xf32> to vector<64x8xf32>
    %64 = vector.extract_strided_slice %47 {offsets = [0, 2, 2, 0], sizes = [1, 8, 8, 8], strides = [1, 1, 1, 1]} : vector<1x10x10x8xf32> to vector<1x8x8x8xf32>
    %65 = vector.shape_cast %64 : vector<1x8x8x8xf32> to vector<64x8xf32>
    %66 = tpu.concatenate %49, %51, %53, %55, %57, %59, %61, %63, %65 in 1 : vector<64x8xf32>, vector<64x8xf32>, vector<64x8xf32>, vector<64x8xf32>, vector<64x8xf32>, vector<64x8xf32>, vector<64x8xf32>, vector<64x8xf32>, vector<64x8xf32> -> vector<64x72xf32>
    %c0_12 = arith.constant 0 : index
    %c0_13 = arith.constant 0 : index
    %67 = vector.load %arg4[%c0_12, %c0_13] : memref<72x16xf32, #tpu.memory_space<vmem>>, vector<72x16xf32>
    %cst_14 = arith.constant dense<0.000000e+00> : vector<64x16xf32>
    %68 = tpu.matmul %66, %67, %cst_14 {dimension_numbers = #tpu.dot_dimension_numbers<[1], [0], [0], [1], [0, 0, 1, 1], [], []>} : vector<64x72xf32>, vector<72x16xf32>, vector<64x16xf32> -> vector<64x16xf32>
    %c0_15 = arith.constant 0 : index
    %c0_16 = arith.constant 0 : index
    %69 = vector.load %arg5[%c0_15, %c0_16] : memref<1x16xf32, #tpu.memory_space<vmem>>, vector<1x16xf32>
    %70 = vector.broadcast %69 : vector<1x16xf32> to vector<64x16xf32>
    %71 = arith.addf %68, %70 : vector<64x16xf32>
    %cst_17 = arith.constant 0.000000e+00 : f32
    %72 = vector.broadcast %cst_17 : f32 to vector<64x16xf32>
    %73 = arith.maximumf %71, %72 : vector<64x16xf32>
    %74 = vector.shape_cast %73 : vector<64x16xf32> to vector<1x8x8x16xf32>
    %75 = vector.shape_cast %74 : vector<1x8x8x16xf32> to vector<1x8x4x2x16xf32>
    %76 = vector.extract_strided_slice %75 {offsets = [0, 0, 0, 0, 0], sizes = [1, 8, 4, 1, 16], strides = [1, 1, 1, 1, 1]} : vector<1x8x4x2x16xf32> to vector<1x8x4x1x16xf32>
    %77 = vector.shape_cast %76 : vector<1x8x4x1x16xf32> to vector<1x8x4x16xf32>
    %78 = vector.extract_strided_slice %75 {offsets = [0, 0, 0, 1, 0], sizes = [1, 8, 4, 1, 16], strides = [1, 1, 1, 1, 1]} : vector<1x8x4x2x16xf32> to vector<1x8x4x1x16xf32>
    %79 = vector.shape_cast %78 : vector<1x8x4x1x16xf32> to vector<1x8x4x16xf32>
    %80 = arith.maximumf %77, %79 : vector<1x8x4x16xf32>
    %81 = vector.shape_cast %80 : vector<1x8x4x16xf32> to vector<1x4x2x4x16xf32>
    %82 = vector.extract_strided_slice %81 {offsets = [0, 0, 0, 0, 0], sizes = [1, 4, 1, 4, 16], strides = [1, 1, 1, 1, 1]} : vector<1x4x2x4x16xf32> to vector<1x4x1x4x16xf32>
    %83 = vector.shape_cast %82 : vector<1x4x1x4x16xf32> to vector<1x4x4x16xf32>
    %84 = vector.extract_strided_slice %81 {offsets = [0, 0, 1, 0, 0], sizes = [1, 4, 1, 4, 16], strides = [1, 1, 1, 1, 1]} : vector<1x4x2x4x16xf32> to vector<1x4x1x4x16xf32>
    %85 = vector.shape_cast %84 : vector<1x4x1x4x16xf32> to vector<1x4x4x16xf32>
    %86 = arith.maximumf %83, %85 : vector<1x4x4x16xf32>
    %87 = vector.shape_cast %86 : vector<1x4x4x16xf32> to vector<4x64xf32>
    %c0_18 = arith.constant 0 : index
    %c0_19 = arith.constant 0 : index
    %88 = vector.load %arg6[%c0_18, %c0_19] : memref<64x48xf32, #tpu.memory_space<vmem>>, vector<64x48xf32>
    %cst_20 = arith.constant dense<0.000000e+00> : vector<4x48xf32>
    %89 = tpu.matmul %87, %88, %cst_20 {dimension_numbers = #tpu.dot_dimension_numbers<[1], [0], [0], [1], [0, 0, 1, 1], [], []>} : vector<4x64xf32>, vector<64x48xf32>, vector<4x48xf32> -> vector<4x48xf32>
    %c0_21 = arith.constant 0 : index
    %c0_22 = arith.constant 0 : index
    %90 = vector.load %arg8[%c0_21, %c0_22] : memref<1x48xf32, #tpu.memory_space<vmem>>, vector<1x48xf32>
    %91 = vector.broadcast %90 : vector<1x48xf32> to vector<4x48xf32>
    %92 = arith.addf %89, %91 : vector<4x48xf32>
    %93 = vector.shape_cast %92 : vector<4x48xf32> to vector<1x4x3x16xf32>
    %c0_23 = arith.constant 0 : index
    %c0_24 = arith.constant 0 : index
    %94 = vector.load %arg9[%c0_23, %c0_24] : memref<1x48xf32, #tpu.memory_space<vmem>>, vector<1x48xf32>
    %95 = vector.shape_cast %94 : vector<1x48xf32> to vector<1x3x16xf32>
    %96 = vector.extract_strided_slice %93 {offsets = [0, 0, 0, 0], sizes = [1, 1, 3, 16], strides = [1, 1, 1, 1]} : vector<1x4x3x16xf32> to vector<1x1x3x16xf32>
    %97 = vector.shape_cast %96 : vector<1x1x3x16xf32> to vector<1x3x16xf32>
    %98 = vector.extract_strided_slice %97 {offsets = [0, 0, 0], sizes = [1, 1, 16], strides = [1, 1, 1]} : vector<1x3x16xf32> to vector<1x1x16xf32>
    %99 = vector.shape_cast %98 : vector<1x1x16xf32> to vector<1x16xf32>
    %100 = vector.extract_strided_slice %95 {offsets = [0, 0, 0], sizes = [1, 1, 16], strides = [1, 1, 1]} : vector<1x3x16xf32> to vector<1x1x16xf32>
    %101 = vector.shape_cast %100 : vector<1x1x16xf32> to vector<1x16xf32>
    %102 = arith.addf %99, %101 : vector<1x16xf32>
    %cst_25 = arith.constant 0.000000e+00 : f32
    %103 = vector.broadcast %cst_25 : f32 to vector<1x16xf32>
    %104 = arith.subf %103, %102 : vector<1x16xf32>
    %105 = math.exp %104 : vector<1x16xf32>
    %cst_26 = arith.constant 1.000000e+00 : f32
    %106 = vector.broadcast %cst_26 : f32 to vector<1x16xf32>
    %107 = arith.addf %106, %105 : vector<1x16xf32>
    %cst_27 = arith.constant 1.000000e+00 : f32
    %108 = vector.broadcast %cst_27 : f32 to vector<1x16xf32>
    %109 = arith.divf %108, %107 : vector<1x16xf32>
    %110 = vector.extract_strided_slice %97 {offsets = [0, 1, 0], sizes = [1, 1, 16], strides = [1, 1, 1]} : vector<1x3x16xf32> to vector<1x1x16xf32>
    %111 = vector.shape_cast %110 : vector<1x1x16xf32> to vector<1x16xf32>
    %112 = vector.extract_strided_slice %95 {offsets = [0, 1, 0], sizes = [1, 1, 16], strides = [1, 1, 1]} : vector<1x3x16xf32> to vector<1x1x16xf32>
    %113 = vector.shape_cast %112 : vector<1x1x16xf32> to vector<1x16xf32>
    %114 = arith.addf %111, %113 : vector<1x16xf32>
    %cst_28 = arith.constant 0.000000e+00 : f32
    %115 = vector.broadcast %cst_28 : f32 to vector<1x16xf32>
    %116 = arith.subf %115, %114 : vector<1x16xf32>
    %117 = math.exp %116 : vector<1x16xf32>
    %cst_29 = arith.constant 1.000000e+00 : f32
    %118 = vector.broadcast %cst_29 : f32 to vector<1x16xf32>
    %119 = arith.addf %118, %117 : vector<1x16xf32>
    %cst_30 = arith.constant 1.000000e+00 : f32
    %120 = vector.broadcast %cst_30 : f32 to vector<1x16xf32>
    %121 = arith.divf %120, %119 : vector<1x16xf32>
    %122 = vector.extract_strided_slice %97 {offsets = [0, 2, 0], sizes = [1, 1, 16], strides = [1, 1, 1]} : vector<1x3x16xf32> to vector<1x1x16xf32>
    %123 = vector.shape_cast %122 : vector<1x1x16xf32> to vector<1x16xf32>
    %124 = vector.extract_strided_slice %95 {offsets = [0, 2, 0], sizes = [1, 1, 16], strides = [1, 1, 1]} : vector<1x3x16xf32> to vector<1x1x16xf32>
    %125 = vector.shape_cast %124 : vector<1x1x16xf32> to vector<1x16xf32>
    %126 = arith.mulf %109, %125 : vector<1x16xf32>
    %127 = arith.addf %123, %126 : vector<1x16xf32>
    %128 = math.tanh %127 : vector<1x16xf32>
    %cst_31 = arith.constant 1.000000e+00 : f32
    %129 = vector.broadcast %cst_31 : f32 to vector<1x16xf32>
    %130 = arith.subf %129, %121 : vector<1x16xf32>
    %131 = arith.mulf %130, %128 : vector<1x16xf32>
    %c0_32 = arith.constant 0 : index
    %c0_33 = arith.constant 0 : index
    %132 = vector.load %arg7[%c0_32, %c0_33] : memref<16x48xf32, #tpu.memory_space<vmem>>, vector<16x48xf32>
    %cst_34 = arith.constant dense<0.000000e+00> : vector<1x48xf32>
    %133 = tpu.matmul %131, %132, %cst_34 {dimension_numbers = #tpu.dot_dimension_numbers<[1], [0], [0], [1], [0, 0, 1, 1], [], []>} : vector<1x16xf32>, vector<16x48xf32>, vector<1x48xf32> -> vector<1x48xf32>
    %c0_35 = arith.constant 0 : index
    %c0_36 = arith.constant 0 : index
    %134 = vector.load %arg9[%c0_35, %c0_36] : memref<1x48xf32, #tpu.memory_space<vmem>>, vector<1x48xf32>
    %135 = arith.addf %133, %134 : vector<1x48xf32>
    %136 = vector.shape_cast %135 : vector<1x48xf32> to vector<1x3x16xf32>
    %137 = vector.extract_strided_slice %93 {offsets = [0, 1, 0, 0], sizes = [1, 1, 3, 16], strides = [1, 1, 1, 1]} : vector<1x4x3x16xf32> to vector<1x1x3x16xf32>
    %138 = vector.shape_cast %137 : vector<1x1x3x16xf32> to vector<1x3x16xf32>
    %139 = vector.extract_strided_slice %138 {offsets = [0, 0, 0], sizes = [1, 1, 16], strides = [1, 1, 1]} : vector<1x3x16xf32> to vector<1x1x16xf32>
    %140 = vector.shape_cast %139 : vector<1x1x16xf32> to vector<1x16xf32>
    %141 = vector.extract_strided_slice %136 {offsets = [0, 0, 0], sizes = [1, 1, 16], strides = [1, 1, 1]} : vector<1x3x16xf32> to vector<1x1x16xf32>
    %142 = vector.shape_cast %141 : vector<1x1x16xf32> to vector<1x16xf32>
    %143 = arith.addf %140, %142 : vector<1x16xf32>
    %cst_37 = arith.constant 0.000000e+00 : f32
    %144 = vector.broadcast %cst_37 : f32 to vector<1x16xf32>
    %145 = arith.subf %144, %143 : vector<1x16xf32>
    %146 = math.exp %145 : vector<1x16xf32>
    %cst_38 = arith.constant 1.000000e+00 : f32
    %147 = vector.broadcast %cst_38 : f32 to vector<1x16xf32>
    %148 = arith.addf %147, %146 : vector<1x16xf32>
    %cst_39 = arith.constant 1.000000e+00 : f32
    %149 = vector.broadcast %cst_39 : f32 to vector<1x16xf32>
    %150 = arith.divf %149, %148 : vector<1x16xf32>
    %151 = vector.extract_strided_slice %138 {offsets = [0, 1, 0], sizes = [1, 1, 16], strides = [1, 1, 1]} : vector<1x3x16xf32> to vector<1x1x16xf32>
    %152 = vector.shape_cast %151 : vector<1x1x16xf32> to vector<1x16xf32>
    %153 = vector.extract_strided_slice %136 {offsets = [0, 1, 0], sizes = [1, 1, 16], strides = [1, 1, 1]} : vector<1x3x16xf32> to vector<1x1x16xf32>
    %154 = vector.shape_cast %153 : vector<1x1x16xf32> to vector<1x16xf32>
    %155 = arith.addf %152, %154 : vector<1x16xf32>
    %cst_40 = arith.constant 0.000000e+00 : f32
    %156 = vector.broadcast %cst_40 : f32 to vector<1x16xf32>
    %157 = arith.subf %156, %155 : vector<1x16xf32>
    %158 = math.exp %157 : vector<1x16xf32>
    %cst_41 = arith.constant 1.000000e+00 : f32
    %159 = vector.broadcast %cst_41 : f32 to vector<1x16xf32>
    %160 = arith.addf %159, %158 : vector<1x16xf32>
    %cst_42 = arith.constant 1.000000e+00 : f32
    %161 = vector.broadcast %cst_42 : f32 to vector<1x16xf32>
    %162 = arith.divf %161, %160 : vector<1x16xf32>
    %163 = vector.extract_strided_slice %138 {offsets = [0, 2, 0], sizes = [1, 1, 16], strides = [1, 1, 1]} : vector<1x3x16xf32> to vector<1x1x16xf32>
    %164 = vector.shape_cast %163 : vector<1x1x16xf32> to vector<1x16xf32>
    %165 = vector.extract_strided_slice %136 {offsets = [0, 2, 0], sizes = [1, 1, 16], strides = [1, 1, 1]} : vector<1x3x16xf32> to vector<1x1x16xf32>
    %166 = vector.shape_cast %165 : vector<1x1x16xf32> to vector<1x16xf32>
    %167 = arith.mulf %150, %166 : vector<1x16xf32>
    %168 = arith.addf %164, %167 : vector<1x16xf32>
    %169 = math.tanh %168 : vector<1x16xf32>
    %cst_43 = arith.constant 1.000000e+00 : f32
    %170 = vector.broadcast %cst_43 : f32 to vector<1x16xf32>
    %171 = arith.subf %170, %162 : vector<1x16xf32>
    %172 = arith.mulf %171, %169 : vector<1x16xf32>
    %173 = arith.mulf %162, %131 : vector<1x16xf32>
    %174 = arith.addf %172, %173 : vector<1x16xf32>
    %c0_44 = arith.constant 0 : index
    %c0_45 = arith.constant 0 : index
    %175 = vector.load %arg7[%c0_44, %c0_45] : memref<16x48xf32, #tpu.memory_space<vmem>>, vector<16x48xf32>
    %cst_46 = arith.constant dense<0.000000e+00> : vector<1x48xf32>
    %176 = tpu.matmul %174, %175, %cst_46 {dimension_numbers = #tpu.dot_dimension_numbers<[1], [0], [0], [1], [0, 0, 1, 1], [], []>} : vector<1x16xf32>, vector<16x48xf32>, vector<1x48xf32> -> vector<1x48xf32>
    %c0_47 = arith.constant 0 : index
    %c0_48 = arith.constant 0 : index
    %177 = vector.load %arg9[%c0_47, %c0_48] : memref<1x48xf32, #tpu.memory_space<vmem>>, vector<1x48xf32>
    %178 = arith.addf %176, %177 : vector<1x48xf32>
    %179 = vector.shape_cast %178 : vector<1x48xf32> to vector<1x3x16xf32>
    %180 = vector.extract_strided_slice %93 {offsets = [0, 2, 0, 0], sizes = [1, 1, 3, 16], strides = [1, 1, 1, 1]} : vector<1x4x3x16xf32> to vector<1x1x3x16xf32>
    %181 = vector.shape_cast %180 : vector<1x1x3x16xf32> to vector<1x3x16xf32>
    %182 = vector.extract_strided_slice %181 {offsets = [0, 0, 0], sizes = [1, 1, 16], strides = [1, 1, 1]} : vector<1x3x16xf32> to vector<1x1x16xf32>
    %183 = vector.shape_cast %182 : vector<1x1x16xf32> to vector<1x16xf32>
    %184 = vector.extract_strided_slice %179 {offsets = [0, 0, 0], sizes = [1, 1, 16], strides = [1, 1, 1]} : vector<1x3x16xf32> to vector<1x1x16xf32>
    %185 = vector.shape_cast %184 : vector<1x1x16xf32> to vector<1x16xf32>
    %186 = arith.addf %183, %185 : vector<1x16xf32>
    %cst_49 = arith.constant 0.000000e+00 : f32
    %187 = vector.broadcast %cst_49 : f32 to vector<1x16xf32>
    %188 = arith.subf %187, %186 : vector<1x16xf32>
    %189 = math.exp %188 : vector<1x16xf32>
    %cst_50 = arith.constant 1.000000e+00 : f32
    %190 = vector.broadcast %cst_50 : f32 to vector<1x16xf32>
    %191 = arith.addf %190, %189 : vector<1x16xf32>
    %cst_51 = arith.constant 1.000000e+00 : f32
    %192 = vector.broadcast %cst_51 : f32 to vector<1x16xf32>
    %193 = arith.divf %192, %191 : vector<1x16xf32>
    %194 = vector.extract_strided_slice %181 {offsets = [0, 1, 0], sizes = [1, 1, 16], strides = [1, 1, 1]} : vector<1x3x16xf32> to vector<1x1x16xf32>
    %195 = vector.shape_cast %194 : vector<1x1x16xf32> to vector<1x16xf32>
    %196 = vector.extract_strided_slice %179 {offsets = [0, 1, 0], sizes = [1, 1, 16], strides = [1, 1, 1]} : vector<1x3x16xf32> to vector<1x1x16xf32>
    %197 = vector.shape_cast %196 : vector<1x1x16xf32> to vector<1x16xf32>
    %198 = arith.addf %195, %197 : vector<1x16xf32>
    %cst_52 = arith.constant 0.000000e+00 : f32
    %199 = vector.broadcast %cst_52 : f32 to vector<1x16xf32>
    %200 = arith.subf %199, %198 : vector<1x16xf32>
    %201 = math.exp %200 : vector<1x16xf32>
    %cst_53 = arith.constant 1.000000e+00 : f32
    %202 = vector.broadcast %cst_53 : f32 to vector<1x16xf32>
    %203 = arith.addf %202, %201 : vector<1x16xf32>
    %cst_54 = arith.constant 1.000000e+00 : f32
    %204 = vector.broadcast %cst_54 : f32 to vector<1x16xf32>
    %205 = arith.divf %204, %203 : vector<1x16xf32>
    %206 = vector.extract_strided_slice %181 {offsets = [0, 2, 0], sizes = [1, 1, 16], strides = [1, 1, 1]} : vector<1x3x16xf32> to vector<1x1x16xf32>
    %207 = vector.shape_cast %206 : vector<1x1x16xf32> to vector<1x16xf32>
    %208 = vector.extract_strided_slice %179 {offsets = [0, 2, 0], sizes = [1, 1, 16], strides = [1, 1, 1]} : vector<1x3x16xf32> to vector<1x1x16xf32>
    %209 = vector.shape_cast %208 : vector<1x1x16xf32> to vector<1x16xf32>
    %210 = arith.mulf %193, %209 : vector<1x16xf32>
    %211 = arith.addf %207, %210 : vector<1x16xf32>
    %212 = math.tanh %211 : vector<1x16xf32>
    %cst_55 = arith.constant 1.000000e+00 : f32
    %213 = vector.broadcast %cst_55 : f32 to vector<1x16xf32>
    %214 = arith.subf %213, %205 : vector<1x16xf32>
    %215 = arith.mulf %214, %212 : vector<1x16xf32>
    %216 = arith.mulf %205, %174 : vector<1x16xf32>
    %217 = arith.addf %215, %216 : vector<1x16xf32>
    %c0_56 = arith.constant 0 : index
    %c0_57 = arith.constant 0 : index
    %218 = vector.load %arg7[%c0_56, %c0_57] : memref<16x48xf32, #tpu.memory_space<vmem>>, vector<16x48xf32>
    %cst_58 = arith.constant dense<0.000000e+00> : vector<1x48xf32>
    %219 = tpu.matmul %217, %218, %cst_58 {dimension_numbers = #tpu.dot_dimension_numbers<[1], [0], [0], [1], [0, 0, 1, 1], [], []>} : vector<1x16xf32>, vector<16x48xf32>, vector<1x48xf32> -> vector<1x48xf32>
    %c0_59 = arith.constant 0 : index
    %c0_60 = arith.constant 0 : index
    %220 = vector.load %arg9[%c0_59, %c0_60] : memref<1x48xf32, #tpu.memory_space<vmem>>, vector<1x48xf32>
    %221 = arith.addf %219, %220 : vector<1x48xf32>
    %222 = vector.shape_cast %221 : vector<1x48xf32> to vector<1x3x16xf32>
    %223 = vector.extract_strided_slice %93 {offsets = [0, 3, 0, 0], sizes = [1, 1, 3, 16], strides = [1, 1, 1, 1]} : vector<1x4x3x16xf32> to vector<1x1x3x16xf32>
    %224 = vector.shape_cast %223 : vector<1x1x3x16xf32> to vector<1x3x16xf32>
    %225 = vector.extract_strided_slice %224 {offsets = [0, 0, 0], sizes = [1, 1, 16], strides = [1, 1, 1]} : vector<1x3x16xf32> to vector<1x1x16xf32>
    %226 = vector.shape_cast %225 : vector<1x1x16xf32> to vector<1x16xf32>
    %227 = vector.extract_strided_slice %222 {offsets = [0, 0, 0], sizes = [1, 1, 16], strides = [1, 1, 1]} : vector<1x3x16xf32> to vector<1x1x16xf32>
    %228 = vector.shape_cast %227 : vector<1x1x16xf32> to vector<1x16xf32>
    %229 = arith.addf %226, %228 : vector<1x16xf32>
    %cst_61 = arith.constant 0.000000e+00 : f32
    %230 = vector.broadcast %cst_61 : f32 to vector<1x16xf32>
    %231 = arith.subf %230, %229 : vector<1x16xf32>
    %232 = math.exp %231 : vector<1x16xf32>
    %cst_62 = arith.constant 1.000000e+00 : f32
    %233 = vector.broadcast %cst_62 : f32 to vector<1x16xf32>
    %234 = arith.addf %233, %232 : vector<1x16xf32>
    %cst_63 = arith.constant 1.000000e+00 : f32
    %235 = vector.broadcast %cst_63 : f32 to vector<1x16xf32>
    %236 = arith.divf %235, %234 : vector<1x16xf32>
    %237 = vector.extract_strided_slice %224 {offsets = [0, 1, 0], sizes = [1, 1, 16], strides = [1, 1, 1]} : vector<1x3x16xf32> to vector<1x1x16xf32>
    %238 = vector.shape_cast %237 : vector<1x1x16xf32> to vector<1x16xf32>
    %239 = vector.extract_strided_slice %222 {offsets = [0, 1, 0], sizes = [1, 1, 16], strides = [1, 1, 1]} : vector<1x3x16xf32> to vector<1x1x16xf32>
    %240 = vector.shape_cast %239 : vector<1x1x16xf32> to vector<1x16xf32>
    %241 = arith.addf %238, %240 : vector<1x16xf32>
    %cst_64 = arith.constant 0.000000e+00 : f32
    %242 = vector.broadcast %cst_64 : f32 to vector<1x16xf32>
    %243 = arith.subf %242, %241 : vector<1x16xf32>
    %244 = math.exp %243 : vector<1x16xf32>
    %cst_65 = arith.constant 1.000000e+00 : f32
    %245 = vector.broadcast %cst_65 : f32 to vector<1x16xf32>
    %246 = arith.addf %245, %244 : vector<1x16xf32>
    %cst_66 = arith.constant 1.000000e+00 : f32
    %247 = vector.broadcast %cst_66 : f32 to vector<1x16xf32>
    %248 = arith.divf %247, %246 : vector<1x16xf32>
    %249 = vector.extract_strided_slice %224 {offsets = [0, 2, 0], sizes = [1, 1, 16], strides = [1, 1, 1]} : vector<1x3x16xf32> to vector<1x1x16xf32>
    %250 = vector.shape_cast %249 : vector<1x1x16xf32> to vector<1x16xf32>
    %251 = vector.extract_strided_slice %222 {offsets = [0, 2, 0], sizes = [1, 1, 16], strides = [1, 1, 1]} : vector<1x3x16xf32> to vector<1x1x16xf32>
    %252 = vector.shape_cast %251 : vector<1x1x16xf32> to vector<1x16xf32>
    %253 = arith.mulf %236, %252 : vector<1x16xf32>
    %254 = arith.addf %250, %253 : vector<1x16xf32>
    %255 = math.tanh %254 : vector<1x16xf32>
    %cst_67 = arith.constant 1.000000e+00 : f32
    %256 = vector.broadcast %cst_67 : f32 to vector<1x16xf32>
    %257 = arith.subf %256, %248 : vector<1x16xf32>
    %258 = arith.mulf %257, %255 : vector<1x16xf32>
    %259 = arith.mulf %248, %217 : vector<1x16xf32>
    %260 = arith.addf %258, %259 : vector<1x16xf32>
    %261 = tpu.concatenate %131, %174, %217, %260 in 1 : vector<1x16xf32>, vector<1x16xf32>, vector<1x16xf32>, vector<1x16xf32> -> vector<1x64xf32>
    %c0_68 = arith.constant 0 : index
    %c0_69 = arith.constant 0 : index
    %262 = vector.load %arg10[%c0_68, %c0_69] : memref<64x32xf32, #tpu.memory_space<vmem>>, vector<64x32xf32>
    %cst_70 = arith.constant dense<0.000000e+00> : vector<1x32xf32>
    %263 = tpu.matmul %261, %262, %cst_70 {dimension_numbers = #tpu.dot_dimension_numbers<[1], [0], [0], [1], [0, 0, 1, 1], [], []>} : vector<1x64xf32>, vector<64x32xf32>, vector<1x32xf32> -> vector<1x32xf32>
    %c0_71 = arith.constant 0 : index
    %c0_72 = arith.constant 0 : index
    %264 = vector.load %arg11[%c0_71, %c0_72] : memref<1x32xf32, #tpu.memory_space<vmem>>, vector<1x32xf32>
    %265 = arith.addf %263, %264 : vector<1x32xf32>
    %266 = vector.shape_cast %265 : vector<1x32xf32> to vector<1x1x32xf32>
    %c0_73 = arith.constant 0 : index
    %c0_74 = arith.constant 0 : index
    %c0_75 = arith.constant 0 : index
    %267 = vector.load %arg12[%c0_73, %c0_74, %c0_75] : memref<1x1x32xf32, #tpu.memory_space<vmem>>, vector<1x1x32xf32>
    tpu.vector_store %arg12[%c0_73, %c0_74, %c0_75], %266 {strides = array<i32>} : memref<1x1x32xf32, #tpu.memory_space<vmem>>, vector<1x1x32xf32>,
    return
  }
  func.func @transform_0(%arg0: i32) -> (i32, i32, i32, i32) {
    %c0_i32 = arith.constant 0 : i32
    %c0_i32_0 = arith.constant 0 : i32
    %c0_i32_1 = arith.constant 0 : i32
    %c0_i32_2 = arith.constant 0 : i32
    return %arg0, %c0_i32, %c0_i32_0, %c0_i32_1 : i32, i32, i32, i32
  }
  func.func @transform_1(%arg0: i32) -> (i32, i32) {
    %c0_i32 = arith.constant 0 : i32
    %c0_i32_0 = arith.constant 0 : i32
    %c0_i32_1 = arith.constant 0 : i32
    return %c0_i32, %c0_i32_0 : i32, i32
  }
  func.func @transform_2(%arg0: i32) -> (i32, i32) {
    %c0_i32 = arith.constant 0 : i32
    %c0_i32_0 = arith.constant 0 : i32
    %c0_i32_1 = arith.constant 0 : i32
    return %c0_i32, %c0_i32_0 : i32, i32
  }
  func.func @transform_3(%arg0: i32) -> (i32, i32) {
    %c0_i32 = arith.constant 0 : i32
    %c0_i32_0 = arith.constant 0 : i32
    %c0_i32_1 = arith.constant 0 : i32
    return %c0_i32, %c0_i32_0 : i32, i32
  }
  func.func @transform_4(%arg0: i32) -> (i32, i32) {
    %c0_i32 = arith.constant 0 : i32
    %c0_i32_0 = arith.constant 0 : i32
    %c0_i32_1 = arith.constant 0 : i32
    return %c0_i32, %c0_i32_0 : i32, i32
  }
  func.func @transform_5(%arg0: i32) -> (i32, i32) {
    %c0_i32 = arith.constant 0 : i32
    %c0_i32_0 = arith.constant 0 : i32
    %c0_i32_1 = arith.constant 0 : i32
    return %c0_i32, %c0_i32_0 : i32, i32
  }
  func.func @transform_6(%arg0: i32) -> (i32, i32) {
    %c0_i32 = arith.constant 0 : i32
    %c0_i32_0 = arith.constant 0 : i32
    %c0_i32_1 = arith.constant 0 : i32
    return %c0_i32, %c0_i32_0 : i32, i32
  }
  func.func @transform_7(%arg0: i32) -> (i32, i32) {
    %c0_i32 = arith.constant 0 : i32
    %c0_i32_0 = arith.constant 0 : i32
    %c0_i32_1 = arith.constant 0 : i32
    return %c0_i32, %c0_i32_0 : i32, i32
  }
  func.func @transform_8(%arg0: i32) -> (i32, i32) {
    %c0_i32 = arith.constant 0 : i32
    %c0_i32_0 = arith.constant 0 : i32
    %c0_i32_1 = arith.constant 0 : i32
    return %c0_i32, %c0_i32_0 : i32, i32
  }
  func.func @transform_9(%arg0: i32) -> (i32, i32) {
    %c0_i32 = arith.constant 0 : i32
    %c0_i32_0 = arith.constant 0 : i32
    %c0_i32_1 = arith.constant 0 : i32
    return %c0_i32, %c0_i32_0 : i32, i32
  }
  func.func @transform_10(%arg0: i32) -> (i32, i32) {
    %c0_i32 = arith.constant 0 : i32
    %c0_i32_0 = arith.constant 0 : i32
    %c0_i32_1 = arith.constant 0 : i32
    return %c0_i32, %c0_i32_0 : i32, i32
  }
  func.func @transform_11(%arg0: i32) -> (i32, i32, i32) {
    %c0_i32 = arith.constant 0 : i32
    %c0_i32_0 = arith.constant 0 : i32
    %c0_i32_1 = arith.constant 0 : i32
    return %arg0, %c0_i32, %c0_i32_0 : i32, i32, i32
  }
}

</mosaic_0001>

<llo_original>
// kernel: _lambda_.1
$region0: #{_lambda_.1}
  #allocation0 [shape = 'u32[]', space=smem, size = 0x4, offset = 0x4, fixed_abs, tag = 'smem constant byte address 0x4 - core index']
  #allocation1 [shape = 'u32[144,128]{1,0:T(1,128)}', space=vmem, size = 0x12000, scoped, tag = 'internal scratch']
  %s0 = inlined_call_operand.vmem [shape: f32[2,16,16,4], index: 0, kind: input, shape index: {}]
  %s1 = inlined_call_operand.vmem [shape: f32[36,8], index: 1, kind: input, shape index: {}]
  %s2 = inlined_call_operand.vmem [shape: f32[1,8], index: 2, kind: input, shape index: {}]
  %s3 = inlined_call_operand.vmem [shape: f32[72,16], index: 3, kind: input, shape index: {}]
  %s4 = inlined_call_operand.vmem [shape: f32[1,16], index: 4, kind: input, shape index: {}]
  %s5 = inlined_call_operand.vmem [shape: f32[64,48], index: 5, kind: input, shape index: {}]
  %s6 = inlined_call_operand.vmem [shape: f32[16,48], index: 6, kind: input, shape index: {}]
  %s7 = inlined_call_operand.vmem [shape: f32[1,48], index: 7, kind: input, shape index: {}]
  %s8 = inlined_call_operand.vmem [shape: f32[1,48], index: 8, kind: input, shape index: {}]
  %s9 = inlined_call_operand.vmem [shape: f32[64,32], index: 9, kind: input, shape index: {}]
  %s10 = inlined_call_operand.vmem [shape: f32[1,32], index: 10, kind: input, shape index: {}]
  %s11 = inlined_call_operand.hbm [shape: f32[2,1,32], index: 11, kind: output, shape index: {}]
  %s12 = sld [smem:[#allocation0]]
  $region77: #{_lambda_.1} parent=0
    _
  %s14 = ssub.s32 1, %s12
  %s15 = scalar_select 0, %s14, %s12
  $region1: #{_lambda_.1} parent=0
    #allocation2 [shape = 'u8[1024]{0}', space=vmem, size = 0x400, scoped, tag = 'output window, operand 0']
    #allocation3 [shape = 's32[2]{0}', space=sflag, size = 0x8, scoped, tag = 'scoped memory for _lambda_.1']
    %16 = vsyncpa [#allocation3], 0
    %s17 = scalar_lea.sflag [#allocation3], 1
    %18 = vsyncpa %s17, 0
    loop: start=0, step=1, limit=4
    $region2: #{_lambda_.1} parent=1 // loop_pre_header
      _
    $region3: #{_lambda_.1} parent=1 // loop_header
      %s20 = sphi 0, %s24
      %p21 = scmp.ge.s32.totalorder %s20, 4
      %s30 = sphi 0, %s32
      %s33 = sphi 0, %s30
      %s34 = sphi 0, %s33
      %s50 = sphi 0, %s34
      %s54 = sphi 0, %s54
      %s56 = sphi 0, %s54
      %s57 = sphi 0, %s56
      %s71 = sphi 0, %s57
      %s75 = sphi 0, %s75
      %s77 = sphi 0, %s75
      %s78 = sphi 0, %s77
      %s92 = sphi 0, %s78
      %s96 = sphi 0, %s96
      %s98 = sphi 0, %s96
      %s99 = sphi 0, %s98
      %s113 = sphi 0, %s99
      %s117 = sphi 0, %s117
      %s119 = sphi 0, %s117
      %s120 = sphi 0, %s119
      %s134 = sphi 0, %s120
      %s138 = sphi 0, %s138
      %s140 = sphi 0, %s138
      %s141 = sphi 0, %s140
      %s155 = sphi 0, %s141
      %s159 = sphi 0, %s159
      %s161 = sphi 0, %s159
      %s162 = sphi 0, %s161
      %s176 = sphi 0, %s162
      %s180 = sphi 0, %s180
      %s182 = sphi 0, %s180
      %s183 = sphi 0, %s182
      %s197 = sphi 0, %s183
      %s201 = sphi 0, %s201
      %s203 = sphi 0, %s201
      %s204 = sphi 0, %s203
      %s218 = sphi 0, %s204
      %s222 = sphi 0, %s222
      %s224 = sphi 0, %s222
      %s225 = sphi 0, %s224
      %s239 = sphi 0, %s225
      %s243 = sphi 0, %s243
      %s245 = sphi 0, %s243
      %s246 = sphi 0, %s245
      %s260 = sphi 0, %s246
      %s266 = sphi 0, %s268
      %s269 = sphi 0, %s266
      %s270 = sphi 0, %s269
      %s286 = sphi 0, %s270
    $region4: #{_lambda_.1} parent=1 // loop_header_branch
      %23 = sbr.rel (%p21) target = $region8
    $region5: #{_lambda_.1} parent=1 // loop_body
      %s25 = ssub.s32 %s20, 1
      %s26 = ssub.s32 %s20, 2
      %s27 = sadd.s32 %s20, 1
      %s28 = ssub.s32 %s20, %s27
      %p29 = scmp.eq.s32.totalorder %s28, 0
      %s31 = sadd.s32 %s30, 1
      %s32 = scalar_select %p29, %s30, %s31
      %p35 = pneg %p29
      %p36 = scmp.eq.s32.totalorder %s20, 1
      %p37 = por %p35, %p36
      %p38 = scmp.ne.s32.totalorder %s30, %s33
      %p39 = scmp.eq.s32.totalorder %s20, 0
      %p40 = por %p38, %p39
      %p41 = scmp.ne.s32.totalorder %s30, %s33
      %p42 = scmp.eq.s32.totalorder %s25, 1
      %p43 = por %p41, %p42
      %p44 = scmp.ne.s32.totalorder %s33, %s34
      %p45 = scmp.eq.s32.totalorder %s25, 0
      %p46 = por %p44, %p45
      %p47 = scmp.ne.s32.totalorder %s33, %s34
      %p48 = scmp.eq.s32.totalorder %s26, 1
      %p49 = por %p47, %p48
      %p51 = scmp.ne.s32.totalorder %s34, %s50
      %p52 = scmp.eq.s32.totalorder %s26, 0
      %p53 = por %p51, %p52
      %s55 = sadd.s32 %s54, 1
      %p58 = scmp.eq.s32.totalorder %s20, 1
      %p59 = scmp.ne.s32.totalorder %s54, %s56
      %p60 = scmp.eq.s32.totalorder %s20, 0
      %p61 = por %p59, %p60
      %p62 = scmp.ne.s32.totalorder %s54, %s56
      %p63 = scmp.eq.s32.totalorder %s25, 1
      %p64 = por %p62, %p63
      %p65 = scmp.ne.s32.totalorder %s56, %s57
      %p66 = scmp.eq.s32.totalorder %s25, 0
      %p67 = por %p65, %p66
      %p68 = scmp.ne.s32.totalorder %s56, %s57
      %p69 = scmp.eq.s32.totalorder %s26, 1
      %p70 = por %p68, %p69
      %p72 = scmp.ne.s32.totalorder %s57, %s71
      %p73 = scmp.eq.s32.totalorder %s26, 0
      %p74 = por %p72, %p73
      %s76 = sadd.s32 %s75, 1
      %p79 = scmp.eq.s32.totalorder %s20, 1
      %p80 = scmp.ne.s32.totalorder %s75, %s77
      %p81 = scmp.eq.s32.totalorder %s20, 0
      %p82 = por %p80, %p81
      %p83 = scmp.ne.s32.totalorder %s75, %s77
      %p84 = scmp.eq.s32.totalorder %s25, 1
      %p85 = por %p83, %p84
      %p86 = scmp.ne.s32.totalorder %s77, %s78
      %p87 = scmp.eq.s32.totalorder %s25, 0
      %p88 = por %p86, %p87
      %p89 = scmp.ne.s32.totalorder %s77, %s78
      %p90 = scmp.eq.s32.totalorder %s26, 1
      %p91 = por %p89, %p90
      %p93 = scmp.ne.s32.totalorder %s78, %s92
      %p94 = scmp.eq.s32.totalorder %s26, 0
      %p95 = por %p93, %p94
      %s97 = sadd.s32 %s96, 1
      %p100 = scmp.eq.s32.totalorder %s20, 1
      %p101 = scmp.ne.s32.totalorder %s96, %s98
      %p102 = scmp.eq.s32.totalorder %s20, 0
      %p103 = por %p101, %p102
      %p104 = scmp.ne.s32.totalorder %s96, %s98
      %p105 = scmp.eq.s32.totalorder %s25, 1
      %p106 = por %p104, %p105
      %p107 = scmp.ne.s32.totalorder %s98, %s99
      %p108 = scmp.eq.s32.totalorder %s25, 0
      %p109 = por %p107, %p108
      %p110 = scmp.ne.s32.totalorder %s98, %s99
      %p111 = scmp.eq.s32.totalorder %s26, 1
      %p112 = por %p110, %p111
      %p114 = scmp.ne.s32.totalorder %s99, %s113
      %p115 = scmp.eq.s32.totalorder %s26, 0
      %p116 = por %p114, %p115
      %s118 = sadd.s32 %s117, 1
      %p121 = scmp.eq.s32.totalorder %s20, 1
      %p122 = scmp.ne.s32.totalorder %s117, %s119
      %p123 = scmp.eq.s32.totalorder %s20, 0
      %p124 = por %p122, %p123
      %p125 = scmp.ne.s32.totalorder %s117, %s119
      %p126 = scmp.eq.s32.totalorder %s25, 1
      %p127 = por %p125, %p126
      %p128 = scmp.ne.s32.totalorder %s119, %s120
      %p129 = scmp.eq.s32.totalorder %s25, 0
      %p130 = por %p128, %p129
      %p131 = scmp.ne.s32.totalorder %s119, %s120
      %p132 = scmp.eq.s32.totalorder %s26, 1
      %p133 = por %p131, %p132
      %p135 = scmp.ne.s32.totalorder %s120, %s134
      %p136 = scmp.eq.s32.totalorder %s26, 0
      %p137 = por %p135, %p136
      %s139 = sadd.s32 %s138, 1
      %p142 = scmp.eq.s32.totalorder %s20, 1
      %p143 = scmp.ne.s32.totalorder %s138, %s140
      %p144 = scmp.eq.s32.totalorder %s20, 0
      %p145 = por %p143, %p144
      %p146 = scmp.ne.s32.totalorder %s138, %s140
      %p147 = scmp.eq.s32.totalorder %s25, 1
      %p148 = por %p146, %p147
      %p149 = scmp.ne.s32.totalorder %s140, %s141
      %p150 = scmp.eq.s32.totalorder %s25, 0
      %p151 = por %p149, %p150
      %p152 = scmp.ne.s32.totalorder %s140, %s141
      %p153 = scmp.eq.s32.totalorder %s26, 1
      %p154 = por %p152, %p153
      %p156 = scmp.ne.s32.totalorder %s141, %s155
      %p157 = scmp.eq.s32.totalorder %s26, 0
      %p158 = por %p156, %p157
      %s160 = sadd.s32 %s159, 1
      %p163 = scmp.eq.s32.totalorder %s20, 1
      %p164 = scmp.ne.s32.totalorder %s159, %s161
      %p165 = scmp.eq.s32.totalorder %s20, 0
      %p166 = por %p164, %p165
      %p167 = scmp.ne.s32.totalorder %s159, %s161
      %p168 = scmp.eq.s32.totalorder %s25, 1
      %p169 = por %p167, %p168
      %p170 = scmp.ne.s32.totalorder %s161, %s162
      %p171 = scmp.eq.s32.totalorder %s25, 0
      %p172 = por %p170, %p171
      %p173 = scmp.ne.s32.totalorder %s161, %s162
      %p174 = scmp.eq.s32.totalorder %s26, 1
      %p175 = por %p173, %p174
      %p177 = scmp.ne.s32.totalorder %s162, %s176
      %p178 = scmp.eq.s32.totalorder %s26, 0
      %p179 = por %p177, %p178
      %s181 = sadd.s32 %s180, 1
      %p184 = scmp.eq.s32.totalorder %s20, 1
      %p185 = scmp.ne.s32.totalorder %s180, %s182
      %p186 = scmp.eq.s32.totalorder %s20, 0
      %p187 = por %p185, %p186
      %p188 = scmp.ne.s32.totalorder %s180, %s182
      %p189 = scmp.eq.s32.totalorder %s25, 1
      %p190 = por %p188, %p189
      %p191 = scmp.ne.s32.totalorder %s182, %s183
      %p192 = scmp.eq.s32.totalorder %s25, 0
      %p193 = por %p191, %p192
      %p194 = scmp.ne.s32.totalorder %s182, %s183
      %p195 = scmp.eq.s32.totalorder %s26, 1
      %p196 = por %p194, %p195
      %p198 = scmp.ne.s32.totalorder %s183, %s197
      %p199 = scmp.eq.s32.totalorder %s26, 0
      %p200 = por %p198, %p199
      %s202 = sadd.s32 %s201, 1
      %p205 = scmp.eq.s32.totalorder %s20, 1
      %p206 = scmp.ne.s32.totalorder %s201, %s203
      %p207 = scmp.eq.s32.totalorder %s20, 0
      %p208 = por %p206, %p207
      %p209 = scmp.ne.s32.totalorder %s201, %s203
      %p210 = scmp.eq.s32.totalorder %s25, 1
      %p211 = por %p209, %p210
      %p212 = scmp.ne.s32.totalorder %s203, %s204
      %p213 = scmp.eq.s32.totalorder %s25, 0
      %p214 = por %p212, %p213
      %p215 = scmp.ne.s32.totalorder %s203, %s204
      %p216 = scmp.eq.s32.totalorder %s26, 1
      %p217 = por %p215, %p216
      %p219 = scmp.ne.s32.totalorder %s204, %s218
      %p220 = scmp.eq.s32.totalorder %s26, 0
      %p221 = por %p219, %p220
      %s223 = sadd.s32 %s222, 1
      %p226 = scmp.eq.s32.totalorder %s20, 1
      %p227 = scmp.ne.s32.totalorder %s222, %s224
      %p228 = scmp.eq.s32.totalorder %s20, 0
      %p229 = por %p227, %p228
      %p230 = scmp.ne.s32.totalorder %s222, %s224
      %p231 = scmp.eq.s32.totalorder %s25, 1
      %p232 = por %p230, %p231
      %p233 = scmp.ne.s32.totalorder %s224, %s225
      %p234 = scmp.eq.s32.totalorder %s25, 0
      %p235 = por %p233, %p234
      %p236 = scmp.ne.s32.totalorder %s224, %s225
      %p237 = scmp.eq.s32.totalorder %s26, 1
      %p238 = por %p236, %p237
      %p240 = scmp.ne.s32.totalorder %s225, %s239
      %p241 = scmp.eq.s32.totalorder %s26, 0
      %p242 = por %p240, %p241
      %s244 = sadd.s32 %s243, 1
      %p247 = scmp.eq.s32.totalorder %s20, 1
      %p248 = scmp.ne.s32.totalorder %s243, %s245
      %p249 = scmp.eq.s32.totalorder %s20, 0
      %p250 = por %p248, %p249
      %p251 = scmp.ne.s32.totalorder %s243, %s245
      %p252 = scmp.eq.s32.totalorder %s25, 1
      %p253 = por %p251, %p252
      %p254 = scmp.ne.s32.totalorder %s245, %s246
      %p255 = scmp.eq.s32.totalorder %s25, 0
      %p256 = por %p254, %p255
      %p257 = scmp.ne.s32.totalorder %s245, %s246
      %p258 = scmp.eq.s32.totalorder %s26, 1
      %p259 = por %p257, %p258
      %p261 = scmp.ne.s32.totalorder %s246, %s260
      %p262 = scmp.eq.s32.totalorder %s26, 0
      %p263 = por %p261, %p262
      %s264 = ssub.s32 %s20, %s27
      %p265 = scmp.eq.s32.totalorder %s264, 0
      %s267 = sadd.s32 %s266, 1
      %s268 = scalar_select %p265, %s266, %s267
      %p271 = pneg %p265
      %p272 = scmp.eq.s32.totalorder %s20, 1
      %p273 = por %p271, %p272
      %p274 = scmp.ne.s32.totalorder %s266, %s269
      %p275 = scmp.eq.s32.totalorder %s20, 0
      %p276 = por %p274, %p275
      %p277 = scmp.ne.s32.totalorder %s266, %s269
      %p278 = scmp.eq.s32.totalorder %s25, 1
      %p279 = por %p277, %p278
      %p280 = scmp.ne.s32.totalorder %s269, %s270
      %p281 = scmp.eq.s32.totalorder %s25, 0
      %p282 = por %p280, %p281
      %p283 = scmp.ne.s32.totalorder %s269, %s270
      %p284 = scmp.eq.s32.totalorder %s26, 1
      %p285 = por %p283, %p284
      %p287 = scmp.ne.s32.totalorder %s270, %s286
      %p288 = scmp.eq.s32.totalorder %s26, 0
      %p289 = por %p287, %p288
      %p290 = scmp.le.s32.totalorder 1, %s20
      %p291 = scmp.lt.s32.totalorder %s20, 3
      %p292 = pnand %p290, %p291
      %p293 = pneg %p292
      // Predicated region
      $region9: #{_lambda_.1} parent=5 // pred_check
        _
      $region10: #{_lambda_.1} parent=5 // pred_check_branch
        %295 = sbr.rel (%p292) target = $region12
      $region11: #{_lambda_.1} parent=5 // pred_region
        %s296 = ssub.s32 %s20, 1
        // Predicated region
        $region13: #{_lambda_.1} parent=11 // pred_check
          %p297 = pneg %p67
        $region14: #{_lambda_.1} parent=11 // pred_check_branch
          %299 = sbr.rel (%p297) target = $region16
        $region15: #{_lambda_.1} parent=11 // pred_region
          _
        $region16: #{_lambda_.1} parent=11 // pred_fallthru
          _
        // Predicated region
        $region17: #{_lambda_.1} parent=11 // pred_check
          %p300 = pneg %p88
        $region18: #{_lambda_.1} parent=11 // pred_check_branch
          %302 = sbr.rel (%p300) target = $region20
        $region19: #{_lambda_.1} parent=11 // pred_region
          _
        $region20: #{_lambda_.1} parent=11 // pred_fallthru
          _
        // Predicated region
        $region21: #{_lambda_.1} parent=11 // pred_check
          %p303 = pneg %p109
        $region22: #{_lambda_.1} parent=11 // pred_check_branch
          %305 = sbr.rel (%p303) target = $region24
        $region23: #{_lambda_.1} parent=11 // pred_region
          _
        $region24: #{_lambda_.1} parent=11 // pred_fallthru
          _
        // Predicated region
        $region25: #{_lambda_.1} parent=11 // pred_check
          %p306 = pneg %p130
        $region26: #{_lambda_.1} parent=11 // pred_check_branch
          %308 = sbr.rel (%p306) target = $region28
        $region27: #{_lambda_.1} parent=11 // pred_region
          _
        $region28: #{_lambda_.1} parent=11 // pred_fallthru
          _
        // Predicated region
        $region29: #{_lambda_.1} parent=11 // pred_check
          %p309 = pneg %p151
        $region30: #{_lambda_.1} parent=11 // pred_check_branch
          %311 = sbr.rel (%p309) target = $region32
        $region31: #{_lambda_.1} parent=11 // pred_region
          _
        $region32: #{_lambda_.1} parent=11 // pred_fallthru
          _
        // Predicated region
        $region33: #{_lambda_.1} parent=11 // pred_check
          %p312 = pneg %p172
        $region34: #{_lambda_.1} parent=11 // pred_check_branch
          %314 = sbr.rel (%p312) target = $region36
        $region35: #{_lambda_.1} parent=11 // pred_region
          _
        $region36: #{_lambda_.1} parent=11 // pred_fallthru
          _
        // Predicated region
        $region37: #{_lambda_.1} parent=11 // pred_check
          %p315 = pneg %p193
        $region38: #{_lambda_.1} parent=11 // pred_check_branch
          %317 = sbr.rel (%p315) target = $region40
        $region39: #{_lambda_.1} parent=11 // pred_region
          _
        $region40: #{_lambda_.1} parent=11 // pred_fallthru
          _
        // Predicated region
        $region41: #{_lambda_.1} parent=11 // pred_check
          %p318 = pneg %p214
        $region42: #{_lambda_.1} parent=11 // pred_check_branch
          %320 = sbr.rel (%p318) target = $region44
        $region43: #{_lambda_.1} parent=11 // pred_region
          _
        $region44: #{_lambda_.1} parent=11 // pred_fallthru
          _
        // Predicated region
        $region45: #{_lambda_.1} parent=11 // pred_check
          %p321 = pneg %p235
        $region46: #{_lambda_.1} parent=11 // pred_check_branch
          %323 = sbr.rel (%p321) target = $region48
        $region47: #{_lambda_.1} parent=11 // pred_region
          _
        $region48: #{_lambda_.1} parent=11 // pred_fallthru
          _
        // Predicated region
        $region49: #{_lambda_.1} parent=11 // pred_check
          %p324 = pneg %p256
        $region50: #{_lambda_.1} parent=11 // pred_check_branch
          %326 = sbr.rel (%p324) target = $region52
        $region51: #{_lambda_.1} parent=11 // pred_region
          _
        $region52: #{_lambda_.1} parent=11 // pred_fallthru
          _
      $region12: #{_lambda_.1} parent=5 // pred_fallthru
        _
      %p327 = scmp.lt.s32.totalorder %s20, 2
      // Predicated region
      $region53: #{_lambda_.1} parent=5 // pred_check
        %p328 = pneg %p327
      $region54: #{_lambda_.1} parent=5 // pred_check_branch
        %330 = sbr.rel (%p328) target = $region56
      $region55: #{_lambda_.1} parent=5 // pred_region
        // Predicated region
        $region57: #{_lambda_.1} parent=55 // pred_check
          %p331 = pneg %p40
        $region58: #{_lambda_.1} parent=55 // pred_check_branch
          %333 = sbr.rel (%p331) target = $region60
        $region59: #{_lambda_.1} parent=55 // pred_region
          %p334 = scmp.lt.s32.totalorder %s20, 1
          %s335 = scalar_select %p334, %s20, 1
          %s336 = smul.addr %s335, 32
          %s337 = smul.addr %s336, 8
          %s338 = scalar_lea.vmem %s0, %s337
        $region60: #{_lambda_.1} parent=55 // pred_fallthru
          _
      $region56: #{_lambda_.1} parent=5 // pred_fallthru
        _
      %p339 = scmp.le.s32.totalorder 1, %s20
      %p340 = scmp.lt.s32.totalorder %s20, 3
      %p341 = pnand %p339, %p340
      %p342 = pneg %p341
      // Predicated region
      $region61: #{_lambda_.1} parent=5 // pred_check
        _
      $region62: #{_lambda_.1} parent=5 // pred_check_branch
        %344 = sbr.rel (%p341) target = $region64
      $region63: #{_lambda_.1} parent=5 // pred_region
        %s345 = ssub.s32 %s20, 1
        %p346 = scmp.lt.s32.totalorder %s25, 1
        %s347 = scalar_select %p346, %s25, 1
        %s348 = smul.addr %s347, 32
        %s349 = smul.addr %s348, 8
        %s350 = scalar_lea.vmem %s0, %s349
        %p351 = pneg %p46
        %p352 = pneg %p43
        %p353 = pneg %p67
        %p354 = pneg %p64
        %p355 = pneg %p88
        %p356 = pneg %p85
        %p357 = pneg %p109
        %p358 = pneg %p106
        %p359 = pneg %p130
        %p360 = pneg %p127
        %p361 = pneg %p151
        %p362 = pneg %p148
        %p363 = pneg %p172
        %p364 = pneg %p169
        %p365 = pneg %p193
        %p366 = pneg %p190
        %p367 = pneg %p214
        %p368 = pneg %p211
        %p369 = pneg %p235
        %p370 = pneg %p232
        %p371 = pneg %p256
        %p372 = pneg %p253
        %p373 = pneg %p282
        %p374 = pneg %p279
        %s375 = sand.u32 %s269, 1
        %s376 = scalar_lea.sflag [#allocation3], %s375
        %s377 = sand.u32 %s269, 1
        %s378 = scalar_lea.vmem [#allocation2], %s377
        %p379 = scmp.lt.s32.totalorder %s25, 1
        %s380 = scalar_select %p379, %s25, 1
        %s381 = smul.addr %s380, 32
        %s382 = smul.addr %s381, 8
        %s383 = scalar_lea.vmem %s0, %s382
        %v384 = vld [vmem:[%s383] sm:$0xff]
        %v385 = vld [vmem:[%s383 + $0x8] sm:$0xff]
        %v386 = vld [vmem:[%s383 + $0x10] sm:$0xff]
        %v387 = vld [vmem:[%s383 + $0x18] sm:$0xff]
        %v388 = vld [vmem:[%s383 + $0x20] sm:$0xff]
        %v389 = vld [vmem:[%s383 + $0x28] sm:$0xff]
        %v390 = vld [vmem:[%s383 + $0x30] sm:$0xff]
        %v391 = vld [vmem:[%s383 + $0x38] sm:$0xff]
        %v392 = vld [vmem:[%s383 + $0x40] sm:$0xff]
        %v393 = vld [vmem:[%s383 + $0x48] sm:$0xff]
        %v394 = vld [vmem:[%s383 + $0x50] sm:$0xff]
        %v395 = vld [vmem:[%s383 + $0x58] sm:$0xff]
        %v396 = vld [vmem:[%s383 + $0x60] sm:$0xff]
        %v397 = vld [vmem:[%s383 + $0x68] sm:$0xff]
        %v398 = vld [vmem:[%s383 + $0x70] sm:$0xff]
        %v399 = vld [vmem:[%s383 + $0x78] sm:$0xff]
        %v400 = vld [vmem:[%s383 + $0x80] sm:$0xff]
        %v401 = vld [vmem:[%s383 + $0x88] sm:$0xff]
        %v402 = vld [vmem:[%s383 + $0x90] sm:$0xff]
        %v403 = vld [vmem:[%s383 + $0x98] sm:$0xff]
        %v404 = vld [vmem:[%s383 + $0xa0] sm:$0xff]
        %v405 = vld [vmem:[%s383 + $0xa8] sm:$0xff]
        %v406 = vld [vmem:[%s383 + $0xb0] sm:$0xff]
        %v407 = vld [vmem:[%s383 + $0xb8] sm:$0xff]
        %v408 = vld [vmem:[%s383 + $0xc0] sm:$0xff]
        %v409 = vld [vmem:[%s383 + $0xc8] sm:$0xff]
        %v410 = vld [vmem:[%s383 + $0xd0] sm:$0xff]
        %v411 = vld [vmem:[%s383 + $0xd8] sm:$0xff]
        %v412 = vld [vmem:[%s383 + $0xe0] sm:$0xff]
        %v413 = vld [vmem:[%s383 + $0xe8] sm:$0xff]
        %v414 = vld [vmem:[%s383 + $0xf0] sm:$0xff]
        %v415 = vld [vmem:[%s383 + $0xf8] sm:$0xff]
        %vm449 = vcmask 1040384
        %v450 = vrot.slane 0.0, 7
        %v451 = vsel %vm449, %v450, %v450
        %v452 = vrot.slane %v384, 7
        %v453 = vrot.slane %v385, 7
        %v454 = vsel %vm449, %v452, %v453
        %v455 = vrot.slane %v386, 7
        %v456 = vrot.slane %v387, 7
        %v457 = vsel %vm449, %v455, %v456
        %v458 = vrot.slane %v388, 7
        %v459 = vrot.slane %v389, 7
        %v460 = vsel %vm449, %v458, %v459
        %v461 = vrot.slane %v390, 7
        %v462 = vrot.slane %v391, 7
        %v463 = vsel %vm449, %v461, %v462
        %v464 = vrot.slane %v392, 7
        %v465 = vrot.slane %v393, 7
        %v466 = vsel %vm449, %v464, %v465
        %v467 = vrot.slane %v394, 7
        %v468 = vrot.slane %v395, 7
        %v469 = vsel %vm449, %v467, %v468
        %v470 = vrot.slane %v396, 7
        %v471 = vrot.slane %v397, 7
        %v472 = vsel %vm449, %v470, %v471
        %v473 = vrot.slane %v398, 7
        %v474 = vrot.slane %v399, 7
        %v475 = vsel %vm449, %v473, %v474
        %v476 = vrot.slane %v400, 7
        %v477 = vrot.slane %v401, 7
        %v478 = vsel %vm449, %v476, %v477
        %v479 = vrot.slane %v402, 7
        %v480 = vrot.slane %v403, 7
        %v481 = vsel %vm449, %v479, %v480
        %v482 = vrot.slane %v404, 7
        %v483 = vrot.slane %v405, 7
        %v484 = vsel %vm449, %v482, %v483
        %v485 = vrot.slane %v406, 7
        %v486 = vrot.slane %v407, 7
        %v487 = vsel %vm449, %v485, %v486
        %v488 = vrot.slane %v408, 7
        %v489 = vrot.slane %v409, 7
        %v490 = vsel %vm449, %v488, %v489
        %v491 = vrot.slane %v410, 7
        %v492 = vrot.slane %v411, 7
        %v493 = vsel %vm449, %v491, %v492
        %v494 = vrot.slane %v412, 7
        %v495 = vrot.slane %v413, 7
        %v496 = vsel %vm449, %v494, %v495
        %v497 = vrot.slane %v414, 7
        %v498 = vrot.slane %v415, 7
        %v499 = vsel %vm449, %v497, %v498
        %v549 = vsel %vm449, 0.0, %v450
        %v550 = vsel %vm449, 0.0, %v452
        %v551 = vsel %vm449, 0.0, %v455
        %v552 = vsel %vm449, 0.0, %v458
        %v553 = vsel %vm449, 0.0, %v461
        %v554 = vsel %vm449, 0.0, %v464
        %v555 = vsel %vm449, 0.0, %v467
        %v556 = vsel %vm449, 0.0, %v470
        %v557 = vsel %vm449, 0.0, %v473
        %v558 = vsel %vm449, 0.0, %v476
        %v559 = vsel %vm449, 0.0, %v479
        %v560 = vsel %vm449, 0.0, %v482
        %v561 = vsel %vm449, 0.0, %v485
        %v562 = vsel %vm449, 0.0, %v488
        %v563 = vsel %vm449, 0.0, %v491
        %v564 = vsel %vm449, 0.0, %v494
        %v565 = vsel %vm449, 0.0, %v497
        %v566 = vsel %vm449, %v450, 0.0
        %v567 = vsel %vm449, %v453, 0.0
        %v568 = vsel %vm449, %v456, 0.0
        %v569 = vsel %vm449, %v459, 0.0
        %v570 = vsel %vm449, %v462, 0.0
        %v571 = vsel %vm449, %v465, 0.0
        %v572 = vsel %vm449, %v468, 0.0
        %v573 = vsel %vm449, %v471, 0.0
        %v574 = vsel %vm449, %v474, 0.0
        %v575 = vsel %vm449, %v477, 0.0
        %v576 = vsel %vm449, %v480, 0.0
        %v577 = vsel %vm449, %v483, 0.0
        %v578 = vsel %vm449, %v486, 0.0
        %v579 = vsel %vm449, %v489, 0.0
        %v580 = vsel %vm449, %v492, 0.0
        %v581 = vsel %vm449, %v495, 0.0
        %v582 = vsel %vm449, %v498, 0.0
        %vm615 = vcmask 1046528
        %v616 = vrot.slane %v549, 1
        %v617 = vrot.slane %v451, 1
        %v618 = vsel %vm615, %v616, %v617
        %v619 = vrot.slane %v566, 1
        %v620 = vsel %vm615, %v617, %v619
        %v621 = vrot.slane %v550, 1
        %v622 = vrot.slane %v454, 1
        %v623 = vsel %vm615, %v621, %v622
        %v624 = vrot.slane %v567, 1
        %v625 = vsel %vm615, %v622, %v624
        %v626 = vrot.slane %v551, 1
        %v627 = vrot.slane %v457, 1
        %v628 = vsel %vm615, %v626, %v627
        %v629 = vrot.slane %v568, 1
        %v630 = vsel %vm615, %v627, %v629
        %v631 = vrot.slane %v552, 1
        %v632 = vrot.slane %v460, 1
        %v633 = vsel %vm615, %v631, %v632
        %v634 = vrot.slane %v569, 1
        %v635 = vsel %vm615, %v632, %v634
        %v636 = vrot.slane %v553, 1
        %v637 = vrot.slane %v463, 1
        %v638 = vsel %vm615, %v636, %v637
        %v639 = vrot.slane %v570, 1
        %v640 = vsel %vm615, %v637, %v639
        %v641 = vrot.slane %v554, 1
        %v642 = vrot.slane %v466, 1
        %v643 = vsel %vm615, %v641, %v642
        %v644 = vrot.slane %v571, 1
        %v645 = vsel %vm615, %v642, %v644
        %v646 = vrot.slane %v555, 1
        %v647 = vrot.slane %v469, 1
        %v648 = vsel %vm615, %v646, %v647
        %v649 = vrot.slane %v572, 1
        %v650 = vsel %vm615, %v647, %v649
        %v651 = vrot.slane %v556, 1
        %v652 = vrot.slane %v472, 1
        %v653 = vsel %vm615, %v651, %v652
        %v654 = vrot.slane %v573, 1
        %v655 = vsel %vm615, %v652, %v654
        %v656 = vrot.slane %v557, 1
        %v657 = vrot.slane %v475, 1
        %v658 = vsel %vm615, %v656, %v657
        %v659 = vrot.slane %v574, 1
        %v660 = vsel %vm615, %v657, %v659
        %v661 = vrot.slane %v558, 1
        %v662 = vrot.slane %v478, 1
        %v663 = vsel %vm615, %v661, %v662
        %v664 = vrot.slane %v575, 1
        %v665 = vsel %vm615, %v662, %v664
        %v666 = vrot.slane %v559, 1
        %v667 = vrot.slane %v481, 1
        %v668 = vsel %vm615, %v666, %v667
        %v669 = vrot.slane %v576, 1
        %v670 = vsel %vm615, %v667, %v669
        %v671 = vrot.slane %v560, 1
        %v672 = vrot.slane %v484, 1
        %v673 = vsel %vm615, %v671, %v672
        %v674 = vrot.slane %v577, 1
        %v675 = vsel %vm615, %v672, %v674
        %v676 = vrot.slane %v561, 1
        %v677 = vrot.slane %v487, 1
        %v678 = vsel %vm615, %v676, %v677
        %v679 = vrot.slane %v578, 1
        %v680 = vsel %vm615, %v677, %v679
        %v681 = vrot.slane %v562, 1
        %v682 = vrot.slane %v490, 1
        %v683 = vsel %vm615, %v681, %v682
        %v684 = vrot.slane %v579, 1
        %v685 = vsel %vm615, %v682, %v684
        %v686 = vrot.slane %v563, 1
        %v687 = vrot.slane %v493, 1
        %v688 = vsel %vm615, %v686, %v687
        %v689 = vrot.slane %v580, 1
        %v690 = vsel %vm615, %v687, %v689
        %v691 = vrot.slane %v564, 1
        %v692 = vrot.slane %v496, 1
        %v693 = vsel %vm615, %v691, %v692
        %v694 = vrot.slane %v581, 1
        %v695 = vsel %vm615, %v692, %v694
        %vm696 = vcmask 1045504
        %v697 = vrot.slane %v549, 2
        %v698 = vrot.slane %v451, 2
        %v699 = vsel %vm696, %v697, %v698
        %v700 = vrot.slane %v566, 2
        %v701 = vsel %vm696, %v698, %v700
        %v702 = vrot.slane %v550, 2
        %v703 = vrot.slane %v454, 2
        %v704 = vsel %vm696, %v702, %v703
        %v705 = vrot.slane %v567, 2
        %v706 = vsel %vm696, %v703, %v705
        %v707 = vrot.slane %v551, 2
        %v708 = vrot.slane %v457, 2
        %v709 = vsel %vm696, %v707, %v708
        %v710 = vrot.slane %v568, 2
        %v711 = vsel %vm696, %v708, %v710
        %v712 = vrot.slane %v552, 2
        %v713 = vrot.slane %v460, 2
        %v714 = vsel %vm696, %v712, %v713
        %v715 = vrot.slane %v569, 2
        %v716 = vsel %vm696, %v713, %v715
        %v717 = vrot.slane %v553, 2
        %v718 = vrot.slane %v463, 2
        %v719 = vsel %vm696, %v717, %v718
        %v720 = vrot.slane %v570, 2
        %v721 = vsel %vm696, %v718, %v720
        %v722 = vrot.slane %v554, 2
        %v723 = vrot.slane %v466, 2
        %v724 = vsel %vm696, %v722, %v723
        %v725 = vrot.slane %v571, 2
        %v726 = vsel %vm696, %v723, %v725
        %v727 = vrot.slane %v555, 2
        %v728 = vrot.slane %v469, 2
        %v729 = vsel %vm696, %v727, %v728
        %v730 = vrot.slane %v572, 2
        %v731 = vsel %vm696, %v728, %v730
        %v732 = vrot.slane %v556, 2
        %v733 = vrot.slane %v472, 2
        %v734 = vsel %vm696, %v732, %v733
        %v735 = vrot.slane %v573, 2
        %v736 = vsel %vm696, %v733, %v735
        %v737 = vrot.slane %v557, 2
        %v738 = vrot.slane %v475, 2
        %v739 = vsel %vm696, %v737, %v738
        %v740 = vrot.slane %v574, 2
        %v741 = vsel %vm696, %v738, %v740
        %v742 = vrot.slane %v558, 2
        %v743 = vrot.slane %v478, 2
        %v744 = vsel %vm696, %v742, %v743
        %v745 = vrot.slane %v575, 2
        %v746 = vsel %vm696, %v743, %v745
        %v747 = vrot.slane %v559, 2
        %v748 = vrot.slane %v481, 2
        %v749 = vsel %vm696, %v747, %v748
        %v750 = vrot.slane %v576, 2
        %v751 = vsel %vm696, %v748, %v750
        %v752 = vrot.slane %v560, 2
        %v753 = vrot.slane %v484, 2
        %v754 = vsel %vm696, %v752, %v753
        %v755 = vrot.slane %v577, 2
        %v756 = vsel %vm696, %v753, %v755
        %v757 = vrot.slane %v561, 2
        %v758 = vrot.slane %v487, 2
        %v759 = vsel %vm696, %v757, %v758
        %v760 = vrot.slane %v578, 2
        %v761 = vsel %vm696, %v758, %v760
        %v762 = vrot.slane %v562, 2
        %v763 = vrot.slane %v490, 2
        %v764 = vsel %vm696, %v762, %v763
        %v765 = vrot.slane %v579, 2
        %v766 = vsel %vm696, %v763, %v765
        %v767 = vrot.slane %v563, 2
        %v768 = vrot.slane %v493, 2
        %v769 = vsel %vm696, %v767, %v768
        %v770 = vrot.slane %v580, 2
        %v771 = vsel %vm696, %v768, %v770
        %v772 = vrot.slane %v564, 2
        %v773 = vrot.slane %v496, 2
        %v774 = vsel %vm696, %v772, %v773
        %v775 = vrot.slane %v581, 2
        %v776 = vsel %vm696, %v773, %v775
        %v779 = vrot.slane %v565, 1
        %v780 = vrot.slane %v499, 1
        %v781 = vsel %vm615, %v779, %v780
        %v782 = vrot.slane %v582, 1
        %v783 = vsel %vm615, %v780, %v782
        %v784 = vrot.slane %v565, 2
        %v785 = vrot.slane %v499, 2
        %v786 = vsel %vm696, %v784, %v785
        %v787 = vrot.slane %v582, 2
        %v788 = vsel %vm696, %v785, %v787
        %789 = vrot.lane.b32.xlu0 %v618, 4
        %v790 = vpop.permute.xlu0 %789
        %791 = vrot.lane.b32.xlu0 %v620, 4
        %v792 = vpop.permute.xlu0 %791
        %793 = vrot.lane.b32.xlu0 %v623, 4
        %v794 = vpop.permute.xlu0 %793
        %795 = vrot.lane.b32.xlu0 %v625, 4
        %v796 = vpop.permute.xlu0 %795
        %797 = vrot.lane.b32.xlu0 %v628, 4
        %v798 = vpop.permute.xlu0 %797
        %799 = vrot.lane.b32.xlu0 %v630, 4
        %v800 = vpop.permute.xlu0 %799
        %801 = vrot.lane.b32.xlu0 %v633, 4
        %v802 = vpop.permute.xlu0 %801
        %803 = vrot.lane.b32.xlu0 %v635, 4
        %v804 = vpop.permute.xlu0 %803
        %805 = vrot.lane.b32.xlu0 %v638, 4
        %v806 = vpop.permute.xlu0 %805
        %807 = vrot.lane.b32.xlu0 %v640, 4
        %v808 = vpop.permute.xlu0 %807
        %809 = vrot.lane.b32.xlu0 %v643, 4
        %v810 = vpop.permute.xlu0 %809
        %811 = vrot.lane.b32.xlu0 %v645, 4
        %v812 = vpop.permute.xlu0 %811
        %813 = vrot.lane.b32.xlu0 %v648, 4
        %v814 = vpop.permute.xlu0 %813
        %815 = vrot.lane.b32.xlu0 %v650, 4
        %v816 = vpop.permute.xlu0 %815
        %817 = vrot.lane.b32.xlu0 %v653, 4
        %v818 = vpop.permute.xlu0 %817
        %819 = vrot.lane.b32.xlu0 %v655, 4
        %v820 = vpop.permute.xlu0 %819
        %821 = vrot.lane.b32.xlu0 %v658, 4
        %v822 = vpop.permute.xlu0 %821
        %823 = vrot.lane.b32.xlu0 %v660, 4
        %v824 = vpop.permute.xlu0 %823
        %825 = vrot.lane.b32.xlu0 %v663, 4
        %v826 = vpop.permute.xlu0 %825
        %827 = vrot.lane.b32.xlu0 %v665, 4
        %v828 = vpop.permute.xlu0 %827
        %829 = vrot.lane.b32.xlu0 %v668, 4
        %v830 = vpop.permute.xlu0 %829
        %831 = vrot.lane.b32.xlu0 %v670, 4
        %v832 = vpop.permute.xlu0 %831
        %833 = vrot.lane.b32.xlu0 %v673, 4
        %v834 = vpop.permute.xlu0 %833
        %835 = vrot.lane.b32.xlu0 %v675, 4
        %v836 = vpop.permute.xlu0 %835
        %837 = vrot.lane.b32.xlu0 %v678, 4
        %v838 = vpop.permute.xlu0 %837
        %839 = vrot.lane.b32.xlu0 %v680, 4
        %v840 = vpop.permute.xlu0 %839
        %841 = vrot.lane.b32.xlu0 %v683, 4
        %v842 = vpop.permute.xlu0 %841
        %843 = vrot.lane.b32.xlu0 %v685, 4
        %v844 = vpop.permute.xlu0 %843
        %845 = vrot.lane.b32.xlu0 %v688, 4
        %v846 = vpop.permute.xlu0 %845
        %847 = vrot.lane.b32.xlu0 %v690, 4
        %v848 = vpop.permute.xlu0 %847
        %849 = vrot.lane.b32.xlu0 %v693, 4
        %v850 = vpop.permute.xlu0 %849
        %851 = vrot.lane.b32.xlu0 %v695, 4
        %v852 = vpop.permute.xlu0 %851
        %885 = vrot.lane.b32.xlu0 %v699, 8
        %v886 = vpop.permute.xlu0 %885
        %887 = vrot.lane.b32.xlu0 %v701, 8
        %v888 = vpop.permute.xlu0 %887
        %889 = vrot.lane.b32.xlu0 %v704, 8
        %v890 = vpop.permute.xlu0 %889
        %891 = vrot.lane.b32.xlu0 %v706, 8
        %v892 = vpop.permute.xlu0 %891
        %893 = vrot.lane.b32.xlu0 %v709, 8
        %v894 = vpop.permute.xlu0 %893
        %895 = vrot.lane.b32.xlu0 %v711, 8
        %v896 = vpop.permute.xlu0 %895
        %897 = vrot.lane.b32.xlu0 %v714, 8
        %v898 = vpop.permute.xlu0 %897
        %899 = vrot.lane.b32.xlu0 %v716, 8
        %v900 = vpop.permute.xlu0 %899
        %901 = vrot.lane.b32.xlu0 %v719, 8
        %v902 = vpop.permute.xlu0 %901
        %903 = vrot.lane.b32.xlu0 %v721, 8
        %v904 = vpop.permute.xlu0 %903
        %905 = vrot.lane.b32.xlu0 %v724, 8
        %v906 = vpop.permute.xlu0 %905
        %907 = vrot.lane.b32.xlu0 %v726, 8
        %v908 = vpop.permute.xlu0 %907
        %909 = vrot.lane.b32.xlu0 %v729, 8
        %v910 = vpop.permute.xlu0 %909
        %911 = vrot.lane.b32.xlu0 %v731, 8
        %v912 = vpop.permute.xlu0 %911
        %913 = vrot.lane.b32.xlu0 %v734, 8
        %v914 = vpop.permute.xlu0 %913
        %915 = vrot.lane.b32.xlu0 %v736, 8
        %v916 = vpop.permute.xlu0 %915
        %917 = vrot.lane.b32.xlu0 %v739, 8
        %v918 = vpop.permute.xlu0 %917
        %919 = vrot.lane.b32.xlu0 %v741, 8
        %v920 = vpop.permute.xlu0 %919
        %921 = vrot.lane.b32.xlu0 %v744, 8
        %v922 = vpop.permute.xlu0 %921
        %923 = vrot.lane.b32.xlu0 %v746, 8
        %v924 = vpop.permute.xlu0 %923
        %925 = vrot.lane.b32.xlu0 %v749, 8
        %v926 = vpop.permute.xlu0 %925
        %927 = vrot.lane.b32.xlu0 %v751, 8
        %v928 = vpop.permute.xlu0 %927
        %929 = vrot.lane.b32.xlu0 %v754, 8
        %v930 = vpop.permute.xlu0 %929
        %931 = vrot.lane.b32.xlu0 %v756, 8
        %v932 = vpop.permute.xlu0 %931
        %933 = vrot.lane.b32.xlu0 %v759, 8
        %v934 = vpop.permute.xlu0 %933
        %935 = vrot.lane.b32.xlu0 %v761, 8
        %v936 = vpop.permute.xlu0 %935
        %937 = vrot.lane.b32.xlu0 %v764, 8
        %v938 = vpop.permute.xlu0 %937
        %939 = vrot.lane.b32.xlu0 %v766, 8
        %v940 = vpop.permute.xlu0 %939
        %941 = vrot.lane.b32.xlu0 %v769, 8
        %v942 = vpop.permute.xlu0 %941
        %943 = vrot.lane.b32.xlu0 %v771, 8
        %v944 = vpop.permute.xlu0 %943
        %945 = vrot.lane.b32.xlu0 %v774, 8
        %v946 = vpop.permute.xlu0 %945
        %947 = vrot.lane.b32.xlu0 %v776, 8
        %v948 = vpop.permute.xlu0 %947
        %981 = vrot.lane.b32.xlu0 %v550, 12
        %v982 = vpop.permute.xlu0 %981
        %983 = vrot.lane.b32.xlu0 %v454, 12
        %v984 = vpop.permute.xlu0 %983
        %985 = vrot.lane.b32.xlu0 %v551, 12
        %v986 = vpop.permute.xlu0 %985
        %987 = vrot.lane.b32.xlu0 %v457, 12
        %v988 = vpop.permute.xlu0 %987
        %989 = vrot.lane.b32.xlu0 %v552, 12
        %v990 = vpop.permute.xlu0 %989
        %991 = vrot.lane.b32.xlu0 %v460, 12
        %v992 = vpop.permute.xlu0 %991
        %993 = vrot.lane.b32.xlu0 %v553, 12
        %v994 = vpop.permute.xlu0 %993
        %995 = vrot.lane.b32.xlu0 %v463, 12
        %v996 = vpop.permute.xlu0 %995
        %997 = vrot.lane.b32.xlu0 %v554, 12
        %v998 = vpop.permute.xlu0 %997
        %999 = vrot.lane.b32.xlu0 %v466, 12
        %v1000 = vpop.permute.xlu0 %999
        %1001 = vrot.lane.b32.xlu0 %v555, 12
        %v1002 = vpop.permute.xlu0 %1001
        %1003 = vrot.lane.b32.xlu0 %v469, 12
        %v1004 = vpop.permute.xlu0 %1003
        %1005 = vrot.lane.b32.xlu0 %v556, 12
        %v1006 = vpop.permute.xlu0 %1005
        %1007 = vrot.lane.b32.xlu0 %v472, 12
        %v1008 = vpop.permute.xlu0 %1007
        %1009 = vrot.lane.b32.xlu0 %v557, 12
        %v1010 = vpop.permute.xlu0 %1009
        %1011 = vrot.lane.b32.xlu0 %v475, 12
        %v1012 = vpop.permute.xlu0 %1011
        %1013 = vrot.lane.b32.xlu0 %v558, 12
        %v1014 = vpop.permute.xlu0 %1013
        %1015 = vrot.lane.b32.xlu0 %v478, 12
        %v1016 = vpop.permute.xlu0 %1015
        %1017 = vrot.lane.b32.xlu0 %v559, 12
        %v1018 = vpop.permute.xlu0 %1017
        %1019 = vrot.lane.b32.xlu0 %v481, 12
        %v1020 = vpop.permute.xlu0 %1019
        %1021 = vrot.lane.b32.xlu0 %v560, 12
        %v1022 = vpop.permute.xlu0 %1021
        %1023 = vrot.lane.b32.xlu0 %v484, 12
        %v1024 = vpop.permute.xlu0 %1023
        %1025 = vrot.lane.b32.xlu0 %v561, 12
        %v1026 = vpop.permute.xlu0 %1025
        %1027 = vrot.lane.b32.xlu0 %v487, 12
        %v1028 = vpop.permute.xlu0 %1027
        %1029 = vrot.lane.b32.xlu0 %v562, 12
        %v1030 = vpop.permute.xlu0 %1029
        %1031 = vrot.lane.b32.xlu0 %v490, 12
        %v1032 = vpop.permute.xlu0 %1031
        %1033 = vrot.lane.b32.xlu0 %v563, 12
        %v1034 = vpop.permute.xlu0 %1033
        %1035 = vrot.lane.b32.xlu0 %v493, 12
        %v1036 = vpop.permute.xlu0 %1035
        %1037 = vrot.lane.b32.xlu0 %v564, 12
        %v1038 = vpop.permute.xlu0 %1037
        %1039 = vrot.lane.b32.xlu0 %v496, 12
        %v1040 = vpop.permute.xlu0 %1039
        %1041 = vrot.lane.b32.xlu0 %v565, 12
        %v1042 = vpop.permute.xlu0 %1041
        %1043 = vrot.lane.b32.xlu0 %v499, 12
        %v1044 = vpop.permute.xlu0 %1043
        %1077 = vrot.lane.b32.xlu0 %v623, 16
        %v1078 = vpop.permute.xlu0 %1077
        %1079 = vrot.lane.b32.xlu0 %v625, 16
        %v1080 = vpop.permute.xlu0 %1079
        %1081 = vrot.lane.b32.xlu0 %v628, 16
        %v1082 = vpop.permute.xlu0 %1081
        %1083 = vrot.lane.b32.xlu0 %v630, 16
        %v1084 = vpop.permute.xlu0 %1083
        %1085 = vrot.lane.b32.xlu0 %v633, 16
        %v1086 = vpop.permute.xlu0 %1085
        %1087 = vrot.lane.b32.xlu0 %v635, 16
        %v1088 = vpop.permute.xlu0 %1087
        %1089 = vrot.lane.b32.xlu0 %v638, 16
        %v1090 = vpop.permute.xlu0 %1089
        %1091 = vrot.lane.b32.xlu0 %v640, 16
        %v1092 = vpop.permute.xlu0 %1091
        %1093 = vrot.lane.b32.xlu0 %v643, 16
        %v1094 = vpop.permute.xlu0 %1093
        %1095 = vrot.lane.b32.xlu0 %v645, 16
        %v1096 = vpop.permute.xlu0 %1095
        %1097 = vrot.lane.b32.xlu0 %v648, 16
        %v1098 = vpop.permute.xlu0 %1097
        %1099 = vrot.lane.b32.xlu0 %v650, 16
        %v1100 = vpop.permute.xlu0 %1099
        %1101 = vrot.lane.b32.xlu0 %v653, 16
        %v1102 = vpop.permute.xlu0 %1101
        %1103 = vrot.lane.b32.xlu0 %v655, 16
        %v1104 = vpop.permute.xlu0 %1103
        %1105 = vrot.lane.b32.xlu0 %v658, 16
        %v1106 = vpop.permute.xlu0 %1105
        %1107 = vrot.lane.b32.xlu0 %v660, 16
        %v1108 = vpop.permute.xlu0 %1107
        %1109 = vrot.lane.b32.xlu0 %v663, 16
        %v1110 = vpop.permute.xlu0 %1109
        %1111 = vrot.lane.b32.xlu0 %v665, 16
        %v1112 = vpop.permute.xlu0 %1111
        %1113 = vrot.lane.b32.xlu0 %v668, 16
        %v1114 = vpop.permute.xlu0 %1113
        %1115 = vrot.lane.b32.xlu0 %v670, 16
        %v1116 = vpop.permute.xlu0 %1115
        %1117 = vrot.lane.b32.xlu0 %v673, 16
        %v1118 = vpop.permute.xlu0 %1117
        %1119 = vrot.lane.b32.xlu0 %v675, 16
        %v1120 = vpop.permute.xlu0 %1119
        %1121 = vrot.lane.b32.xlu0 %v678, 16
        %v1122 = vpop.permute.xlu0 %1121
        %1123 = vrot.lane.b32.xlu0 %v680, 16
        %v1124 = vpop.permute.xlu0 %1123
        %1125 = vrot.lane.b32.xlu0 %v683, 16
        %v1126 = vpop.permute.xlu0 %1125
        %1127 = vrot.lane.b32.xlu0 %v685, 16
        %v1128 = vpop.permute.xlu0 %1127
        %1129 = vrot.lane.b32.xlu0 %v688, 16
        %v1130 = vpop.permute.xlu0 %1129
        %1131 = vrot.lane.b32.xlu0 %v690, 16
        %v1132 = vpop.permute.xlu0 %1131
        %1133 = vrot.lane.b32.xlu0 %v693, 16
        %v1134 = vpop.permute.xlu0 %1133
        %1135 = vrot.lane.b32.xlu0 %v695, 16
        %v1136 = vpop.permute.xlu0 %1135
        %1137 = vrot.lane.b32.xlu0 %v781, 16
        %v1138 = vpop.permute.xlu0 %1137
        %1139 = vrot.lane.b32.xlu0 %v783, 16
        %v1140 = vpop.permute.xlu0 %1139
        %1173 = vrot.lane.b32.xlu0 %v704, 20
        %v1174 = vpop.permute.xlu0 %1173
        %1175 = vrot.lane.b32.xlu0 %v706, 20
        %v1176 = vpop.permute.xlu0 %1175
        %1177 = vrot.lane.b32.xlu0 %v709, 20
        %v1178 = vpop.permute.xlu0 %1177
        %1179 = vrot.lane.b32.xlu0 %v711, 20
        %v1180 = vpop.permute.xlu0 %1179
        %1181 = vrot.lane.b32.xlu0 %v714, 20
        %v1182 = vpop.permute.xlu0 %1181
        %1183 = vrot.lane.b32.xlu0 %v716, 20
        %v1184 = vpop.permute.xlu0 %1183
        %1185 = vrot.lane.b32.xlu0 %v719, 20
        %v1186 = vpop.permute.xlu0 %1185
        %1187 = vrot.lane.b32.xlu0 %v721, 20
        %v1188 = vpop.permute.xlu0 %1187
        %1189 = vrot.lane.b32.xlu0 %v724, 20
        %v1190 = vpop.permute.xlu0 %1189
        %1191 = vrot.lane.b32.xlu0 %v726, 20
        %v1192 = vpop.permute.xlu0 %1191
        %1193 = vrot.lane.b32.xlu0 %v729, 20
        %v1194 = vpop.permute.xlu0 %1193
        %1195 = vrot.lane.b32.xlu0 %v731, 20
        %v1196 = vpop.permute.xlu0 %1195
        %1197 = vrot.lane.b32.xlu0 %v734, 20
        %v1198 = vpop.permute.xlu0 %1197
        %1199 = vrot.lane.b32.xlu0 %v736, 20
        %v1200 = vpop.permute.xlu0 %1199
        %1201 = vrot.lane.b32.xlu0 %v739, 20
        %v1202 = vpop.permute.xlu0 %1201
        %1203 = vrot.lane.b32.xlu0 %v741, 20
        %v1204 = vpop.permute.xlu0 %1203
        %1205 = vrot.lane.b32.xlu0 %v744, 20
        %v1206 = vpop.permute.xlu0 %1205
        %1207 = vrot.lane.b32.xlu0 %v746, 20
        %v1208 = vpop.permute.xlu0 %1207
        %1209 = vrot.lane.b32.xlu0 %v749, 20
        %v1210 = vpop.permute.xlu0 %1209
        %1211 = vrot.lane.b32.xlu0 %v751, 20
        %v1212 = vpop.permute.xlu0 %1211
        %1213 = vrot.lane.b32.xlu0 %v754, 20
        %v1214 = vpop.permute.xlu0 %1213
        %1215 = vrot.lane.b32.xlu0 %v756, 20
        %v1216 = vpop.permute.xlu0 %1215
        %1217 = vrot.lane.b32.xlu0 %v759, 20
        %v1218 = vpop.permute.xlu0 %1217
        %1219 = vrot.lane.b32.xlu0 %v761, 20
        %v1220 = vpop.permute.xlu0 %1219
        %1221 = vrot.lane.b32.xlu0 %v764, 20
        %v1222 = vpop.permute.xlu0 %1221
        %1223 = vrot.lane.b32.xlu0 %v766, 20
        %v1224 = vpop.permute.xlu0 %1223
        %1225 = vrot.lane.b32.xlu0 %v769, 20
        %v1226 = vpop.permute.xlu0 %1225
        %1227 = vrot.lane.b32.xlu0 %v771, 20
        %v1228 = vpop.permute.xlu0 %1227
        %1229 = vrot.lane.b32.xlu0 %v774, 20
        %v1230 = vpop.permute.xlu0 %1229
        %1231 = vrot.lane.b32.xlu0 %v776, 20
        %v1232 = vpop.permute.xlu0 %1231
        %1233 = vrot.lane.b32.xlu0 %v786, 20
        %v1234 = vpop.permute.xlu0 %1233
        %1235 = vrot.lane.b32.xlu0 %v788, 20
        %v1236 = vpop.permute.xlu0 %1235
        %1269 = vrot.lane.b32.xlu0 %v551, 24
        %v1270 = vpop.permute.xlu0 %1269
        %1271 = vrot.lane.b32.xlu0 %v457, 24
        %v1272 = vpop.permute.xlu0 %1271
        %1273 = vrot.lane.b32.xlu0 %v552, 24
        %v1274 = vpop.permute.xlu0 %1273
        %1275 = vrot.lane.b32.xlu0 %v460, 24
        %v1276 = vpop.permute.xlu0 %1275
        %1277 = vrot.lane.b32.xlu0 %v553, 24
        %v1278 = vpop.permute.xlu0 %1277
        %1279 = vrot.lane.b32.xlu0 %v463, 24
        %v1280 = vpop.permute.xlu0 %1279
        %1281 = vrot.lane.b32.xlu0 %v554, 24
        %v1282 = vpop.permute.xlu0 %1281
        %1283 = vrot.lane.b32.xlu0 %v466, 24
        %v1284 = vpop.permute.xlu0 %1283
        %1285 = vrot.lane.b32.xlu0 %v555, 24
        %v1286 = vpop.permute.xlu0 %1285
        %1287 = vrot.lane.b32.xlu0 %v469, 24
        %v1288 = vpop.permute.xlu0 %1287
        %1289 = vrot.lane.b32.xlu0 %v556, 24
        %v1290 = vpop.permute.xlu0 %1289
        %1291 = vrot.lane.b32.xlu0 %v472, 24
        %v1292 = vpop.permute.xlu0 %1291
        %1293 = vrot.lane.b32.xlu0 %v557, 24
        %v1294 = vpop.permute.xlu0 %1293
        %1295 = vrot.lane.b32.xlu0 %v475, 24
        %v1296 = vpop.permute.xlu0 %1295
        %1297 = vrot.lane.b32.xlu0 %v558, 24
        %v1298 = vpop.permute.xlu0 %1297
        %1299 = vrot.lane.b32.xlu0 %v478, 24
        %v1300 = vpop.permute.xlu0 %1299
        %1301 = vrot.lane.b32.xlu0 %v559, 24
        %v1302 = vpop.permute.xlu0 %1301
        %1303 = vrot.lane.b32.xlu0 %v481, 24
        %v1304 = vpop.permute.xlu0 %1303
        %1305 = vrot.lane.b32.xlu0 %v560, 24
        %v1306 = vpop.permute.xlu0 %1305
        %1307 = vrot.lane.b32.xlu0 %v484, 24
        %v1308 = vpop.permute.xlu0 %1307
        %1309 = vrot.lane.b32.xlu0 %v561, 24
        %v1310 = vpop.permute.xlu0 %1309
        %1311 = vrot.lane.b32.xlu0 %v487, 24
        %v1312 = vpop.permute.xlu0 %1311
        %1313 = vrot.lane.b32.xlu0 %v562, 24
        %v1314 = vpop.permute.xlu0 %1313
        %1315 = vrot.lane.b32.xlu0 %v490, 24
        %v1316 = vpop.permute.xlu0 %1315
        %1317 = vrot.lane.b32.xlu0 %v563, 24
        %v1318 = vpop.permute.xlu0 %1317
        %1319 = vrot.lane.b32.xlu0 %v493, 24
        %v1320 = vpop.permute.xlu0 %1319
        %1321 = vrot.lane.b32.xlu0 %v564, 24
        %v1322 = vpop.permute.xlu0 %1321
        %1323 = vrot.lane.b32.xlu0 %v496, 24
        %v1324 = vpop.permute.xlu0 %1323
        %1325 = vrot.lane.b32.xlu0 %v565, 24
        %v1326 = vpop.permute.xlu0 %1325
        %1327 = vrot.lane.b32.xlu0 %v499, 24
        %v1328 = vpop.permute.xlu0 %1327
        %1329 = vrot.lane.b32.xlu0 %v549, 24
        %v1330 = vpop.permute.xlu0 %1329
        %1331 = vrot.lane.b32.xlu0 %v451, 24
        %v1332 = vpop.permute.xlu0 %1331
        %1365 = vrot.lane.b32.xlu0 %v628, 28
        %v1366 = vpop.permute.xlu0 %1365
        %1367 = vrot.lane.b32.xlu0 %v630, 28
        %v1368 = vpop.permute.xlu0 %1367
        %1369 = vrot.lane.b32.xlu0 %v633, 28
        %v1370 = vpop.permute.xlu0 %1369
        %1371 = vrot.lane.b32.xlu0 %v635, 28
        %v1372 = vpop.permute.xlu0 %1371
        %1373 = vrot.lane.b32.xlu0 %v638, 28
        %v1374 = vpop.permute.xlu0 %1373
        %1375 = vrot.lane.b32.xlu0 %v640, 28
        %v1376 = vpop.permute.xlu0 %1375
        %1377 = vrot.lane.b32.xlu0 %v643, 28
        %v1378 = vpop.permute.xlu0 %1377
        %1379 = vrot.lane.b32.xlu0 %v645, 28
        %v1380 = vpop.permute.xlu0 %1379
        %1381 = vrot.lane.b32.xlu0 %v648, 28
        %v1382 = vpop.permute.xlu0 %1381
        %1383 = vrot.lane.b32.xlu0 %v650, 28
        %v1384 = vpop.permute.xlu0 %1383
        %1385 = vrot.lane.b32.xlu0 %v653, 28
        %v1386 = vpop.permute.xlu0 %1385
        %1387 = vrot.lane.b32.xlu0 %v655, 28
        %v1388 = vpop.permute.xlu0 %1387
        %1389 = vrot.lane.b32.xlu0 %v658, 28
        %v1390 = vpop.permute.xlu0 %1389
        %1391 = vrot.lane.b32.xlu0 %v660, 28
        %v1392 = vpop.permute.xlu0 %1391
        %1393 = vrot.lane.b32.xlu0 %v663, 28
        %v1394 = vpop.permute.xlu0 %1393
        %1395 = vrot.lane.b32.xlu0 %v665, 28
        %v1396 = vpop.permute.xlu0 %1395
        %1397 = vrot.lane.b32.xlu0 %v668, 28
        %v1398 = vpop.permute.xlu0 %1397
        %1399 = vrot.lane.b32.xlu0 %v670, 28
        %v1400 = vpop.permute.xlu0 %1399
        %1401 = vrot.lane.b32.xlu0 %v673, 28
        %v1402 = vpop.permute.xlu0 %1401
        %1403 = vrot.lane.b32.xlu0 %v675, 28
        %v1404 = vpop.permute.xlu0 %1403
        %1405 = vrot.lane.b32.xlu0 %v678, 28
        %v1406 = vpop.permute.xlu0 %1405
        %1407 = vrot.lane.b32.xlu0 %v680, 28
        %v1408 = vpop.permute.xlu0 %1407
        %1409 = vrot.lane.b32.xlu0 %v683, 28
        %v1410 = vpop.permute.xlu0 %1409
        %1411 = vrot.lane.b32.xlu0 %v685, 28
        %v1412 = vpop.permute.xlu0 %1411
        %1413 = vrot.lane.b32.xlu0 %v688, 28
        %v1414 = vpop.permute.xlu0 %1413
        %1415 = vrot.lane.b32.xlu0 %v690, 28
        %v1416 = vpop.permute.xlu0 %1415
        %1417 = vrot.lane.b32.xlu0 %v693, 28
        %v1418 = vpop.permute.xlu0 %1417
        %1419 = vrot.lane.b32.xlu0 %v695, 28
        %v1420 = vpop.permute.xlu0 %1419
        %1421 = vrot.lane.b32.xlu0 %v781, 28
        %v1422 = vpop.permute.xlu0 %1421
        %1423 = vrot.lane.b32.xlu0 %v783, 28
        %v1424 = vpop.permute.xlu0 %1423
        %1425 = vrot.lane.b32.xlu0 %v618, 28
        %v1426 = vpop.permute.xlu0 %1425
        %1427 = vrot.lane.b32.xlu0 %v620, 28
        %v1428 = vpop.permute.xlu0 %1427
        %1461 = vrot.lane.b32.xlu0 %v709, 32
        %v1462 = vpop.permute.xlu0 %1461
        %1463 = vrot.lane.b32.xlu0 %v711, 32
        %v1464 = vpop.permute.xlu0 %1463
        %1465 = vrot.lane.b32.xlu0 %v714, 32
        %v1466 = vpop.permute.xlu0 %1465
        %1467 = vrot.lane.b32.xlu0 %v716, 32
        %v1468 = vpop.permute.xlu0 %1467
        %1469 = vrot.lane.b32.xlu0 %v719, 32
        %v1470 = vpop.permute.xlu0 %1469
        %1471 = vrot.lane.b32.xlu0 %v721, 32
        %v1472 = vpop.permute.xlu0 %1471
        %1473 = vrot.lane.b32.xlu0 %v724, 32
        %v1474 = vpop.permute.xlu0 %1473
        %1475 = vrot.lane.b32.xlu0 %v726, 32
        %v1476 = vpop.permute.xlu0 %1475
        %1477 = vrot.lane.b32.xlu0 %v729, 32
        %v1478 = vpop.permute.xlu0 %1477
        %1479 = vrot.lane.b32.xlu0 %v731, 32
        %v1480 = vpop.permute.xlu0 %1479
        %1481 = vrot.lane.b32.xlu0 %v734, 32
        %v1482 = vpop.permute.xlu0 %1481
        %1483 = vrot.lane.b32.xlu0 %v736, 32
        %v1484 = vpop.permute.xlu0 %1483
        %1485 = vrot.lane.b32.xlu0 %v739, 32
        %v1486 = vpop.permute.xlu0 %1485
        %1487 = vrot.lane.b32.xlu0 %v741, 32
        %v1488 = vpop.permute.xlu0 %1487
        %1489 = vrot.lane.b32.xlu0 %v744, 32
        %v1490 = vpop.permute.xlu0 %1489
        %1491 = vrot.lane.b32.xlu0 %v746, 32
        %v1492 = vpop.permute.xlu0 %1491
        %1493 = vrot.lane.b32.xlu0 %v749, 32
        %v1494 = vpop.permute.xlu0 %1493
        %1495 = vrot.lane.b32.xlu0 %v751, 32
        %v1496 = vpop.permute.xlu0 %1495
        %1497 = vrot.lane.b32.xlu0 %v754, 32
        %v1498 = vpop.permute.xlu0 %1497
        %1499 = vrot.lane.b32.xlu0 %v756, 32
        %v1500 = vpop.permute.xlu0 %1499
        %1501 = vrot.lane.b32.xlu0 %v759, 32
        %v1502 = vpop.permute.xlu0 %1501
        %1503 = vrot.lane.b32.xlu0 %v761, 32
        %v1504 = vpop.permute.xlu0 %1503
        %1505 = vrot.lane.b32.xlu0 %v764, 32
        %v1506 = vpop.permute.xlu0 %1505
        %1507 = vrot.lane.b32.xlu0 %v766, 32
        %v1508 = vpop.permute.xlu0 %1507
        %1509 = vrot.lane.b32.xlu0 %v769, 32
        %v1510 = vpop.permute.xlu0 %1509
        %1511 = vrot.lane.b32.xlu0 %v771, 32
        %v1512 = vpop.permute.xlu0 %1511
        %1513 = vrot.lane.b32.xlu0 %v774, 32
        %v1514 = vpop.permute.xlu0 %1513
        %1515 = vrot.lane.b32.xlu0 %v776, 32
        %v1516 = vpop.permute.xlu0 %1515
        %1517 = vrot.lane.b32.xlu0 %v786, 32
        %v1518 = vpop.permute.xlu0 %1517
        %1519 = vrot.lane.b32.xlu0 %v788, 32
        %v1520 = vpop.permute.xlu0 %1519
        %1521 = vrot.lane.b32.xlu0 %v699, 32
        %v1522 = vpop.permute.xlu0 %1521
        %1523 = vrot.lane.b32.xlu0 %v701, 32
        %v1524 = vpop.permute.xlu0 %1523
        %vm1557 = vcmask 31744
        %v1558 = vsel %vm1557, %v549, %v790
        %v1559 = vsel %vm1557, %v451, %v792
        %v1560 = vsel %vm1557, %v550, %v794
        %v1561 = vsel %vm1557, %v454, %v796
        %v1562 = vsel %vm1557, %v551, %v798
        %v1563 = vsel %vm1557, %v457, %v800
        %v1564 = vsel %vm1557, %v552, %v802
        %v1565 = vsel %vm1557, %v460, %v804
        %v1566 = vsel %vm1557, %v553, %v806
        %v1567 = vsel %vm1557, %v463, %v808
        %v1568 = vsel %vm1557, %v554, %v810
        %v1569 = vsel %vm1557, %v466, %v812
        %v1570 = vsel %vm1557, %v555, %v814
        %v1571 = vsel %vm1557, %v469, %v816
        %v1572 = vsel %vm1557, %v556, %v818
        %v1573 = vsel %vm1557, %v472, %v820
        %v1574 = vsel %vm1557, %v557, %v822
        %v1575 = vsel %vm1557, %v475, %v824
        %v1576 = vsel %vm1557, %v558, %v826
        %v1577 = vsel %vm1557, %v478, %v828
        %v1578 = vsel %vm1557, %v559, %v830
        %v1579 = vsel %vm1557, %v481, %v832
        %v1580 = vsel %vm1557, %v560, %v834
        %v1581 = vsel %vm1557, %v484, %v836
        %v1582 = vsel %vm1557, %v561, %v838
        %v1583 = vsel %vm1557, %v487, %v840
        %v1584 = vsel %vm1557, %v562, %v842
        %v1585 = vsel %vm1557, %v490, %v844
        %v1586 = vsel %vm1557, %v563, %v846
        %v1587 = vsel %vm1557, %v493, %v848
        %v1588 = vsel %vm1557, %v564, %v850
        %v1589 = vsel %vm1557, %v496, %v852
        %vm1590 = vcmask 64512
        %v1591 = vsel %vm1590, %v1558, %v886
        %v1592 = vsel %vm1590, %v1559, %v888
        %v1593 = vsel %vm1590, %v1560, %v890
        %v1594 = vsel %vm1590, %v1561, %v892
        %v1595 = vsel %vm1590, %v1562, %v894
        %v1596 = vsel %vm1590, %v1563, %v896
        %v1597 = vsel %vm1590, %v1564, %v898
        %v1598 = vsel %vm1590, %v1565, %v900
        %v1599 = vsel %vm1590, %v1566, %v902
        %v1600 = vsel %vm1590, %v1567, %v904
        %v1601 = vsel %vm1590, %v1568, %v906
        %v1602 = vsel %vm1590, %v1569, %v908
        %v1603 = vsel %vm1590, %v1570, %v910
        %v1604 = vsel %vm1590, %v1571, %v912
        %v1605 = vsel %vm1590, %v1572, %v914
        %v1606 = vsel %vm1590, %v1573, %v916
        %v1607 = vsel %vm1590, %v1574, %v918
        %v1608 = vsel %vm1590, %v1575, %v920
        %v1609 = vsel %vm1590, %v1576, %v922
        %v1610 = vsel %vm1590, %v1577, %v924
        %v1611 = vsel %vm1590, %v1578, %v926
        %v1612 = vsel %vm1590, %v1579, %v928
        %v1613 = vsel %vm1590, %v1580, %v930
        %v1614 = vsel %vm1590, %v1581, %v932
        %v1615 = vsel %vm1590, %v1582, %v934
        %v1616 = vsel %vm1590, %v1583, %v936
        %v1617 = vsel %vm1590, %v1584, %v938
        %v1618 = vsel %vm1590, %v1585, %v940
        %v1619 = vsel %vm1590, %v1586, %v942
        %v1620 = vsel %vm1590, %v1587, %v944
        %v1621 = vsel %vm1590, %v1588, %v946
        %v1622 = vsel %vm1590, %v1589, %v948
        %vm1623 = vcmask 97280
        %v1624 = vsel %vm1623, %v1591, %v982
        %v1625 = vsel %vm1623, %v1592, %v984
        %v1626 = vsel %vm1623, %v1593, %v986
        %v1627 = vsel %vm1623, %v1594, %v988
        %v1628 = vsel %vm1623, %v1595, %v990
        %v1629 = vsel %vm1623, %v1596, %v992
        %v1630 = vsel %vm1623, %v1597, %v994
        %v1631 = vsel %vm1623, %v1598, %v996
        %v1632 = vsel %vm1623, %v1599, %v998
        %v1633 = vsel %vm1623, %v1600, %v1000
        %v1634 = vsel %vm1623, %v1601, %v1002
        %v1635 = vsel %vm1623, %v1602, %v1004
        %v1636 = vsel %vm1623, %v1603, %v1006
        %v1637 = vsel %vm1623, %v1604, %v1008
        %v1638 = vsel %vm1623, %v1605, %v1010
        %v1639 = vsel %vm1623, %v1606, %v1012
        %v1640 = vsel %vm1623, %v1607, %v1014
        %v1641 = vsel %vm1623, %v1608, %v1016
        %v1642 = vsel %vm1623, %v1609, %v1018
        %v1643 = vsel %vm1623, %v1610, %v1020
        %v1644 = vsel %vm1623, %v1611, %v1022
        %v1645 = vsel %vm1623, %v1612, %v1024
        %v1646 = vsel %vm1623, %v1613, %v1026
        %v1647 = vsel %vm1623, %v1614, %v1028
        %v1648 = vsel %vm1623, %v1615, %v1030
        %v1649 = vsel %vm1623, %v1616, %v1032
        %v1650 = vsel %vm1623, %v1617, %v1034
        %v1651 = vsel %vm1623, %v1618, %v1036
        %v1652 = vsel %vm1623, %v1619, %v1038
        %v1653 = vsel %vm1623, %v1620, %v1040
        %v1654 = vsel %vm1623, %v1621, %v1042
        %v1655 = vsel %vm1623, %v1622, %v1044
        %vm1656 = vcmask 130048
        %v1657 = vsel %vm1656, %v1624, %v1078
        %v1658 = vsel %vm1656, %v1625, %v1080
        %v1659 = vsel %vm1656, %v1626, %v1082
        %v1660 = vsel %vm1656, %v1627, %v1084
        %v1661 = vsel %vm1656, %v1628, %v1086
        %v1662 = vsel %vm1656, %v1629, %v1088
        %v1663 = vsel %vm1656, %v1630, %v1090
        %v1664 = vsel %vm1656, %v1631, %v1092
        %v1665 = vsel %vm1656, %v1632, %v1094
        %v1666 = vsel %vm1656, %v1633, %v1096
        %v1667 = vsel %vm1656, %v1634, %v1098
        %v1668 = vsel %vm1656, %v1635, %v1100
        %v1669 = vsel %vm1656, %v1636, %v1102
        %v1670 = vsel %vm1656, %v1637, %v1104
        %v1671 = vsel %vm1656, %v1638, %v1106
        %v1672 = vsel %vm1656, %v1639, %v1108
        %v1673 = vsel %vm1656, %v1640, %v1110
        %v1674 = vsel %vm1656, %v1641, %v1112
        %v1675 = vsel %vm1656, %v1642, %v1114
        %v1676 = vsel %vm1656, %v1643, %v1116
        %v1677 = vsel %vm1656, %v1644, %v1118
        %v1678 = vsel %vm1656, %v1645, %v1120
        %v1679 = vsel %vm1656, %v1646, %v1122
        %v1680 = vsel %vm1656, %v1647, %v1124
        %v1681 = vsel %vm1656, %v1648, %v1126
        %v1682 = vsel %vm1656, %v1649, %v1128
        %v1683 = vsel %vm1656, %v1650, %v1130
        %v1684 = vsel %vm1656, %v1651, %v1132
        %v1685 = vsel %vm1656, %v1652, %v1134
        %v1686 = vsel %vm1656, %v1653, %v1136
        %v1687 = vsel %vm1656, %v1654, %v1138
        %v1688 = vsel %vm1656, %v1655, %v1140
        %vm1689 = vcmask 162816
        %v1690 = vsel %vm1689, %v1657, %v1174
        %v1691 = vsel %vm1689, %v1658, %v1176
        %v1692 = vsel %vm1689, %v1659, %v1178
        %v1693 = vsel %vm1689, %v1660, %v1180
        %v1694 = vsel %vm1689, %v1661, %v1182
        %v1695 = vsel %vm1689, %v1662, %v1184
        %v1696 = vsel %vm1689, %v1663, %v1186
        %v1697 = vsel %vm1689, %v1664, %v1188
        %v1698 = vsel %vm1689, %v1665, %v1190
        %v1699 = vsel %vm1689, %v1666, %v1192
        %v1700 = vsel %vm1689, %v1667, %v1194
        %v1701 = vsel %vm1689, %v1668, %v1196
        %v1702 = vsel %vm1689, %v1669, %v1198
        %v1703 = vsel %vm1689, %v1670, %v1200
        %v1704 = vsel %vm1689, %v1671, %v1202
        %v1705 = vsel %vm1689, %v1672, %v1204
        %v1706 = vsel %vm1689, %v1673, %v1206
        %v1707 = vsel %vm1689, %v1674, %v1208
        %v1708 = vsel %vm1689, %v1675, %v1210
        %v1709 = vsel %vm1689, %v1676, %v1212
        %v1710 = vsel %vm1689, %v1677, %v1214
        %v1711 = vsel %vm1689, %v1678, %v1216
        %v1712 = vsel %vm1689, %v1679, %v1218
        %v1713 = vsel %vm1689, %v1680, %v1220
        %v1714 = vsel %vm1689, %v1681, %v1222
        %v1715 = vsel %vm1689, %v1682, %v1224
        %v1716 = vsel %vm1689, %v1683, %v1226
        %v1717 = vsel %vm1689, %v1684, %v1228
        %v1718 = vsel %vm1689, %v1685, %v1230
        %v1719 = vsel %vm1689, %v1686, %v1232
        %v1720 = vsel %vm1689, %v1687, %v1234
        %v1721 = vsel %vm1689, %v1688, %v1236
        %vm1722 = vcmask 195584
        %v1723 = vsel %vm1722, %v1690, %v1270
        %v1724 = vsel %vm1722, %v1691, %v1272
        %v1725 = vsel %vm1722, %v1692, %v1274
        %v1726 = vsel %vm1722, %v1693, %v1276
        %v1727 = vsel %vm1722, %v1694, %v1278
        %v1728 = vsel %vm1722, %v1695, %v1280
        %v1729 = vsel %vm1722, %v1696, %v1282
        %v1730 = vsel %vm1722, %v1697, %v1284
        %v1731 = vsel %vm1722, %v1698, %v1286
        %v1732 = vsel %vm1722, %v1699, %v1288
        %v1733 = vsel %vm1722, %v1700, %v1290
        %v1734 = vsel %vm1722, %v1701, %v1292
        %v1735 = vsel %vm1722, %v1702, %v1294
        %v1736 = vsel %vm1722, %v1703, %v1296
        %v1737 = vsel %vm1722, %v1704, %v1298
        %v1738 = vsel %vm1722, %v1705, %v1300
        %v1739 = vsel %vm1722, %v1706, %v1302
        %v1740 = vsel %vm1722, %v1707, %v1304
        %v1741 = vsel %vm1722, %v1708, %v1306
        %v1742 = vsel %vm1722, %v1709, %v1308
        %v1743 = vsel %vm1722, %v1710, %v1310
        %v1744 = vsel %vm1722, %v1711, %v1312
        %v1745 = vsel %vm1722, %v1712, %v1314
        %v1746 = vsel %vm1722, %v1713, %v1316
        %v1747 = vsel %vm1722, %v1714, %v1318
        %v1748 = vsel %vm1722, %v1715, %v1320
        %v1749 = vsel %vm1722, %v1716, %v1322
        %v1750 = vsel %vm1722, %v1717, %v1324
        %v1751 = vsel %vm1722, %v1718, %v1326
        %v1752 = vsel %vm1722, %v1719, %v1328
        %v1753 = vsel %vm1722, %v1720, %v1330
        %v1754 = vsel %vm1722, %v1721, %v1332
        %vm1755 = vcmask 228352
        %v1756 = vsel %vm1755, %v1723, %v1366
        %v1757 = vsel %vm1755, %v1724, %v1368
        %v1758 = vsel %vm1755, %v1725, %v1370
        %v1759 = vsel %vm1755, %v1726, %v1372
        %v1760 = vsel %vm1755, %v1727, %v1374
        %v1761 = vsel %vm1755, %v1728, %v1376
        %v1762 = vsel %vm1755, %v1729, %v1378
        %v1763 = vsel %vm1755, %v1730, %v1380
        %v1764 = vsel %vm1755, %v1731, %v1382
        %v1765 = vsel %vm1755, %v1732, %v1384
        %v1766 = vsel %vm1755, %v1733, %v1386
        %v1767 = vsel %vm1755, %v1734, %v1388
        %v1768 = vsel %vm1755, %v1735, %v1390
        %v1769 = vsel %vm1755, %v1736, %v1392
        %v1770 = vsel %vm1755, %v1737, %v1394
        %v1771 = vsel %vm1755, %v1738, %v1396
        %v1772 = vsel %vm1755, %v1739, %v1398
        %v1773 = vsel %vm1755, %v1740, %v1400
        %v1774 = vsel %vm1755, %v1741, %v1402
        %v1775 = vsel %vm1755, %v1742, %v1404
        %v1776 = vsel %vm1755, %v1743, %v1406
        %v1777 = vsel %vm1755, %v1744, %v1408
        %v1778 = vsel %vm1755, %v1745, %v1410
        %v1779 = vsel %vm1755, %v1746, %v1412
        %v1780 = vsel %vm1755, %v1747, %v1414
        %v1781 = vsel %vm1755, %v1748, %v1416
        %v1782 = vsel %vm1755, %v1749, %v1418
        %v1783 = vsel %vm1755, %v1750, %v1420
        %v1784 = vsel %vm1755, %v1751, %v1422
        %v1785 = vsel %vm1755, %v1752, %v1424
        %v1786 = vsel %vm1755, %v1753, %v1426
        %v1787 = vsel %vm1755, %v1754, %v1428
        %vm1788 = vcmask 261120
        %v1789 = vsel %vm1788, %v1756, %v1462
        %v1790 = vsel %vm1788, %v1757, %v1464
        %v1791 = vsel %vm1788, %v1758, %v1466
        %v1792 = vsel %vm1788, %v1759, %v1468
        %v1793 = vsel %vm1788, %v1760, %v1470
        %v1794 = vsel %vm1788, %v1761, %v1472
        %v1795 = vsel %vm1788, %v1762, %v1474
        %v1796 = vsel %vm1788, %v1763, %v1476
        %v1797 = vsel %vm1788, %v1764, %v1478
        %v1798 = vsel %vm1788, %v1765, %v1480
        %v1799 = vsel %vm1788, %v1766, %v1482
        %v1800 = vsel %vm1788, %v1767, %v1484
        %v1801 = vsel %vm1788, %v1768, %v1486
        %v1802 = vsel %vm1788, %v1769, %v1488
        %v1803 = vsel %vm1788, %v1770, %v1490
        %v1804 = vsel %vm1788, %v1771, %v1492
        %v1805 = vsel %vm1788, %v1772, %v1494
        %v1806 = vsel %vm1788, %v1773, %v1496
        %v1807 = vsel %vm1788, %v1774, %v1498
        %v1808 = vsel %vm1788, %v1775, %v1500
        %v1809 = vsel %vm1788, %v1776, %v1502
        %v1810 = vsel %vm1788, %v1777, %v1504
        %v1811 = vsel %vm1788, %v1778, %v1506
        %v1812 = vsel %vm1788, %v1779, %v1508
        %v1813 = vsel %vm1788, %v1780, %v1510
        %v1814 = vsel %vm1788, %v1781, %v1512
        %v1815 = vsel %vm1788, %v1782, %v1514
        %v1816 = vsel %vm1788, %v1783, %v1516
        %v1817 = vsel %vm1788, %v1784, %v1518
        %v1818 = vsel %vm1788, %v1785, %v1520
        %v1819 = vsel %vm1788, %v1786, %v1522
        %v1820 = vsel %vm1788, %v1787, %v1524
        %v1821 = vld [vmem:[%s1] sm:$0xff]
        %v1822 = vld [vmem:[%s1 + $0x8] sm:$0xff]
        %v1823 = vld [vmem:[%s1 + $0x10] sm:$0xff]
        %v1824 = vld [vmem:[%s1 + $0x18] sm:$0xff]
        %v1825 = vld [vmem:[%s1 + $0x20] sm:$0xf]
        %v1826 = vld [vmem:[%s2] sm:$0x1]
        %v1828 = vlaneseq
        %v1829 = vshrl.u32 %v1828, 7
        %v1830 = vsub.s32 0, %v1829
        %v1831 = vrot.slane %v1826, %v1830
        %vm1833 = vcmask 293888
        %v1835 = vsel %vm1833, %v1789, 0
        %v1838 = vsel %vm1833, %v1790, 0
        %v1841 = vsel %vm1833, %v1791, 0
        %v1844 = vsel %vm1833, %v1792, 0
        %v1847 = vsel %vm1833, %v1793, 0
        %v1850 = vsel %vm1833, %v1794, 0
        %v1853 = vsel %vm1833, %v1795, 0
        %v1856 = vsel %vm1833, %v1796, 0
        %v1859 = vsel %vm1833, %v1797, 0
        %v1862 = vsel %vm1833, %v1798, 0
        %v1865 = vsel %vm1833, %v1799, 0
        %v1868 = vsel %vm1833, %v1800, 0
        %v1871 = vsel %vm1833, %v1801, 0
        %v1874 = vsel %vm1833, %v1802, 0
        %v1877 = vsel %vm1833, %v1803, 0
        %v1880 = vsel %vm1833, %v1804, 0
        %v1883 = vsel %vm1833, %v1805, 0
        %v1886 = vsel %vm1833, %v1806, 0
        %v1889 = vsel %vm1833, %v1807, 0
        %v1892 = vsel %vm1833, %v1808, 0
        %v1895 = vsel %vm1833, %v1809, 0
        %v1898 = vsel %vm1833, %v1810, 0
        %v1901 = vsel %vm1833, %v1811, 0
        %v1904 = vsel %vm1833, %v1812, 0
        %v1907 = vsel %vm1833, %v1813, 0
        %v1910 = vsel %vm1833, %v1814, 0
        %v1913 = vsel %vm1833, %v1815, 0
        %v1916 = vsel %vm1833, %v1816, 0
        %v1919 = vsel %vm1833, %v1817, 0
        %v1922 = vsel %vm1833, %v1818, 0
        %v1925 = vsel %vm1833, %v1819, 0
        %v1928 = vsel %vm1833, %v1820, 0
        %vm1930 = vcmask 1043456
        %v1932 = vsel %vm1930, %v1825, 0
        %1934 = vmatprep.subr.mxu0 0.0
        %1935 = vmatpush1.msra.mxu0 %v1821
        %1936 = vmatprep.subr.mxu0 0.0
        %1937 = vmatpush1.msra.mxu0 %v1822
        %1938 = vmatprep.subr.mxu0 0.0
        %1939 = vmatpush1.msra.mxu0 %v1823
        %1940 = vmatprep.subr.mxu0 0.0
        %1941 = vmatpush1.msra.mxu0 %v1824
        %1942 = vmatprep.subr.mxu0 0.0
        %1943 = vmatpush1.msra.mxu0 %v1932
        %1944 = vmatprep.subr.mxu0 0.0
        %1945 = vmatpush1.msra.mxu0 0.0
        %1946 = vmatprep.subr.mxu0 0.0
        %1947 = vmatpush1.msra.mxu0 0.0
        %1948 = vmatprep.subr.mxu0 0.0
        %1949 = vmatpush1.msra.mxu0 0.0
        %1950 = vmatprep.subr.mxu0 0.0
        %1951 = vmatpush1.msra.mxu0 0.0
        %1952 = vmatprep.subr.mxu0 0.0
        %1953 = vmatpush1.msra.mxu0 0.0
        %1954 = vmatprep.subr.mxu0 0.0
        %1955 = vmatpush1.msra.mxu0 0.0
        %1956 = vmatprep.subr.mxu0 0.0
        %1957 = vmatpush1.msra.mxu0 0.0
        %1958 = vmatprep.subr.mxu0 0.0
        %1959 = vmatpush1.msra.mxu0 0.0
        %1960 = vmatprep.subr.mxu0 0.0
        %1961 = vmatpush1.msra.mxu0 0.0
        %1962 = vmatprep.subr.mxu0 0.0
        %1963 = vmatpush1.msra.mxu0 0.0
        %1964 = vmatprep.subr.mxu0 0.0
        %1965 = vmatpush1.msra.mxu0 0.0
        %1966 = vmatprep.subr.mxu0 0.0
        %1967 = vmatpush1.msra.mxu0 0.0
        %1968 = vmatprep.subr.mxu0 0.0
        %1969 = vmatpush1.msra.mxu0 0.0
        %1970 = vmatprep.subr.mxu0 0.0
        %1971 = vmatpush1.msra.mxu0 0.0
        %1972 = vmatprep.subr.mxu0 0.0
        %1973 = vmatpush1.msra.mxu0 0.0
        %1974 = vmatprep.subr.mxu0 0.0
        %1975 = vmatpush1.msra.mxu0 0.0
        %1976 = vmatprep.subr.mxu0 0.0
        %1977 = vmatpush1.msra.mxu0 0.0
        %1978 = vmatprep.subr.mxu0 0.0
        %1979 = vmatpush1.msra.mxu0 0.0
        %1980 = vmatprep.subr.mxu0 0.0
        %1981 = vmatpush1.msra.mxu0 0.0
        %1982 = vmatprep.subr.mxu0 0.0
        %1983 = vmatpush1.msra.mxu0 0.0
        %1984 = vmatprep.subr.mxu0 0.0
        %1985 = vmatpush1.msra.mxu0 0.0
        %1986 = vmatprep.subr.mxu0 0.0
        %1987 = vmatpush1.msra.mxu0 0.0
        %1988 = vmatprep.subr.mxu0 0.0
        %1989 = vmatpush1.msra.mxu0 0.0
        %1990 = vmatprep.subr.mxu0 0.0
        %1991 = vmatpush1.msra.mxu0 0.0
        %1992 = vmatprep.subr.mxu0 0.0
        %1993 = vmatpush1.msra.mxu0 0.0
        %1994 = vmatprep.subr.mxu0 0.0
        %1995 = vmatpush1.msra.mxu0 0.0
        %1996 = vmatprep.subr.mxu0 0.0
        %1997 = vmatpush1.msra.mxu0 0.0
        %1998 = vmatprep.mubr.f32.mxu0 0.0
        %1999 = vmatmul.mubr.f32.gmra.mrb[0].mxu0 %v1835
        %v2000 = vpop.f32.mrb[0].mxu0
        %v2001 = vadd.f32 %v1831, %v2000
        %v2002 = vpop.f32.mrb[0].mxu0
        %2003 = vmatprep.mubr.f32.mxu0 0.0
        %2004 = vmatmul.mubr.f32.gmra.mrb[0].mxu0 %v1838
        %v2005 = vpop.f32.mrb[0].mxu0
        %v2006 = vadd.f32 %v1831, %v2005
        %v2007 = vpop.f32.mrb[0].mxu0
        %2008 = vmatprep.mubr.f32.mxu0 0.0
        %2009 = vmatmul.mubr.f32.gmra.mrb[0].mxu0 %v1841
        %v2010 = vpop.f32.mrb[0].mxu0
        %v2011 = vadd.f32 %v1831, %v2010
        %v2012 = vpop.f32.mrb[0].mxu0
        %2013 = vmatprep.mubr.f32.mxu0 0.0
        %2014 = vmatmul.mubr.f32.gmra.mrb[0].mxu0 %v1844
        %v2015 = vpop.f32.mrb[0].mxu0
        %v2016 = vadd.f32 %v1831, %v2015
        %v2017 = vpop.f32.mrb[0].mxu0
        %2018 = vmatprep.mubr.f32.mxu0 0.0
        %2019 = vmatmul.mubr.f32.gmra.mrb[0].mxu0 %v1847
        %v2020 = vpop.f32.mrb[0].mxu0
        %v2021 = vadd.f32 %v1831, %v2020
        %v2022 = vpop.f32.mrb[0].mxu0
        %2023 = vmatprep.mubr.f32.mxu0 0.0
        %2024 = vmatmul.mubr.f32.gmra.mrb[0].mxu0 %v1850
        %v2025 = vpop.f32.mrb[0].mxu0
        %v2026 = vadd.f32 %v1831, %v2025
        %v2027 = vpop.f32.mrb[0].mxu0
        %2028 = vmatprep.mubr.f32.mxu0 0.0
        %2029 = vmatmul.mubr.f32.gmra.mrb[0].mxu0 %v1853
        %v2030 = vpop.f32.mrb[0].mxu0
        %v2031 = vadd.f32 %v1831, %v2030
        %v2032 = vpop.f32.mrb[0].mxu0
        %2033 = vmatprep.mubr.f32.mxu0 0.0
        %2034 = vmatmul.mubr.f32.gmra.mrb[0].mxu0 %v1856
        %v2035 = vpop.f32.mrb[0].mxu0
        %v2036 = vadd.f32 %v1831, %v2035
        %v2037 = vpop.f32.mrb[0].mxu0
        %2038 = vmatprep.mubr.f32.mxu0 0.0
        %2039 = vmatmul.mubr.f32.gmra.mrb[0].mxu0 %v1859
        %v2040 = vpop.f32.mrb[0].mxu0
        %v2041 = vadd.f32 %v1831, %v2040
        %v2042 = vpop.f32.mrb[0].mxu0
        %2043 = vmatprep.mubr.f32.mxu0 0.0
        %2044 = vmatmul.mubr.f32.gmra.mrb[0].mxu0 %v1862
        %v2045 = vpop.f32.mrb[0].mxu0
        %v2046 = vadd.f32 %v1831, %v2045
        %v2047 = vpop.f32.mrb[0].mxu0
        %2048 = vmatprep.mubr.f32.mxu0 0.0
        %2049 = vmatmul.mubr.f32.gmra.mrb[0].mxu0 %v1865
        %v2050 = vpop.f32.mrb[0].mxu0
        %v2051 = vadd.f32 %v1831, %v2050
        %v2052 = vpop.f32.mrb[0].mxu0
        %2053 = vmatprep.mubr.f32.mxu0 0.0
        %2054 = vmatmul.mubr.f32.gmra.mrb[0].mxu0 %v1868
        %v2055 = vpop.f32.mrb[0].mxu0
        %v2056 = vadd.f32 %v1831, %v2055
        %v2057 = vpop.f32.mrb[0].mxu0
        %2058 = vmatprep.mubr.f32.mxu0 0.0
        %2059 = vmatmul.mubr.f32.gmra.mrb[0].mxu0 %v1871
        %v2060 = vpop.f32.mrb[0].mxu0
        %v2061 = vadd.f32 %v1831, %v2060
        %v2062 = vpop.f32.mrb[0].mxu0
        %2063 = vmatprep.mubr.f32.mxu0 0.0
        %2064 = vmatmul.mubr.f32.gmra.mrb[0].mxu0 %v1874
        %v2065 = vpop.f32.mrb[0].mxu0
        %v2066 = vadd.f32 %v1831, %v2065
        %v2067 = vpop.f32.mrb[0].mxu0
        %2068 = vmatprep.mubr.f32.mxu0 0.0
        %2069 = vmatmul.mubr.f32.gmra.mrb[0].mxu0 %v1877
        %v2070 = vpop.f32.mrb[0].mxu0
        %v2071 = vadd.f32 %v1831, %v2070
        %v2072 = vpop.f32.mrb[0].mxu0
        %2073 = vmatprep.mubr.f32.mxu0 0.0
        %2074 = vmatmul.mubr.f32.gmra.mrb[0].mxu0 %v1880
        %v2075 = vpop.f32.mrb[0].mxu0
        %v2076 = vadd.f32 %v1831, %v2075
        %v2077 = vpop.f32.mrb[0].mxu0
        %2078 = vmatprep.mubr.f32.mxu0 0.0
        %2079 = vmatmul.mubr.f32.gmra.mrb[0].mxu0 %v1883
        %v2080 = vpop.f32.mrb[0].mxu0
        %v2081 = vadd.f32 %v1831, %v2080
        %v2082 = vpop.f32.mrb[0].mxu0
        %2083 = vmatprep.mubr.f32.mxu0 0.0
        %2084 = vmatmul.mubr.f32.gmra.mrb[0].mxu0 %v1886
        %v2085 = vpop.f32.mrb[0].mxu0
        %v2086 = vadd.f32 %v1831, %v2085
        %v2087 = vpop.f32.mrb[0].mxu0
        %2088 = vmatprep.mubr.f32.mxu0 0.0
        %2089 = vmatmul.mubr.f32.gmra.mrb[0].mxu0 %v1889
        %v2090 = vpop.f32.mrb[0].mxu0
        %v2091 = vadd.f32 %v1831, %v2090
        %v2092 = vpop.f32.mrb[0].mxu0
        %2093 = vmatprep.mubr.f32.mxu0 0.0
        %2094 = vmatmul.mubr.f32.gmra.mrb[0].mxu0 %v1892
        %v2095 = vpop.f32.mrb[0].mxu0
        %v2096 = vadd.f32 %v1831, %v2095
        %v2097 = vpop.f32.mrb[0].mxu0
        %2098 = vmatprep.mubr.f32.mxu0 0.0
        %2099 = vmatmul.mubr.f32.gmra.mrb[0].mxu0 %v1895
        %v2100 = vpop.f32.mrb[0].mxu0
        %v2101 = vadd.f32 %v1831, %v2100
        %v2102 = vpop.f32.mrb[0].mxu0
        %2103 = vmatprep.mubr.f32.mxu0 0.0
        %2104 = vmatmul.mubr.f32.gmra.mrb[0].mxu0 %v1898
        %v2105 = vpop.f32.mrb[0].mxu0
        %v2106 = vadd.f32 %v1831, %v2105
        %v2107 = vpop.f32.mrb[0].mxu0
        %2108 = vmatprep.mubr.f32.mxu0 0.0
        %2109 = vmatmul.mubr.f32.gmra.mrb[0].mxu0 %v1901
        %v2110 = vpop.f32.mrb[0].mxu0
        %v2111 = vadd.f32 %v1831, %v2110
        %v2112 = vpop.f32.mrb[0].mxu0
        %2113 = vmatprep.mubr.f32.mxu0 0.0
        %2114 = vmatmul.mubr.f32.gmra.mrb[0].mxu0 %v1904
        %v2115 = vpop.f32.mrb[0].mxu0
        %v2116 = vadd.f32 %v1831, %v2115
        %v2117 = vpop.f32.mrb[0].mxu0
        %2118 = vmatprep.mubr.f32.mxu0 0.0
        %2119 = vmatmul.mubr.f32.gmra.mrb[0].mxu0 %v1907
        %v2120 = vpop.f32.mrb[0].mxu0
        %v2121 = vadd.f32 %v1831, %v2120
        %v2122 = vpop.f32.mrb[0].mxu0
        %2123 = vmatprep.mubr.f32.mxu0 0.0
        %2124 = vmatmul.mubr.f32.gmra.mrb[0].mxu0 %v1910
        %v2125 = vpop.f32.mrb[0].mxu0
        %v2126 = vadd.f32 %v1831, %v2125
        %v2127 = vpop.f32.mrb[0].mxu0
        %2128 = vmatprep.mubr.f32.mxu0 0.0
        %2129 = vmatmul.mubr.f32.gmra.mrb[0].mxu0 %v1913
        %v2130 = vpop.f32.mrb[0].mxu0
        %v2131 = vadd.f32 %v1831, %v2130
        %v2132 = vpop.f32.mrb[0].mxu0
        %2133 = vmatprep.mubr.f32.mxu0 0.0
        %2134 = vmatmul.mubr.f32.gmra.mrb[0].mxu0 %v1916
        %v2135 = vpop.f32.mrb[0].mxu0
        %v2136 = vadd.f32 %v1831, %v2135
        %v2137 = vpop.f32.mrb[0].mxu0
        %2138 = vmatprep.mubr.f32.mxu0 0.0
        %2139 = vmatmul.mubr.f32.gmra.mrb[0].mxu0 %v1919
        %v2140 = vpop.f32.mrb[0].mxu0
        %v2141 = vadd.f32 %v1831, %v2140
        %v2142 = vpop.f32.mrb[0].mxu0
        %2143 = vmatprep.mubr.f32.mxu0 0.0
        %2144 = vmatmul.mubr.f32.gmra.mrb[0].mxu0 %v1922
        %v2145 = vpop.f32.mrb[0].mxu0
        %v2146 = vadd.f32 %v1831, %v2145
        %v2147 = vpop.f32.mrb[0].mxu0
        %2148 = vmatprep.mubr.f32.mxu0 0.0
        %2149 = vmatmul.mubr.f32.gmra.mrb[0].mxu0 %v1925
        %v2150 = vpop.f32.mrb[0].mxu0
        %v2151 = vadd.f32 %v1831, %v2150
        %v2152 = vpop.f32.mrb[0].mxu0
        %2153 = vmatprep.mubr.f32.mxu0 0.0
        %2154 = vmatmul.mubr.f32.gmra.mrb[0].mxu0 %v1928
        %v2155 = vpop.f32.mrb[0].mxu0
        %v2156 = vadd.f32 %v1831, %v2155
        %v2157 = vpop.f32.mrb[0].mxu0
        %2158 = vdwg.mxu0
        %v2159 = vmax.f32 %v2001, 0.0
        %v2160 = vmax.f32 %v2006, 0.0
        %v2161 = vmax.f32 %v2011, 0.0
        %v2162 = vmax.f32 %v2016, 0.0
        %v2163 = vmax.f32 %v2021, 0.0
        %v2164 = vmax.f32 %v2026, 0.0
        %v2165 = vmax.f32 %v2031, 0.0
        %v2166 = vmax.f32 %v2036, 0.0
        %v2167 = vmax.f32 %v2041, 0.0
        %v2168 = vmax.f32 %v2046, 0.0
        %v2169 = vmax.f32 %v2051, 0.0
        %v2170 = vmax.f32 %v2056, 0.0
        %v2171 = vmax.f32 %v2061, 0.0
        %v2172 = vmax.f32 %v2066, 0.0
        %v2173 = vmax.f32 %v2071, 0.0
        %v2174 = vmax.f32 %v2076, 0.0
        %v2175 = vmax.f32 %v2081, 0.0
        %v2176 = vmax.f32 %v2086, 0.0
        %v2177 = vmax.f32 %v2091, 0.0
        %v2178 = vmax.f32 %v2096, 0.0
        %v2179 = vmax.f32 %v2101, 0.0
        %v2180 = vmax.f32 %v2106, 0.0
        %v2181 = vmax.f32 %v2111, 0.0
        %v2182 = vmax.f32 %v2116, 0.0
        %v2183 = vmax.f32 %v2121, 0.0
        %v2184 = vmax.f32 %v2126, 0.0
        %v2185 = vmax.f32 %v2131, 0.0
        %v2186 = vmax.f32 %v2136, 0.0
        %v2187 = vmax.f32 %v2141, 0.0
        %v2188 = vmax.f32 %v2146, 0.0
        %v2189 = vmax.f32 %v2151, 0.0
        %v2190 = vmax.f32 %v2156, 0.0
        %v2223 = vcombine.high %v2159, %v2159
        %v2225 = vunpack.c.l.s4 1983009808
        %v2226 = vunpack.c.0.s8 %v2225
        %v2227 = vlaneseq
        %v2228 = vshrl.u32 %v2227, 7
        %v2229 = vsub.s32 %v2226, %v2228
        %v2230 = vrot.slane %v2159, %v2229
        %v2232 = vunpack.c.l.s4 1983009808
        %v2233 = vunpack.c.0.s8 %v2232
        %v2234 = vlaneseq
        %v2235 = vshrl.u32 %v2234, 7
        %v2236 = vsub.s32 %v2233, %v2235
        %v2237 = vrot.slane %v2223, %v2236
        %v2238 = vcombine.high %v2230, %v2230
        %v2239 = vcombine.high %v2237, %v2237
        %v2240 = vcombine.high %v2160, %v2160
        %v2242 = vunpack.c.l.s4 1983009808
        %v2243 = vunpack.c.0.s8 %v2242
        %v2244 = vlaneseq
        %v2245 = vshrl.u32 %v2244, 7
        %v2246 = vsub.s32 %v2243, %v2245
        %v2247 = vrot.slane %v2160, %v2246
        %v2249 = vunpack.c.l.s4 1983009808
        %v2250 = vunpack.c.0.s8 %v2249
        %v2251 = vlaneseq
        %v2252 = vshrl.u32 %v2251, 7
        %v2253 = vsub.s32 %v2250, %v2252
        %v2254 = vrot.slane %v2240, %v2253
        %v2255 = vcombine.high %v2247, %v2247
        %v2256 = vcombine.high %v2254, %v2254
        %v2257 = vcombine.high %v2161, %v2161
        %v2259 = vunpack.c.l.s4 1983009808
        %v2260 = vunpack.c.0.s8 %v2259
        %v2261 = vlaneseq
        %v2262 = vshrl.u32 %v2261, 7
        %v2263 = vsub.s32 %v2260, %v2262
        %v2264 = vrot.slane %v2161, %v2263
        %v2266 = vunpack.c.l.s4 1983009808
        %v2267 = vunpack.c.0.s8 %v2266
        %v2268 = vlaneseq
        %v2269 = vshrl.u32 %v2268, 7
        %v2270 = vsub.s32 %v2267, %v2269
        %v2271 = vrot.slane %v2257, %v2270
        %v2272 = vcombine.high %v2264, %v2264
        %v2273 = vcombine.high %v2271, %v2271
        %v2274 = vcombine.high %v2162, %v2162
        %v2276 = vunpack.c.l.s4 1983009808
        %v2277 = vunpack.c.0.s8 %v2276
        %v2278 = vlaneseq
        %v2279 = vshrl.u32 %v2278, 7
        %v2280 = vsub.s32 %v2277, %v2279
        %v2281 = vrot.slane %v2162, %v2280
        %v2283 = vunpack.c.l.s4 1983009808
        %v2284 = vunpack.c.0.s8 %v2283
        %v2285 = vlaneseq
        %v2286 = vshrl.u32 %v2285, 7
        %v2287 = vsub.s32 %v2284, %v2286
        %v2288 = vrot.slane %v2274, %v2287
        %v2289 = vcombine.high %v2281, %v2281
        %v2290 = vcombine.high %v2288, %v2288
        %v2291 = vcombine.high %v2163, %v2163
        %v2293 = vunpack.c.l.s4 1983009808
        %v2294 = vunpack.c.0.s8 %v2293
        %v2295 = vlaneseq
        %v2296 = vshrl.u32 %v2295, 7
        %v2297 = vsub.s32 %v2294, %v2296
        %v2298 = vrot.slane %v2163, %v2297
        %v2300 = vunpack.c.l.s4 1983009808
        %v2301 = vunpack.c.0.s8 %v2300
        %v2302 = vlaneseq
        %v2303 = vshrl.u32 %v2302, 7
        %v2304 = vsub.s32 %v2301, %v2303
        %v2305 = vrot.slane %v2291, %v2304
        %v2306 = vcombine.high %v2298, %v2298
        %v2307 = vcombine.high %v2305, %v2305
        %v2308 = vcombine.high %v2164, %v2164
        %v2310 = vunpack.c.l.s4 1983009808
        %v2311 = vunpack.c.0.s8 %v2310
        %v2312 = vlaneseq
        %v2313 = vshrl.u32 %v2312, 7
        %v2314 = vsub.s32 %v2311, %v2313
        %v2315 = vrot.slane %v2164, %v2314
        %v2317 = vunpack.c.l.s4 1983009808
        %v2318 = vunpack.c.0.s8 %v2317
        %v2319 = vlaneseq
        %v2320 = vshrl.u32 %v2319, 7
        %v2321 = vsub.s32 %v2318, %v2320
        %v2322 = vrot.slane %v2308, %v2321
        %v2323 = vcombine.high %v2315, %v2315
        %v2324 = vcombine.high %v2322, %v2322
        %v2325 = vcombine.high %v2165, %v2165
        %v2327 = vunpack.c.l.s4 1983009808
        %v2328 = vunpack.c.0.s8 %v2327
        %v2329 = vlaneseq
        %v2330 = vshrl.u32 %v2329, 7
        %v2331 = vsub.s32 %v2328, %v2330
        %v2332 = vrot.slane %v2165, %v2331
        %v2334 = vunpack.c.l.s4 1983009808
        %v2335 = vunpack.c.0.s8 %v2334
        %v2336 = vlaneseq
        %v2337 = vshrl.u32 %v2336, 7
        %v2338 = vsub.s32 %v2335, %v2337
        %v2339 = vrot.slane %v2325, %v2338
        %v2340 = vcombine.high %v2332, %v2332
        %v2341 = vcombine.high %v2339, %v2339
        %v2342 = vcombine.high %v2166, %v2166
        %v2344 = vunpack.c.l.s4 1983009808
        %v2345 = vunpack.c.0.s8 %v2344
        %v2346 = vlaneseq
        %v2347 = vshrl.u32 %v2346, 7
        %v2348 = vsub.s32 %v2345, %v2347
        %v2349 = vrot.slane %v2166, %v2348
        %v2351 = vunpack.c.l.s4 1983009808
        %v2352 = vunpack.c.0.s8 %v2351
        %v2353 = vlaneseq
        %v2354 = vshrl.u32 %v2353, 7
        %v2355 = vsub.s32 %v2352, %v2354
        %v2356 = vrot.slane %v2342, %v2355
        %v2357 = vcombine.high %v2349, %v2349
        %v2358 = vcombine.high %v2356, %v2356
        %v2359 = vcombine.high %v2167, %v2167
        %v2361 = vunpack.c.l.s4 1983009808
        %v2362 = vunpack.c.0.s8 %v2361
        %v2363 = vlaneseq
        %v2364 = vshrl.u32 %v2363, 7
        %v2365 = vsub.s32 %v2362, %v2364
        %v2366 = vrot.slane %v2167, %v2365
        %v2368 = vunpack.c.l.s4 1983009808
        %v2369 = vunpack.c.0.s8 %v2368
        %v2370 = vlaneseq
        %v2371 = vshrl.u32 %v2370, 7
        %v2372 = vsub.s32 %v2369, %v2371
        %v2373 = vrot.slane %v2359, %v2372
        %v2374 = vcombine.high %v2366, %v2366
        %v2375 = vcombine.high %v2373, %v2373
        %v2376 = vcombine.high %v2168, %v2168
        %v2378 = vunpack.c.l.s4 1983009808
        %v2379 = vunpack.c.0.s8 %v2378
        %v2380 = vlaneseq
        %v2381 = vshrl.u32 %v2380, 7
        %v2382 = vsub.s32 %v2379, %v2381
        %v2383 = vrot.slane %v2168, %v2382
        %v2385 = vunpack.c.l.s4 1983009808
        %v2386 = vunpack.c.0.s8 %v2385
        %v2387 = vlaneseq
        %v2388 = vshrl.u32 %v2387, 7
        %v2389 = vsub.s32 %v2386, %v2388
        %v2390 = vrot.slane %v2376, %v2389
        %v2391 = vcombine.high %v2383, %v2383
        %v2392 = vcombine.high %v2390, %v2390
        %v2393 = vcombine.high %v2169, %v2169
        %v2395 = vunpack.c.l.s4 1983009808
        %v2396 = vunpack.c.0.s8 %v2395
        %v2397 = vlaneseq
        %v2398 = vshrl.u32 %v2397, 7
        %v2399 = vsub.s32 %v2396, %v2398
        %v2400 = vrot.slane %v2169, %v2399
        %v2402 = vunpack.c.l.s4 1983009808
        %v2403 = vunpack.c.0.s8 %v2402
        %v2404 = vlaneseq
        %v2405 = vshrl.u32 %v2404, 7
        %v2406 = vsub.s32 %v2403, %v2405
        %v2407 = vrot.slane %v2393, %v2406
        %v2408 = vcombine.high %v2400, %v2400
        %v2409 = vcombine.high %v2407, %v2407
        %v2410 = vcombine.high %v2170, %v2170
        %v2412 = vunpack.c.l.s4 1983009808
        %v2413 = vunpack.c.0.s8 %v2412
        %v2414 = vlaneseq
        %v2415 = vshrl.u32 %v2414, 7
        %v2416 = vsub.s32 %v2413, %v2415
        %v2417 = vrot.slane %v2170, %v2416
        %v2419 = vunpack.c.l.s4 1983009808
        %v2420 = vunpack.c.0.s8 %v2419
        %v2421 = vlaneseq
        %v2422 = vshrl.u32 %v2421, 7
        %v2423 = vsub.s32 %v2420, %v2422
        %v2424 = vrot.slane %v2410, %v2423
        %v2425 = vcombine.high %v2417, %v2417
        %v2426 = vcombine.high %v2424, %v2424
        %v2427 = vcombine.high %v2171, %v2171
        %v2429 = vunpack.c.l.s4 1983009808
        %v2430 = vunpack.c.0.s8 %v2429
        %v2431 = vlaneseq
        %v2432 = vshrl.u32 %v2431, 7
        %v2433 = vsub.s32 %v2430, %v2432
        %v2434 = vrot.slane %v2171, %v2433
        %v2436 = vunpack.c.l.s4 1983009808
        %v2437 = vunpack.c.0.s8 %v2436
        %v2438 = vlaneseq
        %v2439 = vshrl.u32 %v2438, 7
        %v2440 = vsub.s32 %v2437, %v2439
        %v2441 = vrot.slane %v2427, %v2440
        %v2442 = vcombine.high %v2434, %v2434
        %v2443 = vcombine.high %v2441, %v2441
        %v2444 = vcombine.high %v2172, %v2172
        %v2446 = vunpack.c.l.s4 1983009808
        %v2447 = vunpack.c.0.s8 %v2446
        %v2448 = vlaneseq
        %v2449 = vshrl.u32 %v2448, 7
        %v2450 = vsub.s32 %v2447, %v2449
        %v2451 = vrot.slane %v2172, %v2450
        %v2453 = vunpack.c.l.s4 1983009808
        %v2454 = vunpack.c.0.s8 %v2453
        %v2455 = vlaneseq
        %v2456 = vshrl.u32 %v2455, 7
        %v2457 = vsub.s32 %v2454, %v2456
        %v2458 = vrot.slane %v2444, %v2457
        %v2459 = vcombine.high %v2451, %v2451
        %v2460 = vcombine.high %v2458, %v2458
        %v2461 = vcombine.high %v2173, %v2173
        %v2463 = vunpack.c.l.s4 1983009808
        %v2464 = vunpack.c.0.s8 %v2463
        %v2465 = vlaneseq
        %v2466 = vshrl.u32 %v2465, 7
        %v2467 = vsub.s32 %v2464, %v2466
        %v2468 = vrot.slane %v2173, %v2467
        %v2470 = vunpack.c.l.s4 1983009808
        %v2471 = vunpack.c.0.s8 %v2470
        %v2472 = vlaneseq
        %v2473 = vshrl.u32 %v2472, 7
        %v2474 = vsub.s32 %v2471, %v2473
        %v2475 = vrot.slane %v2461, %v2474
        %v2476 = vcombine.high %v2468, %v2468
        %v2477 = vcombine.high %v2475, %v2475
        %v2478 = vcombine.high %v2174, %v2174
        %v2480 = vunpack.c.l.s4 1983009808
        %v2481 = vunpack.c.0.s8 %v2480
        %v2482 = vlaneseq
        %v2483 = vshrl.u32 %v2482, 7
        %v2484 = vsub.s32 %v2481, %v2483
        %v2485 = vrot.slane %v2174, %v2484
        %v2487 = vunpack.c.l.s4 1983009808
        %v2488 = vunpack.c.0.s8 %v2487
        %v2489 = vlaneseq
        %v2490 = vshrl.u32 %v2489, 7
        %v2491 = vsub.s32 %v2488, %v2490
        %v2492 = vrot.slane %v2478, %v2491
        %v2493 = vcombine.high %v2485, %v2485
        %v2494 = vcombine.high %v2492, %v2492
        %v2495 = vcombine.high %v2175, %v2175
        %v2497 = vunpack.c.l.s4 1983009808
        %v2498 = vunpack.c.0.s8 %v2497
        %v2499 = vlaneseq
        %v2500 = vshrl.u32 %v2499, 7
        %v2501 = vsub.s32 %v2498, %v2500
        %v2502 = vrot.slane %v2175, %v2501
        %v2504 = vunpack.c.l.s4 1983009808
        %v2505 = vunpack.c.0.s8 %v2504
        %v2506 = vlaneseq
        %v2507 = vshrl.u32 %v2506, 7
        %v2508 = vsub.s32 %v2505, %v2507
        %v2509 = vrot.slane %v2495, %v2508
        %v2510 = vcombine.high %v2502, %v2502
        %v2511 = vcombine.high %v2509, %v2509
        %v2512 = vcombine.high %v2176, %v2176
        %v2514 = vunpack.c.l.s4 1983009808
        %v2515 = vunpack.c.0.s8 %v2514
        %v2516 = vlaneseq
        %v2517 = vshrl.u32 %v2516, 7
        %v2518 = vsub.s32 %v2515, %v2517
        %v2519 = vrot.slane %v2176, %v2518
        %v2521 = vunpack.c.l.s4 1983009808
        %v2522 = vunpack.c.0.s8 %v2521
        %v2523 = vlaneseq
        %v2524 = vshrl.u32 %v2523, 7
        %v2525 = vsub.s32 %v2522, %v2524
        %v2526 = vrot.slane %v2512, %v2525
        %v2527 = vcombine.high %v2519, %v2519
        %v2528 = vcombine.high %v2526, %v2526
        %v2529 = vcombine.high %v2177, %v2177
        %v2531 = vunpack.c.l.s4 1983009808
        %v2532 = vunpack.c.0.s8 %v2531
        %v2533 = vlaneseq
        %v2534 = vshrl.u32 %v2533, 7
        %v2535 = vsub.s32 %v2532, %v2534
        %v2536 = vrot.slane %v2177, %v2535
        %v2538 = vunpack.c.l.s4 1983009808
        %v2539 = vunpack.c.0.s8 %v2538
        %v2540 = vlaneseq
        %v2541 = vshrl.u32 %v2540, 7
        %v2542 = vsub.s32 %v2539, %v2541
        %v2543 = vrot.slane %v2529, %v2542
        %v2544 = vcombine.high %v2536, %v2536
        %v2545 = vcombine.high %v2543, %v2543
        %v2546 = vcombine.high %v2178, %v2178
        %v2548 = vunpack.c.l.s4 1983009808
        %v2549 = vunpack.c.0.s8 %v2548
        %v2550 = vlaneseq
        %v2551 = vshrl.u32 %v2550, 7
        %v2552 = vsub.s32 %v2549, %v2551
        %v2553 = vrot.slane %v2178, %v2552
        %v2555 = vunpack.c.l.s4 1983009808
        %v2556 = vunpack.c.0.s8 %v2555
        %v2557 = vlaneseq
        %v2558 = vshrl.u32 %v2557, 7
        %v2559 = vsub.s32 %v2556, %v2558
        %v2560 = vrot.slane %v2546, %v2559
        %v2561 = vcombine.high %v2553, %v2553
        %v2562 = vcombine.high %v2560, %v2560
        %v2563 = vcombine.high %v2179, %v2179
        %v2565 = vunpack.c.l.s4 1983009808
        %v2566 = vunpack.c.0.s8 %v2565
        %v2567 = vlaneseq
        %v2568 = vshrl.u32 %v2567, 7
        %v2569 = vsub.s32 %v2566, %v2568
        %v2570 = vrot.slane %v2179, %v2569
        %v2572 = vunpack.c.l.s4 1983009808
        %v2573 = vunpack.c.0.s8 %v2572
        %v2574 = vlaneseq
        %v2575 = vshrl.u32 %v2574, 7
        %v2576 = vsub.s32 %v2573, %v2575
        %v2577 = vrot.slane %v2563, %v2576
        %v2578 = vcombine.high %v2570, %v2570
        %v2579 = vcombine.high %v2577, %v2577
        %v2580 = vcombine.high %v2180, %v2180
        %v2582 = vunpack.c.l.s4 1983009808
        %v2583 = vunpack.c.0.s8 %v2582
        %v2584 = vlaneseq
        %v2585 = vshrl.u32 %v2584, 7
        %v2586 = vsub.s32 %v2583, %v2585
        %v2587 = vrot.slane %v2180, %v2586
        %v2589 = vunpack.c.l.s4 1983009808
        %v2590 = vunpack.c.0.s8 %v2589
        %v2591 = vlaneseq
        %v2592 = vshrl.u32 %v2591, 7
        %v2593 = vsub.s32 %v2590, %v2592
        %v2594 = vrot.slane %v2580, %v2593
        %v2595 = vcombine.high %v2587, %v2587
        %v2596 = vcombine.high %v2594, %v2594
        %v2597 = vcombine.high %v2181, %v2181
        %v2599 = vunpack.c.l.s4 1983009808
        %v2600 = vunpack.c.0.s8 %v2599
        %v2601 = vlaneseq
        %v2602 = vshrl.u32 %v2601, 7
        %v2603 = vsub.s32 %v2600, %v2602
        %v2604 = vrot.slane %v2181, %v2603
        %v2606 = vunpack.c.l.s4 1983009808
        %v2607 = vunpack.c.0.s8 %v2606
        %v2608 = vlaneseq
        %v2609 = vshrl.u32 %v2608, 7
        %v2610 = vsub.s32 %v2607, %v2609
        %v2611 = vrot.slane %v2597, %v2610
        %v2612 = vcombine.high %v2604, %v2604
        %v2613 = vcombine.high %v2611, %v2611
        %v2614 = vcombine.high %v2182, %v2182
        %v2616 = vunpack.c.l.s4 1983009808
        %v2617 = vunpack.c.0.s8 %v2616
        %v2618 = vlaneseq
        %v2619 = vshrl.u32 %v2618, 7
        %v2620 = vsub.s32 %v2617, %v2619
        %v2621 = vrot.slane %v2182, %v2620
        %v2623 = vunpack.c.l.s4 1983009808
        %v2624 = vunpack.c.0.s8 %v2623
        %v2625 = vlaneseq
        %v2626 = vshrl.u32 %v2625, 7
        %v2627 = vsub.s32 %v2624, %v2626
        %v2628 = vrot.slane %v2614, %v2627
        %v2629 = vcombine.high %v2621, %v2621
        %v2630 = vcombine.high %v2628, %v2628
        %v2631 = vcombine.high %v2183, %v2183
        %v2633 = vunpack.c.l.s4 1983009808
        %v2634 = vunpack.c.0.s8 %v2633
        %v2635 = vlaneseq
        %v2636 = vshrl.u32 %v2635, 7
        %v2637 = vsub.s32 %v2634, %v2636
        %v2638 = vrot.slane %v2183, %v2637
        %v2640 = vunpack.c.l.s4 1983009808
        %v2641 = vunpack.c.0.s8 %v2640
        %v2642 = vlaneseq
        %v2643 = vshrl.u32 %v2642, 7
        %v2644 = vsub.s32 %v2641, %v2643
        %v2645 = vrot.slane %v2631, %v2644
        %v2646 = vcombine.high %v2638, %v2638
        %v2647 = vcombine.high %v2645, %v2645
        %v2648 = vcombine.high %v2184, %v2184
        %v2650 = vunpack.c.l.s4 1983009808
        %v2651 = vunpack.c.0.s8 %v2650
        %v2652 = vlaneseq
        %v2653 = vshrl.u32 %v2652, 7
        %v2654 = vsub.s32 %v2651, %v2653
        %v2655 = vrot.slane %v2184, %v2654
        %v2657 = vunpack.c.l.s4 1983009808
        %v2658 = vunpack.c.0.s8 %v2657
        %v2659 = vlaneseq
        %v2660 = vshrl.u32 %v2659, 7
        %v2661 = vsub.s32 %v2658, %v2660
        %v2662 = vrot.slane %v2648, %v2661
        %v2663 = vcombine.high %v2655, %v2655
        %v2664 = vcombine.high %v2662, %v2662
        %v2665 = vcombine.high %v2185, %v2185
        %v2667 = vunpack.c.l.s4 1983009808
        %v2668 = vunpack.c.0.s8 %v2667
        %v2669 = vlaneseq
        %v2670 = vshrl.u32 %v2669, 7
        %v2671 = vsub.s32 %v2668, %v2670
        %v2672 = vrot.slane %v2185, %v2671
        %v2674 = vunpack.c.l.s4 1983009808
        %v2675 = vunpack.c.0.s8 %v2674
        %v2676 = vlaneseq
        %v2677 = vshrl.u32 %v2676, 7
        %v2678 = vsub.s32 %v2675, %v2677
        %v2679 = vrot.slane %v2665, %v2678
        %v2680 = vcombine.high %v2672, %v2672
        %v2681 = vcombine.high %v2679, %v2679
        %v2682 = vcombine.high %v2186, %v2186
        %v2684 = vunpack.c.l.s4 1983009808
        %v2685 = vunpack.c.0.s8 %v2684
        %v2686 = vlaneseq
        %v2687 = vshrl.u32 %v2686, 7
        %v2688 = vsub.s32 %v2685, %v2687
        %v2689 = vrot.slane %v2186, %v2688
        %v2691 = vunpack.c.l.s4 1983009808
        %v2692 = vunpack.c.0.s8 %v2691
        %v2693 = vlaneseq
        %v2694 = vshrl.u32 %v2693, 7
        %v2695 = vsub.s32 %v2692, %v2694
        %v2696 = vrot.slane %v2682, %v2695
        %v2697 = vcombine.high %v2689, %v2689
        %v2698 = vcombine.high %v2696, %v2696
        %v2699 = vcombine.high %v2187, %v2187
        %v2701 = vunpack.c.l.s4 1983009808
        %v2702 = vunpack.c.0.s8 %v2701
        %v2703 = vlaneseq
        %v2704 = vshrl.u32 %v2703, 7
        %v2705 = vsub.s32 %v2702, %v2704
        %v2706 = vrot.slane %v2187, %v2705
        %v2708 = vunpack.c.l.s4 1983009808
        %v2709 = vunpack.c.0.s8 %v2708
        %v2710 = vlaneseq
        %v2711 = vshrl.u32 %v2710, 7
        %v2712 = vsub.s32 %v2709, %v2711
        %v2713 = vrot.slane %v2699, %v2712
        %v2714 = vcombine.high %v2706, %v2706
        %v2715 = vcombine.high %v2713, %v2713
        %v2716 = vcombine.high %v2188, %v2188
        %v2718 = vunpack.c.l.s4 1983009808
        %v2719 = vunpack.c.0.s8 %v2718
        %v2720 = vlaneseq
        %v2721 = vshrl.u32 %v2720, 7
        %v2722 = vsub.s32 %v2719, %v2721
        %v2723 = vrot.slane %v2188, %v2722
        %v2725 = vunpack.c.l.s4 1983009808
        %v2726 = vunpack.c.0.s8 %v2725
        %v2727 = vlaneseq
        %v2728 = vshrl.u32 %v2727, 7
        %v2729 = vsub.s32 %v2726, %v2728
        %v2730 = vrot.slane %v2716, %v2729
        %v2731 = vcombine.high %v2723, %v2723
        %v2732 = vcombine.high %v2730, %v2730
        %v2733 = vcombine.high %v2189, %v2189
        %v2735 = vunpack.c.l.s4 1983009808
        %v2736 = vunpack.c.0.s8 %v2735
        %v2737 = vlaneseq
        %v2738 = vshrl.u32 %v2737, 7
        %v2739 = vsub.s32 %v2736, %v2738
        %v2740 = vrot.slane %v2189, %v2739
        %v2742 = vunpack.c.l.s4 1983009808
        %v2743 = vunpack.c.0.s8 %v2742
        %v2744 = vlaneseq
        %v2745 = vshrl.u32 %v2744, 7
        %v2746 = vsub.s32 %v2743, %v2745
        %v2747 = vrot.slane %v2733, %v2746
        %v2748 = vcombine.high %v2740, %v2740
        %v2749 = vcombine.high %v2747, %v2747
        %v2750 = vcombine.high %v2190, %v2190
        %v2752 = vunpack.c.l.s4 1983009808
        %v2753 = vunpack.c.0.s8 %v2752
        %v2754 = vlaneseq
        %v2755 = vshrl.u32 %v2754, 7
        %v2756 = vsub.s32 %v2753, %v2755
        %v2757 = vrot.slane %v2190, %v2756
        %v2759 = vunpack.c.l.s4 1983009808
        %v2760 = vunpack.c.0.s8 %v2759
        %v2761 = vlaneseq
        %v2762 = vshrl.u32 %v2761, 7
        %v2763 = vsub.s32 %v2760, %v2762
        %v2764 = vrot.slane %v2750, %v2763
        %v2765 = vcombine.high %v2757, %v2757
        %v2766 = vcombine.high %v2764, %v2764
        %v2895 = vrot.slane %v2230, 7
        %v2896 = vrot.slane %v2895, 2
        %v2897 = vrot.slane %v2238, 7
        %v2898 = vrot.slane %v2897, 2
        %v2899 = vrot.slane %v2237, 7
        %v2900 = vrot.slane %v2899, 2
        %v2901 = vrot.slane %v2239, 7
        %v2902 = vrot.slane %v2901, 2
        %v2903 = vrot.slane %v2247, 7
        %v2904 = vrot.slane %v2903, 2
        %v2905 = vrot.slane %v2255, 7
        %v2906 = vrot.slane %v2905, 2
        %v2907 = vrot.slane %v2254, 7
        %v2908 = vrot.slane %v2907, 2
        %v2909 = vrot.slane %v2256, 7
        %v2910 = vrot.slane %v2909, 2
        %v2911 = vrot.slane %v2264, 7
        %v2912 = vrot.slane %v2911, 2
        %v2913 = vrot.slane %v2272, 7
        %v2914 = vrot.slane %v2913, 2
        %v2915 = vrot.slane %v2271, 7
        %v2916 = vrot.slane %v2915, 2
        %v2917 = vrot.slane %v2273, 7
        %v2918 = vrot.slane %v2917, 2
        %v2919 = vrot.slane %v2281, 7
        %v2920 = vrot.slane %v2919, 2
        %v2921 = vrot.slane %v2289, 7
        %v2922 = vrot.slane %v2921, 2
        %v2923 = vrot.slane %v2288, 7
        %v2924 = vrot.slane %v2923, 2
        %v2925 = vrot.slane %v2290, 7
        %v2926 = vrot.slane %v2925, 2
        %v2927 = vrot.slane %v2298, 7
        %v2928 = vrot.slane %v2927, 2
        %v2929 = vrot.slane %v2306, 7
        %v2930 = vrot.slane %v2929, 2
        %v2931 = vrot.slane %v2305, 7
        %v2932 = vrot.slane %v2931, 2
        %v2933 = vrot.slane %v2307, 7
        %v2934 = vrot.slane %v2933, 2
        %v2935 = vrot.slane %v2315, 7
        %v2936 = vrot.slane %v2935, 2
        %v2937 = vrot.slane %v2323, 7
        %v2938 = vrot.slane %v2937, 2
        %v2939 = vrot.slane %v2322, 7
        %v2940 = vrot.slane %v2939, 2
        %v2941 = vrot.slane %v2324, 7
        %v2942 = vrot.slane %v2941, 2
        %v2943 = vrot.slane %v2332, 7
        %v2944 = vrot.slane %v2943, 2
        %v2945 = vrot.slane %v2340, 7
        %v2946 = vrot.slane %v2945, 2
        %v2947 = vrot.slane %v2339, 7
        %v2948 = vrot.slane %v2947, 2
        %v2949 = vrot.slane %v2341, 7
        %v2950 = vrot.slane %v2949, 2
        %v2951 = vrot.slane %v2349, 7
        %v2952 = vrot.slane %v2951, 2
        %v2953 = vrot.slane %v2357, 7
        %v2954 = vrot.slane %v2953, 2
        %v2955 = vrot.slane %v2356, 7
        %v2956 = vrot.slane %v2955, 2
        %v2957 = vrot.slane %v2358, 7
        %v2958 = vrot.slane %v2957, 2
        %v2959 = vrot.slane %v2366, 7
        %v2960 = vrot.slane %v2959, 2
        %v2961 = vrot.slane %v2374, 7
        %v2962 = vrot.slane %v2961, 2
        %v2963 = vrot.slane %v2373, 7
        %v2964 = vrot.slane %v2963, 2
        %v2965 = vrot.slane %v2375, 7
        %v2966 = vrot.slane %v2965, 2
        %v2967 = vrot.slane %v2383, 7
        %v2968 = vrot.slane %v2967, 2
        %v2969 = vrot.slane %v2391, 7
        %v2970 = vrot.slane %v2969, 2
        %v2971 = vrot.slane %v2390, 7
        %v2972 = vrot.slane %v2971, 2
        %v2973 = vrot.slane %v2392, 7
        %v2974 = vrot.slane %v2973, 2
        %v2975 = vrot.slane %v2400, 7
        %v2976 = vrot.slane %v2975, 2
        %v2977 = vrot.slane %v2408, 7
        %v2978 = vrot.slane %v2977, 2
        %v2979 = vrot.slane %v2407, 7
        %v2980 = vrot.slane %v2979, 2
        %v2981 = vrot.slane %v2409, 7
        %v2982 = vrot.slane %v2981, 2
        %v2983 = vrot.slane %v2417, 7
        %v2984 = vrot.slane %v2983, 2
        %v2985 = vrot.slane %v2425, 7
        %v2986 = vrot.slane %v2985, 2
        %v2987 = vrot.slane %v2424, 7
        %v2988 = vrot.slane %v2987, 2
        %v2989 = vrot.slane %v2426, 7
        %v2990 = vrot.slane %v2989, 2
        %v2991 = vrot.slane %v2434, 7
        %v2992 = vrot.slane %v2991, 2
        %v2993 = vrot.slane %v2442, 7
        %v2994 = vrot.slane %v2993, 2
        %v2995 = vrot.slane %v2441, 7
        %v2996 = vrot.slane %v2995, 2
        %v2997 = vrot.slane %v2443, 7
        %v2998 = vrot.slane %v2997, 2
        %v2999 = vrot.slane %v2451, 7
        %v3000 = vrot.slane %v2999, 2
        %v3001 = vrot.slane %v2459, 7
        %v3002 = vrot.slane %v3001, 2
        %v3003 = vrot.slane %v2458, 7
        %v3004 = vrot.slane %v3003, 2
        %v3005 = vrot.slane %v2460, 7
        %v3006 = vrot.slane %v3005, 2
        %v3007 = vrot.slane %v2468, 7
        %v3008 = vrot.slane %v3007, 2
        %v3009 = vrot.slane %v2476, 7
        %v3010 = vrot.slane %v3009, 2
        %v3011 = vrot.slane %v2475, 7
        %v3012 = vrot.slane %v3011, 2
        %v3013 = vrot.slane %v2477, 7
        %v3014 = vrot.slane %v3013, 2
        %v3015 = vrot.slane %v2485, 7
        %v3016 = vrot.slane %v3015, 2
        %v3017 = vrot.slane %v2493, 7
        %v3018 = vrot.slane %v3017, 2
        %v3019 = vrot.slane %v2492, 7
        %v3020 = vrot.slane %v3019, 2
        %v3021 = vrot.slane %v2494, 7
        %v3022 = vrot.slane %v3021, 2
        %v3023 = vrot.slane %v2502, 7
        %v3024 = vrot.slane %v3023, 2
        %v3025 = vrot.slane %v2510, 7
        %v3026 = vrot.slane %v3025, 2
        %v3027 = vrot.slane %v2509, 7
        %v3028 = vrot.slane %v3027, 2
        %v3029 = vrot.slane %v2511, 7
        %v3030 = vrot.slane %v3029, 2
        %v3031 = vrot.slane %v2519, 7
        %v3032 = vrot.slane %v3031, 2
        %v3033 = vrot.slane %v2527, 7
        %v3034 = vrot.slane %v3033, 2
        %v3035 = vrot.slane %v2526, 7
        %v3036 = vrot.slane %v3035, 2
        %v3037 = vrot.slane %v2528, 7
        %v3038 = vrot.slane %v3037, 2
        %v3039 = vrot.slane %v2536, 7
        %v3040 = vrot.slane %v3039, 2
        %v3041 = vrot.slane %v2544, 7
        %v3042 = vrot.slane %v3041, 2
        %v3043 = vrot.slane %v2543, 7
        %v3044 = vrot.slane %v3043, 2
        %v3045 = vrot.slane %v2545, 7
        %v3046 = vrot.slane %v3045, 2
        %v3047 = vrot.slane %v2553, 7
        %v3048 = vrot.slane %v3047, 2
        %v3049 = vrot.slane %v2561, 7
        %v3050 = vrot.slane %v3049, 2
        %v3051 = vrot.slane %v2560, 7
        %v3052 = vrot.slane %v3051, 2
        %v3053 = vrot.slane %v2562, 7
        %v3054 = vrot.slane %v3053, 2
        %v3055 = vrot.slane %v2570, 7
        %v3056 = vrot.slane %v3055, 2
        %v3057 = vrot.slane %v2578, 7
        %v3058 = vrot.slane %v3057, 2
        %v3059 = vrot.slane %v2577, 7
        %v3060 = vrot.slane %v3059, 2
        %v3061 = vrot.slane %v2579, 7
        %v3062 = vrot.slane %v3061, 2
        %v3063 = vrot.slane %v2587, 7
        %v3064 = vrot.slane %v3063, 2
        %v3065 = vrot.slane %v2595, 7
        %v3066 = vrot.slane %v3065, 2
        %v3067 = vrot.slane %v2594, 7
        %v3068 = vrot.slane %v3067, 2
        %v3069 = vrot.slane %v2596, 7
        %v3070 = vrot.slane %v3069, 2
        %v3071 = vrot.slane %v2604, 7
        %v3072 = vrot.slane %v3071, 2
        %v3073 = vrot.slane %v2612, 7
        %v3074 = vrot.slane %v3073, 2
        %v3075 = vrot.slane %v2611, 7
        %v3076 = vrot.slane %v3075, 2
        %v3077 = vrot.slane %v2613, 7
        %v3078 = vrot.slane %v3077, 2
        %v3079 = vrot.slane %v2621, 7
        %v3080 = vrot.slane %v3079, 2
        %v3081 = vrot.slane %v2629, 7
        %v3082 = vrot.slane %v3081, 2
        %v3083 = vrot.slane %v2628, 7
        %v3084 = vrot.slane %v3083, 2
        %v3085 = vrot.slane %v2630, 7
        %v3086 = vrot.slane %v3085, 2
        %v3087 = vrot.slane %v2638, 7
        %v3088 = vrot.slane %v3087, 2
        %v3089 = vrot.slane %v2646, 7
        %v3090 = vrot.slane %v3089, 2
        %v3091 = vrot.slane %v2645, 7
        %v3092 = vrot.slane %v3091, 2
        %v3093 = vrot.slane %v2647, 7
        %v3094 = vrot.slane %v3093, 2
        %v3095 = vrot.slane %v2655, 7
        %v3096 = vrot.slane %v3095, 2
        %v3097 = vrot.slane %v2663, 7
        %v3098 = vrot.slane %v3097, 2
        %v3099 = vrot.slane %v2662, 7
        %v3100 = vrot.slane %v3099, 2
        %v3101 = vrot.slane %v2664, 7
        %v3102 = vrot.slane %v3101, 2
        %v3103 = vrot.slane %v2672, 7
        %v3104 = vrot.slane %v3103, 2
        %v3105 = vrot.slane %v2680, 7
        %v3106 = vrot.slane %v3105, 2
        %v3107 = vrot.slane %v2679, 7
        %v3108 = vrot.slane %v3107, 2
        %v3109 = vrot.slane %v2681, 7
        %v3110 = vrot.slane %v3109, 2
        %v3111 = vrot.slane %v2689, 7
        %v3112 = vrot.slane %v3111, 2
        %v3113 = vrot.slane %v2697, 7
        %v3114 = vrot.slane %v3113, 2
        %v3115 = vrot.slane %v2696, 7
        %v3116 = vrot.slane %v3115, 2
        %v3117 = vrot.slane %v2698, 7
        %v3118 = vrot.slane %v3117, 2
        %v3119 = vrot.slane %v2706, 7
        %v3120 = vrot.slane %v3119, 2
        %v3121 = vrot.slane %v2714, 7
        %v3122 = vrot.slane %v3121, 2
        %v3123 = vrot.slane %v2713, 7
        %v3124 = vrot.slane %v3123, 2
        %v3125 = vrot.slane %v2715, 7
        %v3126 = vrot.slane %v3125, 2
        %v3127 = vrot.slane %v2723, 7
        %v3128 = vrot.slane %v3127, 2
        %v3129 = vrot.slane %v2731, 7
        %v3130 = vrot.slane %v3129, 2
        %v3131 = vrot.slane %v2730, 7
        %v3132 = vrot.slane %v3131, 2
        %v3133 = vrot.slane %v2732, 7
        %v3134 = vrot.slane %v3133, 2
        %v3135 = vrot.slane %v2740, 7
        %v3136 = vrot.slane %v3135, 2
        %v3137 = vrot.slane %v2748, 7
        %v3138 = vrot.slane %v3137, 2
        %v3139 = vrot.slane %v2747, 7
        %v3140 = vrot.slane %v3139, 2
        %v3141 = vrot.slane %v2749, 7
        %v3142 = vrot.slane %v3141, 2
        %v3143 = vrot.slane %v2757, 7
        %v3144 = vrot.slane %v3143, 2
        %v3145 = vrot.slane %v2765, 7
        %v3146 = vrot.slane %v3145, 2
        %v3147 = vrot.slane %v2764, 7
        %v3148 = vrot.slane %v3147, 2
        %v3149 = vrot.slane %v2766, 7
        %v3150 = vrot.slane %v3149, 2
        %v3279 = vmax.f32 %v2230, %v2896
        %v3280 = vmax.f32 %v2238, %v2898
        %v3281 = vmax.f32 %v2237, %v2900
        %v3282 = vmax.f32 %v2239, %v2902
        %v3283 = vmax.f32 %v2247, %v2904
        %v3284 = vmax.f32 %v2255, %v2906
        %v3285 = vmax.f32 %v2254, %v2908
        %v3286 = vmax.f32 %v2256, %v2910
        %v3287 = vmax.f32 %v2264, %v2912
        %v3288 = vmax.f32 %v2272, %v2914
        %v3289 = vmax.f32 %v2271, %v2916
        %v3290 = vmax.f32 %v2273, %v2918
        %v3291 = vmax.f32 %v2281, %v2920
        %v3292 = vmax.f32 %v2289, %v2922
        %v3293 = vmax.f32 %v2288, %v2924
        %v3294 = vmax.f32 %v2290, %v2926
        %v3295 = vmax.f32 %v2298, %v2928
        %v3296 = vmax.f32 %v2306, %v2930
        %v3297 = vmax.f32 %v2305, %v2932
        %v3298 = vmax.f32 %v2307, %v2934
        %v3299 = vmax.f32 %v2315, %v2936
        %v3300 = vmax.f32 %v2323, %v2938
        %v3301 = vmax.f32 %v2322, %v2940
        %v3302 = vmax.f32 %v2324, %v2942
        %v3303 = vmax.f32 %v2332, %v2944
        %v3304 = vmax.f32 %v2340, %v2946
        %v3305 = vmax.f32 %v2339, %v2948
        %v3306 = vmax.f32 %v2341, %v2950
        %v3307 = vmax.f32 %v2349, %v2952
        %v3308 = vmax.f32 %v2357, %v2954
        %v3309 = vmax.f32 %v2356, %v2956
        %v3310 = vmax.f32 %v2358, %v2958
        %v3311 = vmax.f32 %v2366, %v2960
        %v3312 = vmax.f32 %v2374, %v2962
        %v3313 = vmax.f32 %v2373, %v2964
        %v3314 = vmax.f32 %v2375, %v2966
        %v3315 = vmax.f32 %v2383, %v2968
        %v3316 = vmax.f32 %v2391, %v2970
        %v3317 = vmax.f32 %v2390, %v2972
        %v3318 = vmax.f32 %v2392, %v2974
        %v3319 = vmax.f32 %v2400, %v2976
        %v3320 = vmax.f32 %v2408, %v2978
        %v3321 = vmax.f32 %v2407, %v2980
        %v3322 = vmax.f32 %v2409, %v2982
        %v3323 = vmax.f32 %v2417, %v2984
        %v3324 = vmax.f32 %v2425, %v2986
        %v3325 = vmax.f32 %v2424, %v2988
        %v3326 = vmax.f32 %v2426, %v2990
        %v3327 = vmax.f32 %v2434, %v2992
        %v3328 = vmax.f32 %v2442, %v2994
        %v3329 = vmax.f32 %v2441, %v2996
        %v3330 = vmax.f32 %v2443, %v2998
        %v3331 = vmax.f32 %v2451, %v3000
        %v3332 = vmax.f32 %v2459, %v3002
        %v3333 = vmax.f32 %v2458, %v3004
        %v3334 = vmax.f32 %v2460, %v3006
        %v3335 = vmax.f32 %v2468, %v3008
        %v3336 = vmax.f32 %v2476, %v3010
        %v3337 = vmax.f32 %v2475, %v3012
        %v3338 = vmax.f32 %v2477, %v3014
        %v3339 = vmax.f32 %v2485, %v3016
        %v3340 = vmax.f32 %v2493, %v3018
        %v3341 = vmax.f32 %v2492, %v3020
        %v3342 = vmax.f32 %v2494, %v3022
        %v3343 = vmax.f32 %v2502, %v3024
        %v3344 = vmax.f32 %v2510, %v3026
        %v3345 = vmax.f32 %v2509, %v3028
        %v3346 = vmax.f32 %v2511, %v3030
        %v3347 = vmax.f32 %v2519, %v3032
        %v3348 = vmax.f32 %v2527, %v3034
        %v3349 = vmax.f32 %v2526, %v3036
        %v3350 = vmax.f32 %v2528, %v3038
        %v3351 = vmax.f32 %v2536, %v3040
        %v3352 = vmax.f32 %v2544, %v3042
        %v3353 = vmax.f32 %v2543, %v3044
        %v3354 = vmax.f32 %v2545, %v3046
        %v3355 = vmax.f32 %v2553, %v3048
        %v3356 = vmax.f32 %v2561, %v3050
        %v3357 = vmax.f32 %v2560, %v3052
        %v3358 = vmax.f32 %v2562, %v3054
        %v3359 = vmax.f32 %v2570, %v3056
        %v3360 = vmax.f32 %v2578, %v3058
        %v3361 = vmax.f32 %v2577, %v3060
        %v3362 = vmax.f32 %v2579, %v3062
        %v3363 = vmax.f32 %v2587, %v3064
        %v3364 = vmax.f32 %v2595, %v3066
        %v3365 = vmax.f32 %v2594, %v3068
        %v3366 = vmax.f32 %v2596, %v3070
        %v3367 = vmax.f32 %v2604, %v3072
        %v3368 = vmax.f32 %v2612, %v3074
        %v3369 = vmax.f32 %v2611, %v3076
        %v3370 = vmax.f32 %v2613, %v3078
        %v3371 = vmax.f32 %v2621, %v3080
        %v3372 = vmax.f32 %v2629, %v3082
        %v3373 = vmax.f32 %v2628, %v3084
        %v3374 = vmax.f32 %v2630, %v3086
        %v3375 = vmax.f32 %v2638, %v3088
        %v3376 = vmax.f32 %v2646, %v3090
        %v3377 = vmax.f32 %v2645, %v3092
        %v3378 = vmax.f32 %v2647, %v3094
        %v3379 = vmax.f32 %v2655, %v3096
        %v3380 = vmax.f32 %v2663, %v3098
        %v3381 = vmax.f32 %v2662, %v3100
        %v3382 = vmax.f32 %v2664, %v3102
        %v3383 = vmax.f32 %v2672, %v3104
        %v3384 = vmax.f32 %v2680, %v3106
        %v3385 = vmax.f32 %v2679, %v3108
        %v3386 = vmax.f32 %v2681, %v3110
        %v3387 = vmax.f32 %v2689, %v3112
        %v3388 = vmax.f32 %v2697, %v3114
        %v3389 = vmax.f32 %v2696, %v3116
        %v3390 = vmax.f32 %v2698, %v3118
        %v3391 = vmax.f32 %v2706, %v3120
        %v3392 = vmax.f32 %v2714, %v3122
        %v3393 = vmax.f32 %v2713, %v3124
        %v3394 = vmax.f32 %v2715, %v3126
        %v3395 = vmax.f32 %v2723, %v3128
        %v3396 = vmax.f32 %v2731, %v3130
        %v3397 = vmax.f32 %v2730, %v3132
        %v3398 = vmax.f32 %v2732, %v3134
        %v3399 = vmax.f32 %v2740, %v3136
        %v3400 = vmax.f32 %v2748, %v3138
        %v3401 = vmax.f32 %v2747, %v3140
        %v3402 = vmax.f32 %v2749, %v3142
        %v3403 = vmax.f32 %v2757, %v3144
        %v3404 = vmax.f32 %v2765, %v3146
        %v3405 = vmax.f32 %v2764, %v3148
        %v3406 = vmax.f32 %v2766, %v3150
        %v3407 = vmax.f32 %v3279, %v3287
        %v3408 = vmax.f32 %v3280, %v3288
        %v3409 = vmax.f32 %v3281, %v3289
        %v3410 = vmax.f32 %v3282, %v3290
        %v3411 = vmax.f32 %v3283, %v3291
        %v3412 = vmax.f32 %v3284, %v3292
        %v3413 = vmax.f32 %v3285, %v3293
        %v3414 = vmax.f32 %v3286, %v3294
        %v3415 = vmax.f32 %v3295, %v3303
        %v3416 = vmax.f32 %v3296, %v3304
        %v3417 = vmax.f32 %v3297, %v3305
        %v3418 = vmax.f32 %v3298, %v3306
        %v3419 = vmax.f32 %v3299, %v3307
        %v3420 = vmax.f32 %v3300, %v3308
        %v3421 = vmax.f32 %v3301, %v3309
        %v3422 = vmax.f32 %v3302, %v3310
        %v3423 = vmax.f32 %v3311, %v3319
        %v3424 = vmax.f32 %v3312, %v3320
        %v3425 = vmax.f32 %v3313, %v3321
        %v3426 = vmax.f32 %v3314, %v3322
        %v3427 = vmax.f32 %v3315, %v3323
        %v3428 = vmax.f32 %v3316, %v3324
        %v3429 = vmax.f32 %v3317, %v3325
        %v3430 = vmax.f32 %v3318, %v3326
        %v3431 = vmax.f32 %v3327, %v3335
        %v3432 = vmax.f32 %v3328, %v3336
        %v3433 = vmax.f32 %v3329, %v3337
        %v3434 = vmax.f32 %v3330, %v3338
        %v3435 = vmax.f32 %v3331, %v3339
        %v3436 = vmax.f32 %v3332, %v3340
        %v3437 = vmax.f32 %v3333, %v3341
        %v3438 = vmax.f32 %v3334, %v3342
        %v3439 = vmax.f32 %v3343, %v3351
        %v3440 = vmax.f32 %v3344, %v3352
        %v3441 = vmax.f32 %v3345, %v3353
        %v3442 = vmax.f32 %v3346, %v3354
        %v3443 = vmax.f32 %v3347, %v3355
        %v3444 = vmax.f32 %v3348, %v3356
        %v3445 = vmax.f32 %v3349, %v3357
        %v3446 = vmax.f32 %v3350, %v3358
        %v3447 = vmax.f32 %v3359, %v3367
        %v3448 = vmax.f32 %v3360, %v3368
        %v3449 = vmax.f32 %v3361, %v3369
        %v3450 = vmax.f32 %v3362, %v3370
        %v3451 = vmax.f32 %v3363, %v3371
        %v3452 = vmax.f32 %v3364, %v3372
        %v3453 = vmax.f32 %v3365, %v3373
        %v3454 = vmax.f32 %v3366, %v3374
        %v3455 = vmax.f32 %v3375, %v3383
        %v3456 = vmax.f32 %v3376, %v3384
        %v3457 = vmax.f32 %v3377, %v3385
        %v3458 = vmax.f32 %v3378, %v3386
        %v3459 = vmax.f32 %v3379, %v3387
        %v3460 = vmax.f32 %v3380, %v3388
        %v3461 = vmax.f32 %v3381, %v3389
        %v3462 = vmax.f32 %v3382, %v3390
        %v3463 = vmax.f32 %v3391, %v3399
        %v3464 = vmax.f32 %v3392, %v3400
        %v3465 = vmax.f32 %v3393, %v3401
        %v3466 = vmax.f32 %v3394, %v3402
        %v3467 = vmax.f32 %v3395, %v3403
        %v3468 = vmax.f32 %v3396, %v3404
        %v3469 = vmax.f32 %v3397, %v3405
        %v3470 = vmax.f32 %v3398, %v3406
        %v3535 = vlaneseq
        %v3536 = vshrl.u32 %v3535, 7
        %v3537 = vsub.s32 0, %v3536
        %v3538 = vrot.slane %v3407, %v3537
        %v3539 = vlaneseq
        %v3540 = vshrl.u32 %v3539, 7
        %v3541 = vsub.s32 0, %v3540
        %v3542 = vrot.slane %v3408, %v3541
        %v3543 = vlaneseq
        %v3544 = vshrl.u32 %v3543, 7
        %v3545 = vsub.s32 0, %v3544
        %v3546 = vrot.slane %v3409, %v3545
        %v3547 = vlaneseq
        %v3548 = vshrl.u32 %v3547, 7
        %v3549 = vsub.s32 0, %v3548
        %v3550 = vrot.slane %v3410, %v3549
        %v3551 = vlaneseq
        %v3552 = vshrl.u32 %v3551, 7
        %v3553 = vsub.s32 0, %v3552
        %v3554 = vrot.slane %v3411, %v3553
        %v3555 = vlaneseq
        %v3556 = vshrl.u32 %v3555, 7
        %v3557 = vsub.s32 0, %v3556
        %v3558 = vrot.slane %v3412, %v3557
        %v3559 = vlaneseq
        %v3560 = vshrl.u32 %v3559, 7
        %v3561 = vsub.s32 0, %v3560
        %v3562 = vrot.slane %v3413, %v3561
        %v3563 = vlaneseq
        %v3564 = vshrl.u32 %v3563, 7
        %v3565 = vsub.s32 0, %v3564
        %v3566 = vrot.slane %v3414, %v3565
        %v3567 = vlaneseq
        %v3568 = vshrl.u32 %v3567, 7
        %v3569 = vsub.s32 0, %v3568
        %v3570 = vrot.slane %v3415, %v3569
        %v3571 = vlaneseq
        %v3572 = vshrl.u32 %v3571, 7
        %v3573 = vsub.s32 0, %v3572
        %v3574 = vrot.slane %v3416, %v3573
        %v3575 = vlaneseq
        %v3576 = vshrl.u32 %v3575, 7
        %v3577 = vsub.s32 0, %v3576
        %v3578 = vrot.slane %v3417, %v3577
        %v3579 = vlaneseq
        %v3580 = vshrl.u32 %v3579, 7
        %v3581 = vsub.s32 0, %v3580
        %v3582 = vrot.slane %v3418, %v3581
        %v3583 = vlaneseq
        %v3584 = vshrl.u32 %v3583, 7
        %v3585 = vsub.s32 0, %v3584
        %v3586 = vrot.slane %v3419, %v3585
        %v3587 = vlaneseq
        %v3588 = vshrl.u32 %v3587, 7
        %v3589 = vsub.s32 0, %v3588
        %v3590 = vrot.slane %v3420, %v3589
        %v3591 = vlaneseq
        %v3592 = vshrl.u32 %v3591, 7
        %v3593 = vsub.s32 0, %v3592
        %v3594 = vrot.slane %v3421, %v3593
        %v3595 = vlaneseq
        %v3596 = vshrl.u32 %v3595, 7
        %v3597 = vsub.s32 0, %v3596
        %v3598 = vrot.slane %v3422, %v3597
        %v3599 = vlaneseq
        %v3600 = vshrl.u32 %v3599, 7
        %v3601 = vsub.s32 0, %v3600
        %v3602 = vrot.slane %v3423, %v3601
        %v3603 = vlaneseq
        %v3604 = vshrl.u32 %v3603, 7
        %v3605 = vsub.s32 0, %v3604
        %v3606 = vrot.slane %v3424, %v3605
        %v3607 = vlaneseq
        %v3608 = vshrl.u32 %v3607, 7
        %v3609 = vsub.s32 0, %v3608
        %v3610 = vrot.slane %v3425, %v3609
        %v3611 = vlaneseq
        %v3612 = vshrl.u32 %v3611, 7
        %v3613 = vsub.s32 0, %v3612
        %v3614 = vrot.slane %v3426, %v3613
        %v3615 = vlaneseq
        %v3616 = vshrl.u32 %v3615, 7
        %v3617 = vsub.s32 0, %v3616
        %v3618 = vrot.slane %v3427, %v3617
        %v3619 = vlaneseq
        %v3620 = vshrl.u32 %v3619, 7
        %v3621 = vsub.s32 0, %v3620
        %v3622 = vrot.slane %v3428, %v3621
        %v3623 = vlaneseq
        %v3624 = vshrl.u32 %v3623, 7
        %v3625 = vsub.s32 0, %v3624
        %v3626 = vrot.slane %v3429, %v3625
        %v3627 = vlaneseq
        %v3628 = vshrl.u32 %v3627, 7
        %v3629 = vsub.s32 0, %v3628
        %v3630 = vrot.slane %v3430, %v3629
        %v3631 = vlaneseq
        %v3632 = vshrl.u32 %v3631, 7
        %v3633 = vsub.s32 0, %v3632
        %v3634 = vrot.slane %v3431, %v3633
        %v3635 = vlaneseq
        %v3636 = vshrl.u32 %v3635, 7
        %v3637 = vsub.s32 0, %v3636
        %v3638 = vrot.slane %v3432, %v3637
        %v3639 = vlaneseq
        %v3640 = vshrl.u32 %v3639, 7
        %v3641 = vsub.s32 0, %v3640
        %v3642 = vrot.slane %v3433, %v3641
        %v3643 = vlaneseq
        %v3644 = vshrl.u32 %v3643, 7
        %v3645 = vsub.s32 0, %v3644
        %v3646 = vrot.slane %v3434, %v3645
        %v3647 = vlaneseq
        %v3648 = vshrl.u32 %v3647, 7
        %v3649 = vsub.s32 0, %v3648
        %v3650 = vrot.slane %v3435, %v3649
        %v3651 = vlaneseq
        %v3652 = vshrl.u32 %v3651, 7
        %v3653 = vsub.s32 0, %v3652
        %v3654 = vrot.slane %v3436, %v3653
        %v3655 = vlaneseq
        %v3656 = vshrl.u32 %v3655, 7
        %v3657 = vsub.s32 0, %v3656
        %v3658 = vrot.slane %v3437, %v3657
        %v3659 = vlaneseq
        %v3660 = vshrl.u32 %v3659, 7
        %v3661 = vsub.s32 0, %v3660
        %v3662 = vrot.slane %v3438, %v3661
        %v3663 = vlaneseq
        %v3664 = vshrl.u32 %v3663, 7
        %v3665 = vsub.s32 0, %v3664
        %v3666 = vrot.slane %v3439, %v3665
        %v3667 = vlaneseq
        %v3668 = vshrl.u32 %v3667, 7
        %v3669 = vsub.s32 0, %v3668
        %v3670 = vrot.slane %v3440, %v3669
        %v3671 = vlaneseq
        %v3672 = vshrl.u32 %v3671, 7
        %v3673 = vsub.s32 0, %v3672
        %v3674 = vrot.slane %v3441, %v3673
        %v3675 = vlaneseq
        %v3676 = vshrl.u32 %v3675, 7
        %v3677 = vsub.s32 0, %v3676
        %v3678 = vrot.slane %v3442, %v3677
        %v3679 = vlaneseq
        %v3680 = vshrl.u32 %v3679, 7
        %v3681 = vsub.s32 0, %v3680
        %v3682 = vrot.slane %v3443, %v3681
        %v3683 = vlaneseq
        %v3684 = vshrl.u32 %v3683, 7
        %v3685 = vsub.s32 0, %v3684
        %v3686 = vrot.slane %v3444, %v3685
        %v3687 = vlaneseq
        %v3688 = vshrl.u32 %v3687, 7
        %v3689 = vsub.s32 0, %v3688
        %v3690 = vrot.slane %v3445, %v3689
        %v3691 = vlaneseq
        %v3692 = vshrl.u32 %v3691, 7
        %v3693 = vsub.s32 0, %v3692
        %v3694 = vrot.slane %v3446, %v3693
        %v3695 = vlaneseq
        %v3696 = vshrl.u32 %v3695, 7
        %v3697 = vsub.s32 0, %v3696
        %v3698 = vrot.slane %v3447, %v3697
        %v3699 = vlaneseq
        %v3700 = vshrl.u32 %v3699, 7
        %v3701 = vsub.s32 0, %v3700
        %v3702 = vrot.slane %v3448, %v3701
        %v3703 = vlaneseq
        %v3704 = vshrl.u32 %v3703, 7
        %v3705 = vsub.s32 0, %v3704
        %v3706 = vrot.slane %v3449, %v3705
        %v3707 = vlaneseq
        %v3708 = vshrl.u32 %v3707, 7
        %v3709 = vsub.s32 0, %v3708
        %v3710 = vrot.slane %v3450, %v3709
        %v3711 = vlaneseq
        %v3712 = vshrl.u32 %v3711, 7
        %v3713 = vsub.s32 0, %v3712
        %v3714 = vrot.slane %v3451, %v3713
        %v3715 = vlaneseq
        %v3716 = vshrl.u32 %v3715, 7
        %v3717 = vsub.s32 0, %v3716
        %v3718 = vrot.slane %v3452, %v3717
        %v3719 = vlaneseq
        %v3720 = vshrl.u32 %v3719, 7
        %v3721 = vsub.s32 0, %v3720
        %v3722 = vrot.slane %v3453, %v3721
        %v3723 = vlaneseq
        %v3724 = vshrl.u32 %v3723, 7
        %v3725 = vsub.s32 0, %v3724
        %v3726 = vrot.slane %v3454, %v3725
        %v3727 = vlaneseq
        %v3728 = vshrl.u32 %v3727, 7
        %v3729 = vsub.s32 0, %v3728
        %v3730 = vrot.slane %v3455, %v3729
        %v3731 = vlaneseq
        %v3732 = vshrl.u32 %v3731, 7
        %v3733 = vsub.s32 0, %v3732
        %v3734 = vrot.slane %v3456, %v3733
        %v3735 = vlaneseq
        %v3736 = vshrl.u32 %v3735, 7
        %v3737 = vsub.s32 0, %v3736
        %v3738 = vrot.slane %v3457, %v3737
        %v3739 = vlaneseq
        %v3740 = vshrl.u32 %v3739, 7
        %v3741 = vsub.s32 0, %v3740
        %v3742 = vrot.slane %v3458, %v3741
        %v3743 = vlaneseq
        %v3744 = vshrl.u32 %v3743, 7
        %v3745 = vsub.s32 0, %v3744
        %v3746 = vrot.slane %v3459, %v3745
        %v3747 = vlaneseq
        %v3748 = vshrl.u32 %v3747, 7
        %v3749 = vsub.s32 0, %v3748
        %v3750 = vrot.slane %v3460, %v3749
        %v3751 = vlaneseq
        %v3752 = vshrl.u32 %v3751, 7
        %v3753 = vsub.s32 0, %v3752
        %v3754 = vrot.slane %v3461, %v3753
        %v3755 = vlaneseq
        %v3756 = vshrl.u32 %v3755, 7
        %v3757 = vsub.s32 0, %v3756
        %v3758 = vrot.slane %v3462, %v3757
        %v3759 = vlaneseq
        %v3760 = vshrl.u32 %v3759, 7
        %v3761 = vsub.s32 0, %v3760
        %v3762 = vrot.slane %v3463, %v3761
        %v3763 = vlaneseq
        %v3764 = vshrl.u32 %v3763, 7
        %v3765 = vsub.s32 0, %v3764
        %v3766 = vrot.slane %v3464, %v3765
        %v3767 = vlaneseq
        %v3768 = vshrl.u32 %v3767, 7
        %v3769 = vsub.s32 0, %v3768
        %v3770 = vrot.slane %v3465, %v3769
        %v3771 = vlaneseq
        %v3772 = vshrl.u32 %v3771, 7
        %v3773 = vsub.s32 0, %v3772
        %v3774 = vrot.slane %v3466, %v3773
        %v3775 = vlaneseq
        %v3776 = vshrl.u32 %v3775, 7
        %v3777 = vsub.s32 0, %v3776
        %v3778 = vrot.slane %v3467, %v3777
        %v3779 = vlaneseq
        %v3780 = vshrl.u32 %v3779, 7
        %v3781 = vsub.s32 0, %v3780
        %v3782 = vrot.slane %v3468, %v3781
        %v3783 = vlaneseq
        %v3784 = vshrl.u32 %v3783, 7
        %v3785 = vsub.s32 0, %v3784
        %v3786 = vrot.slane %v3469, %v3785
        %v3787 = vlaneseq
        %v3788 = vshrl.u32 %v3787, 7
        %v3789 = vsub.s32 0, %v3788
        %v3790 = vrot.slane %v3470, %v3789
        %vm3791 = vcmask 1041409
        %v3792 = vsel %vm3791, %v3542, %v3538
        %vm3793 = vcmask 1042434
        %v3794 = vsel %vm3793, %v3546, %v3792
        %vm3795 = vcmask 1043459
        %v3796 = vsel %vm3795, %v3550, %v3794
        %vm3797 = vcmask 1044484
        %v3798 = vsel %vm3797, %v3554, %v3796
        %vm3799 = vcmask 1045509
        %v3800 = vsel %vm3799, %v3558, %v3798
        %vm3801 = vcmask 1046534
        %v3802 = vsel %vm3801, %v3562, %v3800
        %vm3803 = vcmask 1047559
        %v3804 = vsel %vm3803, %v3566, %v3802
        %v3805 = vsel %vm3791, %v3574, %v3570
        %v3806 = vsel %vm3793, %v3578, %v3805
        %v3807 = vsel %vm3795, %v3582, %v3806
        %v3808 = vsel %vm3797, %v3586, %v3807
        %v3809 = vsel %vm3799, %v3590, %v3808
        %v3810 = vsel %vm3801, %v3594, %v3809
        %v3811 = vsel %vm3803, %v3598, %v3810
        %v3812 = vsel %vm3791, %v3606, %v3602
        %v3813 = vsel %vm3793, %v3610, %v3812
        %v3814 = vsel %vm3795, %v3614, %v3813
        %v3815 = vsel %vm3797, %v3618, %v3814
        %v3816 = vsel %vm3799, %v3622, %v3815
        %v3817 = vsel %vm3801, %v3626, %v3816
        %v3818 = vsel %vm3803, %v3630, %v3817
        %v3819 = vsel %vm3791, %v3638, %v3634
        %v3820 = vsel %vm3793, %v3642, %v3819
        %v3821 = vsel %vm3795, %v3646, %v3820
        %v3822 = vsel %vm3797, %v3650, %v3821
        %v3823 = vsel %vm3799, %v3654, %v3822
        %v3824 = vsel %vm3801, %v3658, %v3823
        %v3825 = vsel %vm3803, %v3662, %v3824
        %v3826 = vsel %vm3791, %v3670, %v3666
        %v3827 = vsel %vm3793, %v3674, %v3826
        %v3828 = vsel %vm3795, %v3678, %v3827
        %v3829 = vsel %vm3797, %v3682, %v3828
        %v3830 = vsel %vm3799, %v3686, %v3829
        %v3831 = vsel %vm3801, %v3690, %v3830
        %v3832 = vsel %vm3803, %v3694, %v3831
        %v3833 = vsel %vm3791, %v3702, %v3698
        %v3834 = vsel %vm3793, %v3706, %v3833
        %v3835 = vsel %vm3795, %v3710, %v3834
        %v3836 = vsel %vm3797, %v3714, %v3835
        %v3837 = vsel %vm3799, %v3718, %v3836
        %v3838 = vsel %vm3801, %v3722, %v3837
        %v3839 = vsel %vm3803, %v3726, %v3838
        %v3840 = vsel %vm3791, %v3734, %v3730
        %v3841 = vsel %vm3793, %v3738, %v3840
        %v3842 = vsel %vm3795, %v3742, %v3841
        %v3843 = vsel %vm3797, %v3746, %v3842
        %v3844 = vsel %vm3799, %v3750, %v3843
        %v3845 = vsel %vm3801, %v3754, %v3844
        %v3846 = vsel %vm3803, %v3758, %v3845
        %v3847 = vsel %vm3791, %v3766, %v3762
        %v3848 = vsel %vm3793, %v3770, %v3847
        %v3849 = vsel %vm3795, %v3774, %v3848
        %v3850 = vsel %vm3797, %v3778, %v3849
        %v3851 = vsel %vm3799, %v3782, %v3850
        %v3852 = vsel %vm3801, %v3786, %v3851
        %v3853 = vsel %vm3803, %v3790, %v3852
        %v3854 = vrot.slane %v3804, 7
        %v3855 = vrot.slane %v3811, 7
        %v3856 = vrot.slane %v3818, 7
        %v3857 = vrot.slane %v3825, 7
        %v3858 = vrot.slane %v3832, 7
        %v3859 = vrot.slane %v3839, 7
        %v3860 = vrot.slane %v3846, 7
        %v3861 = vrot.slane %v3853, 7
        %v3870 = vsel %vm449, 0.0, %v3854
        %v3871 = vsel %vm449, 0.0, %v3855
        %v3872 = vsel %vm449, 0.0, %v3856
        %v3873 = vsel %vm449, 0.0, %v3857
        %v3874 = vsel %vm449, 0.0, %v3858
        %v3875 = vsel %vm449, 0.0, %v3859
        %v3876 = vsel %vm449, 0.0, %v3860
        %v3877 = vsel %vm449, 0.0, %v3861
        %v3878 = vsel %vm449, %v3854, 0.0
        %v3879 = vsel %vm449, %v3855, 0.0
        %v3880 = vsel %vm449, %v3856, 0.0
        %v3881 = vsel %vm449, %v3857, 0.0
        %v3882 = vsel %vm449, %v3858, 0.0
        %v3883 = vsel %vm449, %v3859, 0.0
        %v3884 = vsel %vm449, %v3860, 0.0
        %v3885 = vsel %vm449, %v3861, 0.0
        %v3900 = vsel %vm615, %v616, %v619
        %v3901 = vrot.slane %v3870, 1
        %v3902 = vrot.slane %v3878, 1
        %v3903 = vsel %vm615, %v3901, %v3902
        %v3904 = vrot.slane %v3871, 1
        %v3905 = vrot.slane %v3879, 1
        %v3906 = vsel %vm615, %v3904, %v3905
        %v3907 = vrot.slane %v3872, 1
        %v3908 = vrot.slane %v3880, 1
        %v3909 = vsel %vm615, %v3907, %v3908
        %v3910 = vrot.slane %v3873, 1
        %v3911 = vrot.slane %v3881, 1
        %v3912 = vsel %vm615, %v3910, %v3911
        %v3913 = vrot.slane %v3874, 1
        %v3914 = vrot.slane %v3882, 1
        %v3915 = vsel %vm615, %v3913, %v3914
        %v3916 = vrot.slane %v3875, 1
        %v3917 = vrot.slane %v3883, 1
        %v3918 = vsel %vm615, %v3916, %v3917
        %v3919 = vrot.slane %v3876, 1
        %v3920 = vrot.slane %v3884, 1
        %v3921 = vsel %vm615, %v3919, %v3920
        %v3922 = vsel %vm696, %v697, %v700
        %v3923 = vrot.slane %v3870, 2
        %v3924 = vrot.slane %v3878, 2
        %v3925 = vsel %vm696, %v3923, %v3924
        %v3926 = vrot.slane %v3871, 2
        %v3927 = vrot.slane %v3879, 2
        %v3928 = vsel %vm696, %v3926, %v3927
        %v3929 = vrot.slane %v3872, 2
        %v3930 = vrot.slane %v3880, 2
        %v3931 = vsel %vm696, %v3929, %v3930
        %v3932 = vrot.slane %v3873, 2
        %v3933 = vrot.slane %v3881, 2
        %v3934 = vsel %vm696, %v3932, %v3933
        %v3935 = vrot.slane %v3874, 2
        %v3936 = vrot.slane %v3882, 2
        %v3937 = vsel %vm696, %v3935, %v3936
        %v3938 = vrot.slane %v3875, 2
        %v3939 = vrot.slane %v3883, 2
        %v3940 = vsel %vm696, %v3938, %v3939
        %v3941 = vrot.slane %v3876, 2
        %v3942 = vrot.slane %v3884, 2
        %v3943 = vsel %vm696, %v3941, %v3942
        %v3946 = vrot.slane %v3877, 1
        %v3947 = vrot.slane %v3885, 1
        %v3948 = vsel %vm615, %v3946, %v3947
        %v3949 = vrot.slane %v3877, 2
        %v3950 = vrot.slane %v3885, 2
        %v3951 = vsel %vm696, %v3949, %v3950
        %3952 = vrot.lane.b32.xlu0 %v3900, 8
        %v3953 = vpop.permute.xlu0 %3952
        %3954 = vrot.lane.b32.xlu0 %v3903, 8
        %v3955 = vpop.permute.xlu0 %3954
        %3956 = vrot.lane.b32.xlu0 %v3906, 8
        %v3957 = vpop.permute.xlu0 %3956
        %3958 = vrot.lane.b32.xlu0 %v3909, 8
        %v3959 = vpop.permute.xlu0 %3958
        %3960 = vrot.lane.b32.xlu0 %v3912, 8
        %v3961 = vpop.permute.xlu0 %3960
        %3962 = vrot.lane.b32.xlu0 %v3915, 8
        %v3963 = vpop.permute.xlu0 %3962
        %3964 = vrot.lane.b32.xlu0 %v3918, 8
        %v3965 = vpop.permute.xlu0 %3964
        %3966 = vrot.lane.b32.xlu0 %v3921, 8
        %v3967 = vpop.permute.xlu0 %3966
        %3976 = vrot.lane.b32.xlu0 %v3922, 16
        %v3977 = vpop.permute.xlu0 %3976
        %3978 = vrot.lane.b32.xlu0 %v3925, 16
        %v3979 = vpop.permute.xlu0 %3978
        %3980 = vrot.lane.b32.xlu0 %v3928, 16
        %v3981 = vpop.permute.xlu0 %3980
        %3982 = vrot.lane.b32.xlu0 %v3931, 16
        %v3983 = vpop.permute.xlu0 %3982
        %3984 = vrot.lane.b32.xlu0 %v3934, 16
        %v3985 = vpop.permute.xlu0 %3984
        %3986 = vrot.lane.b32.xlu0 %v3937, 16
        %v3987 = vpop.permute.xlu0 %3986
        %3988 = vrot.lane.b32.xlu0 %v3940, 16
        %v3989 = vpop.permute.xlu0 %3988
        %3990 = vrot.lane.b32.xlu0 %v3943, 16
        %v3991 = vpop.permute.xlu0 %3990
        %4000 = vrot.lane.b32.xlu0 %v3870, 24
        %v4001 = vpop.permute.xlu0 %4000
        %4002 = vrot.lane.b32.xlu0 %v3871, 24
        %v4003 = vpop.permute.xlu0 %4002
        %4004 = vrot.lane.b32.xlu0 %v3872, 24
        %v4005 = vpop.permute.xlu0 %4004
        %4006 = vrot.lane.b32.xlu0 %v3873, 24
        %v4007 = vpop.permute.xlu0 %4006
        %4008 = vrot.lane.b32.xlu0 %v3874, 24
        %v4009 = vpop.permute.xlu0 %4008
        %4010 = vrot.lane.b32.xlu0 %v3875, 24
        %v4011 = vpop.permute.xlu0 %4010
        %4012 = vrot.lane.b32.xlu0 %v3876, 24
        %v4013 = vpop.permute.xlu0 %4012
        %4014 = vrot.lane.b32.xlu0 %v3877, 24
        %v4015 = vpop.permute.xlu0 %4014
        %4024 = vrot.lane.b32.xlu0 %v3903, 32
        %v4025 = vpop.permute.xlu0 %4024
        %4026 = vrot.lane.b32.xlu0 %v3906, 32
        %v4027 = vpop.permute.xlu0 %4026
        %4028 = vrot.lane.b32.xlu0 %v3909, 32
        %v4029 = vpop.permute.xlu0 %4028
        %4030 = vrot.lane.b32.xlu0 %v3912, 32
        %v4031 = vpop.permute.xlu0 %4030
        %4032 = vrot.lane.b32.xlu0 %v3915, 32
        %v4033 = vpop.permute.xlu0 %4032
        %4034 = vrot.lane.b32.xlu0 %v3918, 32
        %v4035 = vpop.permute.xlu0 %4034
        %4036 = vrot.lane.b32.xlu0 %v3921, 32
        %v4037 = vpop.permute.xlu0 %4036
        %4038 = vrot.lane.b32.xlu0 %v3948, 32
        %v4039 = vpop.permute.xlu0 %4038
        %4048 = vrot.lane.b32.xlu0 %v3925, 40
        %v4049 = vpop.permute.xlu0 %4048
        %4050 = vrot.lane.b32.xlu0 %v3928, 40
        %v4051 = vpop.permute.xlu0 %4050
        %4052 = vrot.lane.b32.xlu0 %v3931, 40
        %v4053 = vpop.permute.xlu0 %4052
        %4054 = vrot.lane.b32.xlu0 %v3934, 40
        %v4055 = vpop.permute.xlu0 %4054
        %4056 = vrot.lane.b32.xlu0 %v3937, 40
        %v4057 = vpop.permute.xlu0 %4056
        %4058 = vrot.lane.b32.xlu0 %v3940, 40
        %v4059 = vpop.permute.xlu0 %4058
        %4060 = vrot.lane.b32.xlu0 %v3943, 40
        %v4061 = vpop.permute.xlu0 %4060
        %4062 = vrot.lane.b32.xlu0 %v3951, 40
        %v4063 = vpop.permute.xlu0 %4062
        %4072 = vrot.lane.b32.xlu0 %v3871, 48
        %v4073 = vpop.permute.xlu0 %4072
        %4074 = vrot.lane.b32.xlu0 %v3872, 48
        %v4075 = vpop.permute.xlu0 %4074
        %4076 = vrot.lane.b32.xlu0 %v3873, 48
        %v4077 = vpop.permute.xlu0 %4076
        %4078 = vrot.lane.b32.xlu0 %v3874, 48
        %v4079 = vpop.permute.xlu0 %4078
        %4080 = vrot.lane.b32.xlu0 %v3875, 48
        %v4081 = vpop.permute.xlu0 %4080
        %4082 = vrot.lane.b32.xlu0 %v3876, 48
        %v4083 = vpop.permute.xlu0 %4082
        %4084 = vrot.lane.b32.xlu0 %v3877, 48
        %v4085 = vpop.permute.xlu0 %4084
        %4086 = vrot.lane.b32.xlu0 %v549, 48
        %v4087 = vpop.permute.xlu0 %4086
        %4096 = vrot.lane.b32.xlu0 %v3906, 56
        %v4097 = vpop.permute.xlu0 %4096
        %4098 = vrot.lane.b32.xlu0 %v3909, 56
        %v4099 = vpop.permute.xlu0 %4098
        %4100 = vrot.lane.b32.xlu0 %v3912, 56
        %v4101 = vpop.permute.xlu0 %4100
        %4102 = vrot.lane.b32.xlu0 %v3915, 56
        %v4103 = vpop.permute.xlu0 %4102
        %4104 = vrot.lane.b32.xlu0 %v3918, 56
        %v4105 = vpop.permute.xlu0 %4104
        %4106 = vrot.lane.b32.xlu0 %v3921, 56
        %v4107 = vpop.permute.xlu0 %4106
        %4108 = vrot.lane.b32.xlu0 %v3948, 56
        %v4109 = vpop.permute.xlu0 %4108
        %4110 = vrot.lane.b32.xlu0 %v3900, 56
        %v4111 = vpop.permute.xlu0 %4110
        %4120 = vrot.lane.b32.xlu0 %v3928, 64
        %v4121 = vpop.permute.xlu0 %4120
        %4122 = vrot.lane.b32.xlu0 %v3931, 64
        %v4123 = vpop.permute.xlu0 %4122
        %4124 = vrot.lane.b32.xlu0 %v3934, 64
        %v4125 = vpop.permute.xlu0 %4124
        %4126 = vrot.lane.b32.xlu0 %v3937, 64
        %v4127 = vpop.permute.xlu0 %4126
        %4128 = vrot.lane.b32.xlu0 %v3940, 64
        %v4129 = vpop.permute.xlu0 %4128
        %4130 = vrot.lane.b32.xlu0 %v3943, 64
        %v4131 = vpop.permute.xlu0 %4130
        %4132 = vrot.lane.b32.xlu0 %v3951, 64
        %v4133 = vpop.permute.xlu0 %4132
        %4134 = vrot.lane.b32.xlu0 %v3922, 64
        %v4135 = vpop.permute.xlu0 %4134
        %v4144 = vsel %vm1590, %v549, %v3953
        %v4145 = vsel %vm1590, %v3870, %v3955
        %v4146 = vsel %vm1590, %v3871, %v3957
        %v4147 = vsel %vm1590, %v3872, %v3959
        %v4148 = vsel %vm1590, %v3873, %v3961
        %v4149 = vsel %vm1590, %v3874, %v3963
        %v4150 = vsel %vm1590, %v3875, %v3965
        %v4151 = vsel %vm1590, %v3876, %v3967
        %v4152 = vsel %vm1656, %v4144, %v3977
        %v4153 = vsel %vm1656, %v4145, %v3979
        %v4154 = vsel %vm1656, %v4146, %v3981
        %v4155 = vsel %vm1656, %v4147, %v3983
        %v4156 = vsel %vm1656, %v4148, %v3985
        %v4157 = vsel %vm1656, %v4149, %v3987
        %v4158 = vsel %vm1656, %v4150, %v3989
        %v4159 = vsel %vm1656, %v4151, %v3991
        %v4160 = vsel %vm1722, %v4152, %v4001
        %v4161 = vsel %vm1722, %v4153, %v4003
        %v4162 = vsel %vm1722, %v4154, %v4005
        %v4163 = vsel %vm1722, %v4155, %v4007
        %v4164 = vsel %vm1722, %v4156, %v4009
        %v4165 = vsel %vm1722, %v4157, %v4011
        %v4166 = vsel %vm1722, %v4158, %v4013
        %v4167 = vsel %vm1722, %v4159, %v4015
        %v4168 = vsel %vm1788, %v4160, %v4025
        %v4169 = vsel %vm1788, %v4161, %v4027
        %v4170 = vsel %vm1788, %v4162, %v4029
        %v4171 = vsel %vm1788, %v4163, %v4031
        %v4172 = vsel %vm1788, %v4164, %v4033
        %v4173 = vsel %vm1788, %v4165, %v4035
        %v4174 = vsel %vm1788, %v4166, %v4037
        %v4175 = vsel %vm1788, %v4167, %v4039
        %vm4176 = vcmask 326656
        %v4177 = vsel %vm4176, %v4168, %v4049
        %v4178 = vsel %vm4176, %v4169, %v4051
        %v4179 = vsel %vm4176, %v4170, %v4053
        %v4180 = vsel %vm4176, %v4171, %v4055
        %v4181 = vsel %vm4176, %v4172, %v4057
        %v4182 = vsel %vm4176, %v4173, %v4059
        %v4183 = vsel %vm4176, %v4174, %v4061
        %v4184 = vsel %vm4176, %v4175, %v4063
        %vm4185 = vcmask 392192
        %v4186 = vsel %vm4185, %v4177, %v4073
        %v4187 = vsel %vm4185, %v4178, %v4075
        %v4188 = vsel %vm4185, %v4179, %v4077
        %v4189 = vsel %vm4185, %v4180, %v4079
        %v4190 = vsel %vm4185, %v4181, %v4081
        %v4191 = vsel %vm4185, %v4182, %v4083
        %v4192 = vsel %vm4185, %v4183, %v4085
        %v4193 = vsel %vm4185, %v4184, %v4087
        %vm4194 = vcmask 457728
        %v4195 = vsel %vm4194, %v4186, %v4097
        %v4196 = vsel %vm4194, %v4187, %v4099
        %v4197 = vsel %vm4194, %v4188, %v4101
        %v4198 = vsel %vm4194, %v4189, %v4103
        %v4199 = vsel %vm4194, %v4190, %v4105
        %v4200 = vsel %vm4194, %v4191, %v4107
        %v4201 = vsel %vm4194, %v4192, %v4109
        %v4202 = vsel %vm4194, %v4193, %v4111
        %vm4203 = vcmask 523264
        %v4204 = vsel %vm4203, %v4195, %v4121
        %v4205 = vsel %vm4203, %v4196, %v4123
        %v4206 = vsel %vm4203, %v4197, %v4125
        %v4207 = vsel %vm4203, %v4198, %v4127
        %v4208 = vsel %vm4203, %v4199, %v4129
        %v4209 = vsel %vm4203, %v4200, %v4131
        %v4210 = vsel %vm4203, %v4201, %v4133
        %v4211 = vsel %vm4203, %v4202, %v4135
        %v4212 = vld [vmem:[%s3] sm:$0xff]
        %v4213 = vld [vmem:[%s3 + $0x8] sm:$0xff]
        %v4214 = vld [vmem:[%s3 + $0x10] sm:$0xff]
        %v4215 = vld [vmem:[%s3 + $0x18] sm:$0xff]
        %v4216 = vld [vmem:[%s3 + $0x20] sm:$0xff]
        %v4217 = vld [vmem:[%s3 + $0x28] sm:$0xff]
        %v4218 = vld [vmem:[%s3 + $0x30] sm:$0xff]
        %v4219 = vld [vmem:[%s3 + $0x38] sm:$0xff]
        %v4220 = vld [vmem:[%s3 + $0x40] sm:$0xff]
        %v4221 = vld [vmem:[%s4] sm:$0x1]
        %v4223 = vlaneseq
        %v4224 = vshrl.u32 %v4223, 7
        %v4225 = vsub.s32 0, %v4224
        %v4226 = vrot.slane %v4221, %v4225
        %vm4228 = vcmask 588800
        %v4230 = vsel %vm4228, %v4204, 0
        %v4233 = vsel %vm4228, %v4205, 0
        %v4236 = vsel %vm4228, %v4206, 0
        %v4239 = vsel %vm4228, %v4207, 0
        %v4242 = vsel %vm4228, %v4208, 0
        %v4245 = vsel %vm4228, %v4209, 0
        %v4248 = vsel %vm4228, %v4210, 0
        %v4251 = vsel %vm4228, %v4211, 0
        %4253 = vmatprep.subr.mxu0 0.0
        %4254 = vmatpush1.msra.mxu0 %v4212
        %4255 = vmatprep.subr.mxu0 0.0
        %4256 = vmatpush1.msra.mxu0 %v4213
        %4257 = vmatprep.subr.mxu0 0.0
        %4258 = vmatpush1.msra.mxu0 %v4214
        %4259 = vmatprep.subr.mxu0 0.0
        %4260 = vmatpush1.msra.mxu0 %v4215
        %4261 = vmatprep.subr.mxu0 0.0
        %4262 = vmatpush1.msra.mxu0 %v4216
        %4263 = vmatprep.subr.mxu0 0.0
        %4264 = vmatpush1.msra.mxu0 %v4217
        %4265 = vmatprep.subr.mxu0 0.0
        %4266 = vmatpush1.msra.mxu0 %v4218
        %4267 = vmatprep.subr.mxu0 0.0
        %4268 = vmatpush1.msra.mxu0 %v4219
        %4269 = vmatprep.subr.mxu0 0.0
        %4270 = vmatpush1.msra.mxu0 %v4220
        %4271 = vmatprep.subr.mxu0 0.0
        %4272 = vmatpush1.msra.mxu0 0.0
        %4273 = vmatprep.subr.mxu0 0.0
        %4274 = vmatpush1.msra.mxu0 0.0
        %4275 = vmatprep.subr.mxu0 0.0
        %4276 = vmatpush1.msra.mxu0 0.0
        %4277 = vmatprep.subr.mxu0 0.0
        %4278 = vmatpush1.msra.mxu0 0.0
        %4279 = vmatprep.subr.mxu0 0.0
        %4280 = vmatpush1.msra.mxu0 0.0
        %4281 = vmatprep.subr.mxu0 0.0
        %4282 = vmatpush1.msra.mxu0 0.0
        %4283 = vmatprep.subr.mxu0 0.0
        %4284 = vmatpush1.msra.mxu0 0.0
        %4285 = vmatprep.subr.mxu0 0.0
        %4286 = vmatpush1.msra.mxu0 0.0
        %4287 = vmatprep.subr.mxu0 0.0
        %4288 = vmatpush1.msra.mxu0 0.0
        %4289 = vmatprep.subr.mxu0 0.0
        %4290 = vmatpush1.msra.mxu0 0.0
        %4291 = vmatprep.subr.mxu0 0.0
        %4292 = vmatpush1.msra.mxu0 0.0
        %4293 = vmatprep.subr.mxu0 0.0
        %4294 = vmatpush1.msra.mxu0 0.0
        %4295 = vmatprep.subr.mxu0 0.0
        %4296 = vmatpush1.msra.mxu0 0.0
        %4297 = vmatprep.subr.mxu0 0.0
        %4298 = vmatpush1.msra.mxu0 0.0
        %4299 = vmatprep.subr.mxu0 0.0
        %4300 = vmatpush1.msra.mxu0 0.0
        %4301 = vmatprep.subr.mxu0 0.0
        %4302 = vmatpush1.msra.mxu0 0.0
        %4303 = vmatprep.subr.mxu0 0.0
        %4304 = vmatpush1.msra.mxu0 0.0
        %4305 = vmatprep.subr.mxu0 0.0
        %4306 = vmatpush1.msra.mxu0 0.0
        %4307 = vmatprep.subr.mxu0 0.0
        %4308 = vmatpush1.msra.mxu0 0.0
        %4309 = vmatprep.subr.mxu0 0.0
        %4310 = vmatpush1.msra.mxu0 0.0
        %4311 = vmatprep.subr.mxu0 0.0
        %4312 = vmatpush1.msra.mxu0 0.0
        %4313 = vmatprep.subr.mxu0 0.0
        %4314 = vmatpush1.msra.mxu0 0.0
        %4315 = vmatprep.subr.mxu0 0.0
        %4316 = vmatpush1.msra.mxu0 0.0
        %4317 = vmatprep.mubr.f32.mxu0 0.0
        %4318 = vmatmul.mubr.f32.gmra.mrb[0].mxu0 %v4230
        %v4319 = vpop.f32.mrb[0].mxu0
        %v4320 = vadd.f32 %v4226, %v4319
        %v4321 = vpop.f32.mrb[0].mxu0
        %4322 = vmatprep.mubr.f32.mxu0 0.0
        %4323 = vmatmul.mubr.f32.gmra.mrb[0].mxu0 %v4233
        %v4324 = vpop.f32.mrb[0].mxu0
        %v4325 = vadd.f32 %v4226, %v4324
        %v4326 = vpop.f32.mrb[0].mxu0
        %4327 = vmatprep.mubr.f32.mxu0 0.0
        %4328 = vmatmul.mubr.f32.gmra.mrb[0].mxu0 %v4236
        %v4329 = vpop.f32.mrb[0].mxu0
        %v4330 = vadd.f32 %v4226, %v4329
        %v4331 = vpop.f32.mrb[0].mxu0
        %4332 = vmatprep.mubr.f32.mxu0 0.0
        %4333 = vmatmul.mubr.f32.gmra.mrb[0].mxu0 %v4239
        %v4334 = vpop.f32.mrb[0].mxu0
        %v4335 = vadd.f32 %v4226, %v4334
        %v4336 = vpop.f32.mrb[0].mxu0
        %4337 = vmatprep.mubr.f32.mxu0 0.0
        %4338 = vmatmul.mubr.f32.gmra.mrb[0].mxu0 %v4242
        %v4339 = vpop.f32.mrb[0].mxu0
        %v4340 = vadd.f32 %v4226, %v4339
        %v4341 = vpop.f32.mrb[0].mxu0
        %4342 = vmatprep.mubr.f32.mxu0 0.0
        %4343 = vmatmul.mubr.f32.gmra.mrb[0].mxu0 %v4245
        %v4344 = vpop.f32.mrb[0].mxu0
        %v4345 = vadd.f32 %v4226, %v4344
        %v4346 = vpop.f32.mrb[0].mxu0
        %4347 = vmatprep.mubr.f32.mxu0 0.0
        %4348 = vmatmul.mubr.f32.gmra.mrb[0].mxu0 %v4248
        %v4349 = vpop.f32.mrb[0].mxu0
        %v4350 = vadd.f32 %v4226, %v4349
        %v4351 = vpop.f32.mrb[0].mxu0
        %4352 = vmatprep.mubr.f32.mxu0 0.0
        %4353 = vmatmul.mubr.f32.gmra.mrb[0].mxu0 %v4251
        %v4354 = vpop.f32.mrb[0].mxu0
        %v4355 = vadd.f32 %v4226, %v4354
        %v4356 = vpop.f32.mrb[0].mxu0
        %4357 = vdwg.mxu0
        %v4358 = vmax.f32 %v4320, 0.0
        %v4359 = vmax.f32 %v4325, 0.0
        %v4360 = vmax.f32 %v4330, 0.0
        %v4361 = vmax.f32 %v4335, 0.0
        %v4362 = vmax.f32 %v4340, 0.0
        %v4363 = vmax.f32 %v4345, 0.0
        %v4364 = vmax.f32 %v4350, 0.0
        %v4365 = vmax.f32 %v4355, 0.0
        %v4374 = vcombine.high %v4358, %v4358
        %v4376 = vunpack.c.l.s4 1983009808
        %v4377 = vunpack.c.0.s8 %v4376
        %v4378 = vlaneseq
        %v4379 = vshrl.u32 %v4378, 7
        %v4380 = vsub.s32 %v4377, %v4379
        %v4381 = vrot.slane %v4358, %v4380
        %v4383 = vunpack.c.l.s4 1983009808
        %v4384 = vunpack.c.0.s8 %v4383
        %v4385 = vlaneseq
        %v4386 = vshrl.u32 %v4385, 7
        %v4387 = vsub.s32 %v4384, %v4386
        %v4388 = vrot.slane %v4374, %v4387
        %v4389 = vcombine.high %v4381, %v4381
        %v4390 = vcombine.high %v4388, %v4388
        %v4391 = vcombine.high %v4359, %v4359
        %v4393 = vunpack.c.l.s4 1983009808
        %v4394 = vunpack.c.0.s8 %v4393
        %v4395 = vlaneseq
        %v4396 = vshrl.u32 %v4395, 7
        %v4397 = vsub.s32 %v4394, %v4396
        %v4398 = vrot.slane %v4359, %v4397
        %v4400 = vunpack.c.l.s4 1983009808
        %v4401 = vunpack.c.0.s8 %v4400
        %v4402 = vlaneseq
        %v4403 = vshrl.u32 %v4402, 7
        %v4404 = vsub.s32 %v4401, %v4403
        %v4405 = vrot.slane %v4391, %v4404
        %v4406 = vcombine.high %v4398, %v4398
        %v4407 = vcombine.high %v4405, %v4405
        %v4408 = vcombine.high %v4360, %v4360
        %v4410 = vunpack.c.l.s4 1983009808
        %v4411 = vunpack.c.0.s8 %v4410
        %v4412 = vlaneseq
        %v4413 = vshrl.u32 %v4412, 7
        %v4414 = vsub.s32 %v4411, %v4413
        %v4415 = vrot.slane %v4360, %v4414
        %v4417 = vunpack.c.l.s4 1983009808
        %v4418 = vunpack.c.0.s8 %v4417
        %v4419 = vlaneseq
        %v4420 = vshrl.u32 %v4419, 7
        %v4421 = vsub.s32 %v4418, %v4420
        %v4422 = vrot.slane %v4408, %v4421
        %v4423 = vcombine.high %v4415, %v4415
        %v4424 = vcombine.high %v4422, %v4422
        %v4425 = vcombine.high %v4361, %v4361
        %v4427 = vunpack.c.l.s4 1983009808
        %v4428 = vunpack.c.0.s8 %v4427
        %v4429 = vlaneseq
        %v4430 = vshrl.u32 %v4429, 7
        %v4431 = vsub.s32 %v4428, %v4430
        %v4432 = vrot.slane %v4361, %v4431
        %v4434 = vunpack.c.l.s4 1983009808
        %v4435 = vunpack.c.0.s8 %v4434
        %v4436 = vlaneseq
        %v4437 = vshrl.u32 %v4436, 7
        %v4438 = vsub.s32 %v4435, %v4437
        %v4439 = vrot.slane %v4425, %v4438
        %v4440 = vcombine.high %v4432, %v4432
        %v4441 = vcombine.high %v4439, %v4439
        %v4442 = vcombine.high %v4362, %v4362
        %v4444 = vunpack.c.l.s4 1983009808
        %v4445 = vunpack.c.0.s8 %v4444
        %v4446 = vlaneseq
        %v4447 = vshrl.u32 %v4446, 7
        %v4448 = vsub.s32 %v4445, %v4447
        %v4449 = vrot.slane %v4362, %v4448
        %v4451 = vunpack.c.l.s4 1983009808
        %v4452 = vunpack.c.0.s8 %v4451
        %v4453 = vlaneseq
        %v4454 = vshrl.u32 %v4453, 7
        %v4455 = vsub.s32 %v4452, %v4454
        %v4456 = vrot.slane %v4442, %v4455
        %v4457 = vcombine.high %v4449, %v4449
        %v4458 = vcombine.high %v4456, %v4456
        %v4459 = vcombine.high %v4363, %v4363
        %v4461 = vunpack.c.l.s4 1983009808
        %v4462 = vunpack.c.0.s8 %v4461
        %v4463 = vlaneseq
        %v4464 = vshrl.u32 %v4463, 7
        %v4465 = vsub.s32 %v4462, %v4464
        %v4466 = vrot.slane %v4363, %v4465
        %v4468 = vunpack.c.l.s4 1983009808
        %v4469 = vunpack.c.0.s8 %v4468
        %v4470 = vlaneseq
        %v4471 = vshrl.u32 %v4470, 7
        %v4472 = vsub.s32 %v4469, %v4471
        %v4473 = vrot.slane %v4459, %v4472
        %v4474 = vcombine.high %v4466, %v4466
        %v4475 = vcombine.high %v4473, %v4473
        %v4476 = vcombine.high %v4364, %v4364
        %v4478 = vunpack.c.l.s4 1983009808
        %v4479 = vunpack.c.0.s8 %v4478
        %v4480 = vlaneseq
        %v4481 = vshrl.u32 %v4480, 7
        %v4482 = vsub.s32 %v4479, %v4481
        %v4483 = vrot.slane %v4364, %v4482
        %v4485 = vunpack.c.l.s4 1983009808
        %v4486 = vunpack.c.0.s8 %v4485
        %v4487 = vlaneseq
        %v4488 = vshrl.u32 %v4487, 7
        %v4489 = vsub.s32 %v4486, %v4488
        %v4490 = vrot.slane %v4476, %v4489
        %v4491 = vcombine.high %v4483, %v4483
        %v4492 = vcombine.high %v4490, %v4490
        %v4493 = vcombine.high %v4365, %v4365
        %v4495 = vunpack.c.l.s4 1983009808
        %v4496 = vunpack.c.0.s8 %v4495
        %v4497 = vlaneseq
        %v4498 = vshrl.u32 %v4497, 7
        %v4499 = vsub.s32 %v4496, %v4498
        %v4500 = vrot.slane %v4365, %v4499
        %v4502 = vunpack.c.l.s4 1983009808
        %v4503 = vunpack.c.0.s8 %v4502
        %v4504 = vlaneseq
        %v4505 = vshrl.u32 %v4504, 7
        %v4506 = vsub.s32 %v4503, %v4505
        %v4507 = vrot.slane %v4493, %v4506
        %v4508 = vcombine.high %v4500, %v4500
        %v4509 = vcombine.high %v4507, %v4507
        %v4542 = vrot.slane %v4381, 7
        %v4543 = vrot.slane %v4542, 2
        %v4544 = vrot.slane %v4389, 7
        %v4545 = vrot.slane %v4544, 2
        %v4546 = vrot.slane %v4388, 7
        %v4547 = vrot.slane %v4546, 2
        %v4548 = vrot.slane %v4390, 7
        %v4549 = vrot.slane %v4548, 2
        %v4550 = vrot.slane %v4398, 7
        %v4551 = vrot.slane %v4550, 2
        %v4552 = vrot.slane %v4406, 7
        %v4553 = vrot.slane %v4552, 2
        %v4554 = vrot.slane %v4405, 7
        %v4555 = vrot.slane %v4554, 2
        %v4556 = vrot.slane %v4407, 7
        %v4557 = vrot.slane %v4556, 2
        %v4558 = vrot.slane %v4415, 7
        %v4559 = vrot.slane %v4558, 2
        %v4560 = vrot.slane %v4423, 7
        %v4561 = vrot.slane %v4560, 2
        %v4562 = vrot.slane %v4422, 7
        %v4563 = vrot.slane %v4562, 2
        %v4564 = vrot.slane %v4424, 7
        %v4565 = vrot.slane %v4564, 2
        %v4566 = vrot.slane %v4432, 7
        %v4567 = vrot.slane %v4566, 2
        %v4568 = vrot.slane %v4440, 7
        %v4569 = vrot.slane %v4568, 2
        %v4570 = vrot.slane %v4439, 7
        %v4571 = vrot.slane %v4570, 2
        %v4572 = vrot.slane %v4441, 7
        %v4573 = vrot.slane %v4572, 2
        %v4574 = vrot.slane %v4449, 7
        %v4575 = vrot.slane %v4574, 2
        %v4576 = vrot.slane %v4457, 7
        %v4577 = vrot.slane %v4576, 2
        %v4578 = vrot.slane %v4456, 7
        %v4579 = vrot.slane %v4578, 2
        %v4580 = vrot.slane %v4458, 7
        %v4581 = vrot.slane %v4580, 2
        %v4582 = vrot.slane %v4466, 7
        %v4583 = vrot.slane %v4582, 2
        %v4584 = vrot.slane %v4474, 7
        %v4585 = vrot.slane %v4584, 2
        %v4586 = vrot.slane %v4473, 7
        %v4587 = vrot.slane %v4586, 2
        %v4588 = vrot.slane %v4475, 7
        %v4589 = vrot.slane %v4588, 2
        %v4590 = vrot.slane %v4483, 7
        %v4591 = vrot.slane %v4590, 2
        %v4592 = vrot.slane %v4491, 7
        %v4593 = vrot.slane %v4592, 2
        %v4594 = vrot.slane %v4490, 7
        %v4595 = vrot.slane %v4594, 2
        %v4596 = vrot.slane %v4492, 7
        %v4597 = vrot.slane %v4596, 2
        %v4598 = vrot.slane %v4500, 7
        %v4599 = vrot.slane %v4598, 2
        %v4600 = vrot.slane %v4508, 7
        %v4601 = vrot.slane %v4600, 2
        %v4602 = vrot.slane %v4507, 7
        %v4603 = vrot.slane %v4602, 2
        %v4604 = vrot.slane %v4509, 7
        %v4605 = vrot.slane %v4604, 2
        %v4638 = vmax.f32 %v4381, %v4543
        %v4639 = vmax.f32 %v4389, %v4545
        %v4640 = vmax.f32 %v4388, %v4547
        %v4641 = vmax.f32 %v4390, %v4549
        %v4642 = vmax.f32 %v4398, %v4551
        %v4643 = vmax.f32 %v4406, %v4553
        %v4644 = vmax.f32 %v4405, %v4555
        %v4645 = vmax.f32 %v4407, %v4557
        %v4646 = vmax.f32 %v4415, %v4559
        %v4647 = vmax.f32 %v4423, %v4561
        %v4648 = vmax.f32 %v4422, %v4563
        %v4649 = vmax.f32 %v4424, %v4565
        %v4650 = vmax.f32 %v4432, %v4567
        %v4651 = vmax.f32 %v4440, %v4569
        %v4652 = vmax.f32 %v4439, %v4571
        %v4653 = vmax.f32 %v4441, %v4573
        %v4654 = vmax.f32 %v4449, %v4575
        %v4655 = vmax.f32 %v4457, %v4577
        %v4656 = vmax.f32 %v4456, %v4579
        %v4657 = vmax.f32 %v4458, %v4581
        %v4658 = vmax.f32 %v4466, %v4583
        %v4659 = vmax.f32 %v4474, %v4585
        %v4660 = vmax.f32 %v4473, %v4587
        %v4661 = vmax.f32 %v4475, %v4589
        %v4662 = vmax.f32 %v4483, %v4591
        %v4663 = vmax.f32 %v4491, %v4593
        %v4664 = vmax.f32 %v4490, %v4595
        %v4665 = vmax.f32 %v4492, %v4597
        %v4666 = vmax.f32 %v4500, %v4599
        %v4667 = vmax.f32 %v4508, %v4601
        %v4668 = vmax.f32 %v4507, %v4603
        %v4669 = vmax.f32 %v4509, %v4605
        %v4670 = vmax.f32 %v4638, %v4642
        %v4671 = vmax.f32 %v4639, %v4643
        %v4672 = vmax.f32 %v4640, %v4644
        %v4673 = vmax.f32 %v4641, %v4645
        %v4674 = vmax.f32 %v4646, %v4650
        %v4675 = vmax.f32 %v4647, %v4651
        %v4676 = vmax.f32 %v4648, %v4652
        %v4677 = vmax.f32 %v4649, %v4653
        %v4678 = vmax.f32 %v4654, %v4658
        %v4679 = vmax.f32 %v4655, %v4659
        %v4680 = vmax.f32 %v4656, %v4660
        %v4681 = vmax.f32 %v4657, %v4661
        %v4682 = vmax.f32 %v4662, %v4666
        %v4683 = vmax.f32 %v4663, %v4667
        %v4684 = vmax.f32 %v4664, %v4668
        %v4685 = vmax.f32 %v4665, %v4669
        %v4702 = vsel %vm3797, %v4670, %v4670
        %v4703 = vsel %vm3801, %v4670, %v4702
        %v4704 = vrot.slane %v4671, 7
        %v4705 = vsel %vm3791, %v4704, %v4703
        %v4706 = vsel %vm3795, %v4704, %v4705
        %v4707 = vsel %vm3799, %v4704, %v4706
        %v4708 = vsel %vm3803, %v4704, %v4707
        %v4709 = vsel %vm3797, %v4672, %v4672
        %v4710 = vsel %vm3801, %v4672, %v4709
        %v4711 = vrot.slane %v4673, 7
        %v4712 = vsel %vm3791, %v4711, %v4710
        %v4713 = vsel %vm3795, %v4711, %v4712
        %v4714 = vsel %vm3799, %v4711, %v4713
        %v4715 = vsel %vm3803, %v4711, %v4714
        %v4716 = vsel %vm3797, %v4674, %v4674
        %v4717 = vsel %vm3801, %v4674, %v4716
        %v4718 = vrot.slane %v4675, 7
        %v4719 = vsel %vm3791, %v4718, %v4717
        %v4720 = vsel %vm3795, %v4718, %v4719
        %v4721 = vsel %vm3799, %v4718, %v4720
        %v4722 = vsel %vm3803, %v4718, %v4721
        %v4723 = vsel %vm3797, %v4676, %v4676
        %v4724 = vsel %vm3801, %v4676, %v4723
        %v4725 = vrot.slane %v4677, 7
        %v4726 = vsel %vm3791, %v4725, %v4724
        %v4727 = vsel %vm3795, %v4725, %v4726
        %v4728 = vsel %vm3799, %v4725, %v4727
        %v4729 = vsel %vm3803, %v4725, %v4728
        %v4730 = vsel %vm3797, %v4678, %v4678
        %v4731 = vsel %vm3801, %v4678, %v4730
        %v4732 = vrot.slane %v4679, 7
        %v4733 = vsel %vm3791, %v4732, %v4731
        %v4734 = vsel %vm3795, %v4732, %v4733
        %v4735 = vsel %vm3799, %v4732, %v4734
        %v4736 = vsel %vm3803, %v4732, %v4735
        %v4737 = vsel %vm3797, %v4680, %v4680
        %v4738 = vsel %vm3801, %v4680, %v4737
        %v4739 = vrot.slane %v4681, 7
        %v4740 = vsel %vm3791, %v4739, %v4738
        %v4741 = vsel %vm3795, %v4739, %v4740
        %v4742 = vsel %vm3799, %v4739, %v4741
        %v4743 = vsel %vm3803, %v4739, %v4742
        %v4744 = vsel %vm3797, %v4682, %v4682
        %v4745 = vsel %vm3801, %v4682, %v4744
        %v4746 = vrot.slane %v4683, 7
        %v4747 = vsel %vm3791, %v4746, %v4745
        %v4748 = vsel %vm3795, %v4746, %v4747
        %v4749 = vsel %vm3799, %v4746, %v4748
        %v4750 = vsel %vm3803, %v4746, %v4749
        %v4751 = vsel %vm3797, %v4684, %v4684
        %v4752 = vsel %vm3801, %v4684, %v4751
        %v4753 = vrot.slane %v4685, 7
        %v4754 = vsel %vm3791, %v4753, %v4752
        %v4755 = vsel %vm3795, %v4753, %v4754
        %v4756 = vsel %vm3799, %v4753, %v4755
        %v4757 = vsel %vm3803, %v4753, %v4756
        %v4766 = vcombine.low %v4708, %v4722
        %v4768 = vunpack.c.l.s4 1934713408
        %v4769 = vunpack.c.0.s8 %v4768
        %v4770 = vlaneseq
        %v4771 = vshrl.u32 %v4770, 7
        %v4772 = vsub.s32 %v4769, %v4771
        %v4773 = vrot.slane %v4766, %v4772
        %v4774 = vcombine.high %v4773, 0.0
        %v4775 = vcombine.low %v4736, %v4750
        %v4777 = vunpack.c.l.s4 1934713408
        %v4778 = vunpack.c.0.s8 %v4777
        %v4779 = vlaneseq
        %v4780 = vshrl.u32 %v4779, 7
        %v4781 = vsub.s32 %v4778, %v4780
        %v4782 = vrot.slane %v4775, %v4781
        %v4783 = vcombine.high %v4782, 0.0
        %v4784 = vcombine.low %v4715, %v4729
        %v4786 = vunpack.c.l.s4 1934713408
        %v4787 = vunpack.c.0.s8 %v4786
        %v4788 = vlaneseq
        %v4789 = vshrl.u32 %v4788, 7
        %v4790 = vsub.s32 %v4787, %v4789
        %v4791 = vrot.slane %v4784, %v4790
        %v4792 = vcombine.high %v4791, 0.0
        %v4793 = vcombine.low %v4743, %v4757
        %v4795 = vunpack.c.l.s4 1934713408
        %v4796 = vunpack.c.0.s8 %v4795
        %v4797 = vlaneseq
        %v4798 = vshrl.u32 %v4797, 7
        %v4799 = vsub.s32 %v4796, %v4798
        %v4800 = vrot.slane %v4793, %v4799
        %v4801 = vcombine.high %v4800, 0.0
        %v4804 = vcombine.low %v4773, %v4782
        %v4806 = vunpack.c.l.s4 1983009808
        %v4807 = vunpack.c.0.s8 %v4806
        %v4808 = vlaneseq
        %v4809 = vshrl.u32 %v4808, 7
        %v4810 = vsub.s32 %v4807, %v4809
        %v4811 = vrot.slane %v4804, %v4810
        %v4815 = vcombine.low %v4774, %v4783
        %v4817 = vunpack.c.l.s4 1983009808
        %v4818 = vunpack.c.0.s8 %v4817
        %v4819 = vlaneseq
        %v4820 = vshrl.u32 %v4819, 7
        %v4821 = vsub.s32 %v4818, %v4820
        %v4822 = vrot.slane %v4815, %v4821
        %4823 = vrot.lane.b32.xlu0 %v4822, 16
        %v4824 = vpop.permute.xlu0 %4823
        %v4828 = vcombine.low %v4791, %v4800
        %v4830 = vunpack.c.l.s4 1983009808
        %v4831 = vunpack.c.0.s8 %v4830
        %v4832 = vlaneseq
        %v4833 = vshrl.u32 %v4832, 7
        %v4834 = vsub.s32 %v4831, %v4833
        %v4835 = vrot.slane %v4828, %v4834
        %4836 = vrot.lane.b32.xlu0 %v4835, 32
        %v4837 = vpop.permute.xlu0 %4836
        %v4841 = vcombine.low %v4792, %v4801
        %v4843 = vunpack.c.l.s4 1983009808
        %v4844 = vunpack.c.0.s8 %v4843
        %v4845 = vlaneseq
        %v4846 = vshrl.u32 %v4845, 7
        %v4847 = vsub.s32 %v4844, %v4846
        %v4848 = vrot.slane %v4841, %v4847
        %4849 = vrot.lane.b32.xlu0 %v4848, 48
        %v4850 = vpop.permute.xlu0 %4849
        %v4852 = vsel %vm1656, %v4811, %v4824
        %v4853 = vsel %vm1788, %v4852, %v4837
        %v4854 = vsel %vm4185, %v4853, %v4850
        %v4855 = vld [vmem:[%s5] sm:$0xff]
        %v4856 = vld [vmem:[%s5 + $0x8] sm:$0xff]
        %v4857 = vld [vmem:[%s5 + $0x10] sm:$0xff]
        %v4858 = vld [vmem:[%s5 + $0x18] sm:$0xff]
        %v4859 = vld [vmem:[%s5 + $0x20] sm:$0xff]
        %v4860 = vld [vmem:[%s5 + $0x28] sm:$0xff]
        %v4861 = vld [vmem:[%s5 + $0x30] sm:$0xff]
        %v4862 = vld [vmem:[%s5 + $0x38] sm:$0xff]
        %v4863 = vld [vmem:[%s7] sm:$0x1]
        %v4865 = vlaneseq
        %v4866 = vshrl.u32 %v4865, 7
        %v4867 = vsub.s32 0, %v4866
        %v4868 = vrot.slane %v4863, %v4867
        %v4871 = vsel %vm4203, %v4854, 0
        %4873 = vmatprep.subr.mxu0 0.0
        %4874 = vmatpush1.msra.mxu0 %v4855
        %4875 = vmatprep.subr.mxu0 0.0
        %4876 = vmatpush1.msra.mxu0 %v4856
        %4877 = vmatprep.subr.mxu0 0.0
        %4878 = vmatpush1.msra.mxu0 %v4857
        %4879 = vmatprep.subr.mxu0 0.0
        %4880 = vmatpush1.msra.mxu0 %v4858
        %4881 = vmatprep.subr.mxu0 0.0
        %4882 = vmatpush1.msra.mxu0 %v4859
        %4883 = vmatprep.subr.mxu0 0.0
        %4884 = vmatpush1.msra.mxu0 %v4860
        %4885 = vmatprep.subr.mxu0 0.0
        %4886 = vmatpush1.msra.mxu0 %v4861
        %4887 = vmatprep.subr.mxu0 0.0
        %4888 = vmatpush1.msra.mxu0 %v4862
        %4889 = vmatprep.subr.mxu0 0.0
        %4890 = vmatpush1.msra.mxu0 0.0
        %4891 = vmatprep.subr.mxu0 0.0
        %4892 = vmatpush1.msra.mxu0 0.0
        %4893 = vmatprep.subr.mxu0 0.0
        %4894 = vmatpush1.msra.mxu0 0.0
        %4895 = vmatprep.subr.mxu0 0.0
        %4896 = vmatpush1.msra.mxu0 0.0
        %4897 = vmatprep.subr.mxu0 0.0
        %4898 = vmatpush1.msra.mxu0 0.0
        %4899 = vmatprep.subr.mxu0 0.0
        %4900 = vmatpush1.msra.mxu0 0.0
        %4901 = vmatprep.subr.mxu0 0.0
        %4902 = vmatpush1.msra.mxu0 0.0
        %4903 = vmatprep.subr.mxu0 0.0
        %4904 = vmatpush1.msra.mxu0 0.0
        %4905 = vmatprep.subr.mxu0 0.0
        %4906 = vmatpush1.msra.mxu0 0.0
        %4907 = vmatprep.subr.mxu0 0.0
        %4908 = vmatpush1.msra.mxu0 0.0
        %4909 = vmatprep.subr.mxu0 0.0
        %4910 = vmatpush1.msra.mxu0 0.0
        %4911 = vmatprep.subr.mxu0 0.0
        %4912 = vmatpush1.msra.mxu0 0.0
        %4913 = vmatprep.subr.mxu0 0.0
        %4914 = vmatpush1.msra.mxu0 0.0
        %4915 = vmatprep.subr.mxu0 0.0
        %4916 = vmatpush1.msra.mxu0 0.0
        %4917 = vmatprep.subr.mxu0 0.0
        %4918 = vmatpush1.msra.mxu0 0.0
        %4919 = vmatprep.subr.mxu0 0.0
        %4920 = vmatpush1.msra.mxu0 0.0
        %4921 = vmatprep.subr.mxu0 0.0
        %4922 = vmatpush1.msra.mxu0 0.0
        %4923 = vmatprep.subr.mxu0 0.0
        %4924 = vmatpush1.msra.mxu0 0.0
        %4925 = vmatprep.subr.mxu0 0.0
        %4926 = vmatpush1.msra.mxu0 0.0
        %4927 = vmatprep.subr.mxu0 0.0
        %4928 = vmatpush1.msra.mxu0 0.0
        %4929 = vmatprep.subr.mxu0 0.0
        %4930 = vmatpush1.msra.mxu0 0.0
        %4931 = vmatprep.subr.mxu0 0.0
        %4932 = vmatpush1.msra.mxu0 0.0
        %4933 = vmatprep.subr.mxu0 0.0
        %4934 = vmatpush1.msra.mxu0 0.0
        %4935 = vmatprep.subr.mxu0 0.0
        %4936 = vmatpush1.msra.mxu0 0.0
        %4937 = vmatprep.mubr.f32.mxu0 0.0
        %4938 = vmatmul.mubr.f32.gmra.mrb[0].mxu0 %v4871
        %v4939 = vpop.f32.mrb[0].mxu0
        %v4940 = vadd.f32 %v4868, %v4939
        %v4941 = vpop.f32.mrb[0].mxu0
        %4942 = vdwg.mxu0
        %4944 = vrot.lane.b32.xlu0 %v4940, 112
        %v4945 = vpop.permute.xlu0 %4944
        %4946 = vrot.lane.b32.xlu0 %v4940, 96
        %v4947 = vpop.permute.xlu0 %4946
        %v4949 = vcombine.low %v4940, %v4947
        %v4951 = vunpack.c.l.s4 1983009808
        %v4952 = vunpack.c.0.s8 %v4951
        %v4953 = vlaneseq
        %v4954 = vshrl.u32 %v4953, 7
        %v4955 = vsub.s32 %v4952, %v4954
        %v4956 = vrot.slane %v4949, %v4955
        %v4959 = vunpack.c.l.s4 1983009808
        %v4960 = vunpack.c.0.s8 %v4959
        %v4961 = vlaneseq
        %v4962 = vshrl.u32 %v4961, 7
        %v4963 = vsub.s32 %v4960, %v4962
        %v4964 = vrot.slane %v4945, %v4963
        %v4965 = vcombine.low %v4956, %v4964
        %v4966 = vcombine.high %v4956, %v4964
        %v4968 = vunpack.c.l.s4 1934713408
        %v4969 = vunpack.c.0.s8 %v4968
        %v4970 = vlaneseq
        %v4971 = vshrl.u32 %v4970, 7
        %v4972 = vsub.s32 %v4969, %v4971
        %v4973 = vrot.slane %v4965, %v4972
        %v4975 = vunpack.c.l.s4 1934713408
        %v4976 = vunpack.c.0.s8 %v4975
        %v4977 = vlaneseq
        %v4978 = vshrl.u32 %v4977, 7
        %v4979 = vsub.s32 %v4976, %v4978
        %v4980 = vrot.slane %v4966, %v4979
        %v4981 = vcombine.high %v4973, 0.0
        %v4982 = vcombine.high %v4980, 0.0
        %v4983 = vld [vmem:[%s8] sm:$0x1]
        %4985 = vrot.lane.b32.xlu0 %v4983, 112
        %v4986 = vpop.permute.xlu0 %4985
        %4987 = vrot.lane.b32.xlu0 %v4983, 96
        %v4988 = vpop.permute.xlu0 %4987
        %v4990 = vadd.f32 %v4973, %v4983
        %v4991 = vsub.f32 0.0, %v4990
        %v4992 = vmul.f32 %v4991, 1.442695
        %v4993 = vpow.pop %v4992
        %v4994 = vadd.f32 %v4993, 1.0
        %v4995 = vrcp.pop %v4994
        %v4996 = vmul.f32 1.0, %v4995
        %v4997 = vlaneseq
        %v4998 = vshrl.u32 %v4997, 7
        %v4999 = vsub.s32 0, %v4998
        %v5000 = vrot.slane %v4986, %v4999
        %v5002 = vadd.f32 %v4973, %v5000
        %v5003 = vsub.f32 0.0, %v5002
        %v5004 = vmul.f32 %v5003, 1.442695
        %v5005 = vpow.pop %v5004
        %v5006 = vadd.f32 %v5005, 1.0
        %v5007 = vrcp.pop %v5006
        %v5008 = vmul.f32 1.0, %v5007
        %v5009 = vmul.f32 %v4996, %v4988
        %v5011 = vrot.slane %v5009, 6
        %v5013 = vadd.f32 %v4973, %v5011
        %v5014 = vtanh.pop %v5013
        %v5015 = vsub.f32 1.0, %v5008
        %v5017 = vrot.slane %v5014, 1
        %v5019 = vmul.f32 %v5015, %v5017
        %v5020 = vld [vmem:[%s6] sm:$0xff]
        %v5021 = vld [vmem:[%s6 + $0x8] sm:$0xff]
        %v5023 = vrot.slane %v5019, 1
        %v5024 = vsel %vm1656, %v5023, 0
        %5026 = vmatprep.subr.mxu0 0.0
        %5027 = vmatpush1.msra.mxu0 %v5020
        %5028 = vmatprep.subr.mxu0 0.0
        %5029 = vmatpush1.msra.mxu0 %v5021
        %5030 = vmatprep.subr.mxu0 0.0
        %5031 = vmatpush1.msra.mxu0 0.0
        %5032 = vmatprep.subr.mxu0 0.0
        %5033 = vmatpush1.msra.mxu0 0.0
        %5034 = vmatprep.subr.mxu0 0.0
        %5035 = vmatpush1.msra.mxu0 0.0
        %5036 = vmatprep.subr.mxu0 0.0
        %5037 = vmatpush1.msra.mxu0 0.0
        %5038 = vmatprep.subr.mxu0 0.0
        %5039 = vmatpush1.msra.mxu0 0.0
        %5040 = vmatprep.subr.mxu0 0.0
        %5041 = vmatpush1.msra.mxu0 0.0
        %5042 = vmatprep.subr.mxu0 0.0
        %5043 = vmatpush1.msra.mxu0 0.0
        %5044 = vmatprep.subr.mxu0 0.0
        %5045 = vmatpush1.msra.mxu0 0.0
        %5046 = vmatprep.subr.mxu0 0.0
        %5047 = vmatpush1.msra.mxu0 0.0
        %5048 = vmatprep.subr.mxu0 0.0
        %5049 = vmatpush1.msra.mxu0 0.0
        %5050 = vmatprep.subr.mxu0 0.0
        %5051 = vmatpush1.msra.mxu0 0.0
        %5052 = vmatprep.subr.mxu0 0.0
        %5053 = vmatpush1.msra.mxu0 0.0
        %5054 = vmatprep.subr.mxu0 0.0
        %5055 = vmatpush1.msra.mxu0 0.0
        %5056 = vmatprep.subr.mxu0 0.0
        %5057 = vmatpush1.msra.mxu0 0.0
        %5058 = vmatprep.subr.mxu0 0.0
        %5059 = vmatpush1.msra.mxu0 0.0
        %5060 = vmatprep.subr.mxu0 0.0
        %5061 = vmatpush1.msra.mxu0 0.0
        %5062 = vmatprep.subr.mxu0 0.0
        %5063 = vmatpush1.msra.mxu0 0.0
        %5064 = vmatprep.subr.mxu0 0.0
        %5065 = vmatpush1.msra.mxu0 0.0
        %5066 = vmatprep.subr.mxu0 0.0
        %5067 = vmatpush1.msra.mxu0 0.0
        %5068 = vmatprep.subr.mxu0 0.0
        %5069 = vmatpush1.msra.mxu0 0.0
        %5070 = vmatprep.subr.mxu0 0.0
        %5071 = vmatpush1.msra.mxu0 0.0
        %5072 = vmatprep.subr.mxu0 0.0
        %5073 = vmatpush1.msra.mxu0 0.0
        %5074 = vmatprep.subr.mxu0 0.0
        %5075 = vmatpush1.msra.mxu0 0.0
        %5076 = vmatprep.subr.mxu0 0.0
        %5077 = vmatpush1.msra.mxu0 0.0
        %5078 = vmatprep.subr.mxu0 0.0
        %5079 = vmatpush1.msra.mxu0 0.0
        %5080 = vmatprep.subr.mxu0 0.0
        %5081 = vmatpush1.msra.mxu0 0.0
        %5082 = vmatprep.subr.mxu0 0.0
        %5083 = vmatpush1.msra.mxu0 0.0
        %5084 = vmatprep.subr.mxu0 0.0
        %5085 = vmatpush1.msra.mxu0 0.0
        %5086 = vmatprep.subr.mxu0 0.0
        %5087 = vmatpush1.msra.mxu0 0.0
        %5088 = vmatprep.subr.mxu0 0.0
        %5089 = vmatpush1.msra.mxu0 0.0
        %5090 = vmatprep.mubr.f32.mxu0 0.0
        %5091 = vmatmul.mubr.f32.gmra.mrb[0].mxu0 %v5024
        %v5092 = vpop.f32.mrb[0].mxu0
        %v5093 = vadd.f32 %v4983, %v5092
        %v5094 = vpop.f32.mrb[0].mxu0
        %5095 = vdwg.mxu0
        %5097 = vrot.lane.b32.xlu0 %v5093, 112
        %v5098 = vpop.permute.xlu0 %5097
        %5099 = vrot.lane.b32.xlu0 %v5093, 96
        %v5100 = vpop.permute.xlu0 %5099
        %v5102 = vcombine.low %v5093, %v5100
        %v5104 = vunpack.c.l.s4 1983009808
        %v5105 = vunpack.c.0.s8 %v5104
        %v5106 = vlaneseq
        %v5107 = vshrl.u32 %v5106, 7
        %v5108 = vsub.s32 %v5105, %v5107
        %v5109 = vrot.slane %v5102, %v5108
        %v5111 = vcombine.low %v5109, %v5098
        %v5113 = vunpack.c.l.s4 1934713408
        %v5114 = vunpack.c.0.s8 %v5113
        %v5115 = vlaneseq
        %v5116 = vshrl.u32 %v5115, 7
        %v5117 = vsub.s32 %v5114, %v5116
        %v5118 = vrot.slane %v5111, %v5117
        %v5119 = vadd.f32 %v4981, %v5118
        %v5120 = vsub.f32 0.0, %v5119
        %v5121 = vmul.f32 %v5120, 1.442695
        %v5122 = vpow.pop %v5121
        %v5123 = vadd.f32 %v5122, 1.0
        %v5124 = vrcp.pop %v5123
        %v5125 = vmul.f32 1.0, %v5124
        %v5127 = vrot.slane %v5118, 2
        %v5129 = vmul.f32 %v5125, %v5127
        %v5131 = vrot.slane %v5129, 6
        %v5133 = vadd.f32 %v4981, %v5131
        %v5134 = vtanh.pop %v5133
        %v5135 = vsub.f32 1.0, %v5125
        %v5137 = vrot.slane %v5134, 1
        %v5139 = vmul.f32 %v5135, %v5137
        %v5140 = vmul.f32 %v5125, %v5019
        %v5141 = vadd.f32 %v5139, %v5140
        %v5143 = vrot.slane %v5141, 1
        %v5144 = vsel %vm1656, %v5143, 0
        %5146 = vmatprep.subr.mxu0 0.0
        %5147 = vmatpush1.msra.mxu0 %v5020
        %5148 = vmatprep.subr.mxu0 0.0
        %5149 = vmatpush1.msra.mxu0 %v5021
        %5150 = vmatprep.subr.mxu0 0.0
        %5151 = vmatpush1.msra.mxu0 0.0
        %5152 = vmatprep.subr.mxu0 0.0
        %5153 = vmatpush1.msra.mxu0 0.0
        %5154 = vmatprep.subr.mxu0 0.0
        %5155 = vmatpush1.msra.mxu0 0.0
        %5156 = vmatprep.subr.mxu0 0.0
        %5157 = vmatpush1.msra.mxu0 0.0
        %5158 = vmatprep.subr.mxu0 0.0
        %5159 = vmatpush1.msra.mxu0 0.0
        %5160 = vmatprep.subr.mxu0 0.0
        %5161 = vmatpush1.msra.mxu0 0.0
        %5162 = vmatprep.subr.mxu0 0.0
        %5163 = vmatpush1.msra.mxu0 0.0
        %5164 = vmatprep.subr.mxu0 0.0
        %5165 = vmatpush1.msra.mxu0 0.0
        %5166 = vmatprep.subr.mxu0 0.0
        %5167 = vmatpush1.msra.mxu0 0.0
        %5168 = vmatprep.subr.mxu0 0.0
        %5169 = vmatpush1.msra.mxu0 0.0
        %5170 = vmatprep.subr.mxu0 0.0
        %5171 = vmatpush1.msra.mxu0 0.0
        %5172 = vmatprep.subr.mxu0 0.0
        %5173 = vmatpush1.msra.mxu0 0.0
        %5174 = vmatprep.subr.mxu0 0.0
        %5175 = vmatpush1.msra.mxu0 0.0
        %5176 = vmatprep.subr.mxu0 0.0
        %5177 = vmatpush1.msra.mxu0 0.0
        %5178 = vmatprep.subr.mxu0 0.0
        %5179 = vmatpush1.msra.mxu0 0.0
        %5180 = vmatprep.subr.mxu0 0.0
        %5181 = vmatpush1.msra.mxu0 0.0
        %5182 = vmatprep.subr.mxu0 0.0
        %5183 = vmatpush1.msra.mxu0 0.0
        %5184 = vmatprep.subr.mxu0 0.0
        %5185 = vmatpush1.msra.mxu0 0.0
        %5186 = vmatprep.subr.mxu0 0.0
        %5187 = vmatpush1.msra.mxu0 0.0
        %5188 = vmatprep.subr.mxu0 0.0
        %5189 = vmatpush1.msra.mxu0 0.0
        %5190 = vmatprep.subr.mxu0 0.0
        %5191 = vmatpush1.msra.mxu0 0.0
        %5192 = vmatprep.subr.mxu0 0.0
        %5193 = vmatpush1.msra.mxu0 0.0
        %5194 = vmatprep.subr.mxu0 0.0
        %5195 = vmatpush1.msra.mxu0 0.0
        %5196 = vmatprep.subr.mxu0 0.0
        %5197 = vmatpush1.msra.mxu0 0.0
        %5198 = vmatprep.subr.mxu0 0.0
        %5199 = vmatpush1.msra.mxu0 0.0
        %5200 = vmatprep.subr.mxu0 0.0
        %5201 = vmatpush1.msra.mxu0 0.0
        %5202 = vmatprep.subr.mxu0 0.0
        %5203 = vmatpush1.msra.mxu0 0.0
        %5204 = vmatprep.subr.mxu0 0.0
        %5205 = vmatpush1.msra.mxu0 0.0
        %5206 = vmatprep.subr.mxu0 0.0
        %5207 = vmatpush1.msra.mxu0 0.0
        %5208 = vmatprep.subr.mxu0 0.0
        %5209 = vmatpush1.msra.mxu0 0.0
        %5210 = vmatprep.mubr.f32.mxu0 0.0
        %5211 = vmatmul.mubr.f32.gmra.mrb[0].mxu0 %v5144
        %v5212 = vpop.f32.mrb[0].mxu0
        %v5213 = vadd.f32 %v4983, %v5212
        %v5214 = vpop.f32.mrb[0].mxu0
        %5215 = vdwg.mxu0
        %5217 = vrot.lane.b32.xlu0 %v5213, 112
        %v5218 = vpop.permute.xlu0 %5217
        %5219 = vrot.lane.b32.xlu0 %v5213, 96
        %v5220 = vpop.permute.xlu0 %5219
        %v5222 = vcombine.low %v5213, %v5220
        %v5224 = vunpack.c.l.s4 1983009808
        %v5225 = vunpack.c.0.s8 %v5224
        %v5226 = vlaneseq
        %v5227 = vshrl.u32 %v5226, 7
        %v5228 = vsub.s32 %v5225, %v5227
        %v5229 = vrot.slane %v5222, %v5228
        %v5231 = vcombine.low %v5229, %v5218
        %v5233 = vunpack.c.l.s4 1934713408
        %v5234 = vunpack.c.0.s8 %v5233
        %v5235 = vlaneseq
        %v5236 = vshrl.u32 %v5235, 7
        %v5237 = vsub.s32 %v5234, %v5236
        %v5238 = vrot.slane %v5231, %v5237
        %v5239 = vadd.f32 %v4980, %v5238
        %v5240 = vsub.f32 0.0, %v5239
        %v5241 = vmul.f32 %v5240, 1.442695
        %v5242 = vpow.pop %v5241
        %v5243 = vadd.f32 %v5242, 1.0
        %v5244 = vrcp.pop %v5243
        %v5245 = vmul.f32 1.0, %v5244
        %v5247 = vrot.slane %v5238, 2
        %v5249 = vmul.f32 %v5245, %v5247
        %v5251 = vrot.slane %v5249, 6
        %v5253 = vadd.f32 %v4980, %v5251
        %v5254 = vtanh.pop %v5253
        %v5255 = vsub.f32 1.0, %v5245
        %v5257 = vrot.slane %v5254, 1
        %v5259 = vmul.f32 %v5255, %v5257
        %v5260 = vmul.f32 %v5245, %v5141
        %v5261 = vadd.f32 %v5259, %v5260
        %v5263 = vrot.slane %v5261, 1
        %v5264 = vsel %vm1656, %v5263, 0
        %5266 = vmatprep.subr.mxu0 0.0
        %5267 = vmatpush1.msra.mxu0 %v5020
        %5268 = vmatprep.subr.mxu0 0.0
        %5269 = vmatpush1.msra.mxu0 %v5021
        %5270 = vmatprep.subr.mxu0 0.0
        %5271 = vmatpush1.msra.mxu0 0.0
        %5272 = vmatprep.subr.mxu0 0.0
        %5273 = vmatpush1.msra.mxu0 0.0
        %5274 = vmatprep.subr.mxu0 0.0
        %5275 = vmatpush1.msra.mxu0 0.0
        %5276 = vmatprep.subr.mxu0 0.0
        %5277 = vmatpush1.msra.mxu0 0.0
        %5278 = vmatprep.subr.mxu0 0.0
        %5279 = vmatpush1.msra.mxu0 0.0
        %5280 = vmatprep.subr.mxu0 0.0
        %5281 = vmatpush1.msra.mxu0 0.0
        %5282 = vmatprep.subr.mxu0 0.0
        %5283 = vmatpush1.msra.mxu0 0.0
        %5284 = vmatprep.subr.mxu0 0.0
        %5285 = vmatpush1.msra.mxu0 0.0
        %5286 = vmatprep.subr.mxu0 0.0
        %5287 = vmatpush1.msra.mxu0 0.0
        %5288 = vmatprep.subr.mxu0 0.0
        %5289 = vmatpush1.msra.mxu0 0.0
        %5290 = vmatprep.subr.mxu0 0.0
        %5291 = vmatpush1.msra.mxu0 0.0
        %5292 = vmatprep.subr.mxu0 0.0
        %5293 = vmatpush1.msra.mxu0 0.0
        %5294 = vmatprep.subr.mxu0 0.0
        %5295 = vmatpush1.msra.mxu0 0.0
        %5296 = vmatprep.subr.mxu0 0.0
        %5297 = vmatpush1.msra.mxu0 0.0
        %5298 = vmatprep.subr.mxu0 0.0
        %5299 = vmatpush1.msra.mxu0 0.0
        %5300 = vmatprep.subr.mxu0 0.0
        %5301 = vmatpush1.msra.mxu0 0.0
        %5302 = vmatprep.subr.mxu0 0.0
        %5303 = vmatpush1.msra.mxu0 0.0
        %5304 = vmatprep.subr.mxu0 0.0
        %5305 = vmatpush1.msra.mxu0 0.0
        %5306 = vmatprep.subr.mxu0 0.0
        %5307 = vmatpush1.msra.mxu0 0.0
        %5308 = vmatprep.subr.mxu0 0.0
        %5309 = vmatpush1.msra.mxu0 0.0
        %5310 = vmatprep.subr.mxu0 0.0
        %5311 = vmatpush1.msra.mxu0 0.0
        %5312 = vmatprep.subr.mxu0 0.0
        %5313 = vmatpush1.msra.mxu0 0.0
        %5314 = vmatprep.subr.mxu0 0.0
        %5315 = vmatpush1.msra.mxu0 0.0
        %5316 = vmatprep.subr.mxu0 0.0
        %5317 = vmatpush1.msra.mxu0 0.0
        %5318 = vmatprep.subr.mxu0 0.0
        %5319 = vmatpush1.msra.mxu0 0.0
        %5320 = vmatprep.subr.mxu0 0.0
        %5321 = vmatpush1.msra.mxu0 0.0
        %5322 = vmatprep.subr.mxu0 0.0
        %5323 = vmatpush1.msra.mxu0 0.0
        %5324 = vmatprep.subr.mxu0 0.0
        %5325 = vmatpush1.msra.mxu0 0.0
        %5326 = vmatprep.subr.mxu0 0.0
        %5327 = vmatpush1.msra.mxu0 0.0
        %5328 = vmatprep.subr.mxu0 0.0
        %5329 = vmatpush1.msra.mxu0 0.0
        %5330 = vmatprep.mubr.f32.mxu0 0.0
        %5331 = vmatmul.mubr.f32.gmra.mrb[0].mxu0 %v5264
        %v5332 = vpop.f32.mrb[0].mxu0
        %v5333 = vadd.f32 %v4983, %v5332
        %v5334 = vpop.f32.mrb[0].mxu0
        %5335 = vdwg.mxu0
        %5337 = vrot.lane.b32.xlu0 %v5333, 112
        %v5338 = vpop.permute.xlu0 %5337
        %5339 = vrot.lane.b32.xlu0 %v5333, 96
        %v5340 = vpop.permute.xlu0 %5339
        %v5342 = vcombine.low %v5333, %v5340
        %v5344 = vunpack.c.l.s4 1983009808
        %v5345 = vunpack.c.0.s8 %v5344
        %v5346 = vlaneseq
        %v5347 = vshrl.u32 %v5346, 7
        %v5348 = vsub.s32 %v5345, %v5347
        %v5349 = vrot.slane %v5342, %v5348
        %v5351 = vcombine.low %v5349, %v5338
        %v5353 = vunpack.c.l.s4 1934713408
        %v5354 = vunpack.c.0.s8 %v5353
        %v5355 = vlaneseq
        %v5356 = vshrl.u32 %v5355, 7
        %v5357 = vsub.s32 %v5354, %v5356
        %v5358 = vrot.slane %v5351, %v5357
        %v5359 = vadd.f32 %v4982, %v5358
        %v5360 = vsub.f32 0.0, %v5359
        %v5361 = vmul.f32 %v5360, 1.442695
        %v5362 = vpow.pop %v5361
        %v5363 = vadd.f32 %v5362, 1.0
        %v5364 = vrcp.pop %v5363
        %v5365 = vmul.f32 1.0, %v5364
        %v5367 = vrot.slane %v5358, 2
        %v5369 = vmul.f32 %v5365, %v5367
        %v5371 = vrot.slane %v5369, 6
        %v5373 = vadd.f32 %v4982, %v5371
        %v5374 = vtanh.pop %v5373
        %v5375 = vsub.f32 1.0, %v5365
        %v5377 = vrot.slane %v5374, 1
        %v5379 = vmul.f32 %v5375, %v5377
        %v5380 = vmul.f32 %v5365, %v5261
        %v5381 = vadd.f32 %v5379, %v5380
        %5382 = vrot.lane.b32.xlu0 %v5141, 16
        %v5383 = vpop.permute.xlu0 %5382
        %5385 = vrot.lane.b32.xlu0 %v5261, 32
        %v5386 = vpop.permute.xlu0 %5385
        %5389 = vrot.lane.b32.xlu0 %v5381, 48
        %v5390 = vpop.permute.xlu0 %5389
        %v5392 = vsel %vm1656, %v5019, %v5383
        %v5393 = vsel %vm1788, %v5392, %v5386
        %v5394 = vsel %vm4185, %v5393, %v5390
        %v5395 = vld [vmem:[%s9] sm:$0xff]
        %v5396 = vld [vmem:[%s9 + $0x8] sm:$0xff]
        %v5397 = vld [vmem:[%s9 + $0x10] sm:$0xff]
        %v5398 = vld [vmem:[%s9 + $0x18] sm:$0xff]
        %v5399 = vld [vmem:[%s9 + $0x20] sm:$0xff]
        %v5400 = vld [vmem:[%s9 + $0x28] sm:$0xff]
        %v5401 = vld [vmem:[%s9 + $0x30] sm:$0xff]
        %v5402 = vld [vmem:[%s9 + $0x38] sm:$0xff]
        %v5403 = vld [vmem:[%s10] sm:$0x1]
        %v5405 = vrot.slane %v5394, 1
        %v5406 = vsel %vm4203, %v5405, 0
        %5408 = vmatprep.subr.mxu0 0.0
        %5409 = vmatpush1.msra.mxu0 %v5395
        %5410 = vmatprep.subr.mxu0 0.0
        %5411 = vmatpush1.msra.mxu0 %v5396
        %5412 = vmatprep.subr.mxu0 0.0
        %5413 = vmatpush1.msra.mxu0 %v5397
        %5414 = vmatprep.subr.mxu0 0.0
        %5415 = vmatpush1.msra.mxu0 %v5398
        %5416 = vmatprep.subr.mxu0 0.0
        %5417 = vmatpush1.msra.mxu0 %v5399
        %5418 = vmatprep.subr.mxu0 0.0
        %5419 = vmatpush1.msra.mxu0 %v5400
        %5420 = vmatprep.subr.mxu0 0.0
        %5421 = vmatpush1.msra.mxu0 %v5401
        %5422 = vmatprep.subr.mxu0 0.0
        %5423 = vmatpush1.msra.mxu0 %v5402
        %5424 = vmatprep.subr.mxu0 0.0
        %5425 = vmatpush1.msra.mxu0 0.0
        %5426 = vmatprep.subr.mxu0 0.0
        %5427 = vmatpush1.msra.mxu0 0.0
        %5428 = vmatprep.subr.mxu0 0.0
        %5429 = vmatpush1.msra.mxu0 0.0
        %5430 = vmatprep.subr.mxu0 0.0
        %5431 = vmatpush1.msra.mxu0 0.0
        %5432 = vmatprep.subr.mxu0 0.0
        %5433 = vmatpush1.msra.mxu0 0.0
        %5434 = vmatprep.subr.mxu0 0.0
        %5435 = vmatpush1.msra.mxu0 0.0
        %5436 = vmatprep.subr.mxu0 0.0
        %5437 = vmatpush1.msra.mxu0 0.0
        %5438 = vmatprep.subr.mxu0 0.0
        %5439 = vmatpush1.msra.mxu0 0.0
        %5440 = vmatprep.subr.mxu0 0.0
        %5441 = vmatpush1.msra.mxu0 0.0
        %5442 = vmatprep.subr.mxu0 0.0
        %5443 = vmatpush1.msra.mxu0 0.0
        %5444 = vmatprep.subr.mxu0 0.0
        %5445 = vmatpush1.msra.mxu0 0.0
        %5446 = vmatprep.subr.mxu0 0.0
        %5447 = vmatpush1.msra.mxu0 0.0
        %5448 = vmatprep.subr.mxu0 0.0
        %5449 = vmatpush1.msra.mxu0 0.0
        %5450 = vmatprep.subr.mxu0 0.0
        %5451 = vmatpush1.msra.mxu0 0.0
        %5452 = vmatprep.subr.mxu0 0.0
        %5453 = vmatpush1.msra.mxu0 0.0
        %5454 = vmatprep.subr.mxu0 0.0
        %5455 = vmatpush1.msra.mxu0 0.0
        %5456 = vmatprep.subr.mxu0 0.0
        %5457 = vmatpush1.msra.mxu0 0.0
        %5458 = vmatprep.subr.mxu0 0.0
        %5459 = vmatpush1.msra.mxu0 0.0
        %5460 = vmatprep.subr.mxu0 0.0
        %5461 = vmatpush1.msra.mxu0 0.0
        %5462 = vmatprep.subr.mxu0 0.0
        %5463 = vmatpush1.msra.mxu0 0.0
        %5464 = vmatprep.subr.mxu0 0.0
        %5465 = vmatpush1.msra.mxu0 0.0
        %5466 = vmatprep.subr.mxu0 0.0
        %5467 = vmatpush1.msra.mxu0 0.0
        %5468 = vmatprep.subr.mxu0 0.0
        %5469 = vmatpush1.msra.mxu0 0.0
        %5470 = vmatprep.subr.mxu0 0.0
        %5471 = vmatpush1.msra.mxu0 0.0
        %5472 = vmatprep.mubr.f32.mxu0 0.0
        %5473 = vmatmul.mubr.f32.gmra.mrb[0].mxu0 %v5406
        %v5474 = vpop.f32.mrb[0].mxu0
        %v5475 = vadd.f32 %v5403, %v5474
        %v5476 = vpop.f32.mrb[0].mxu0
        %5477 = vdwg.mxu0
        %vm5478 = vcmask 253952
        %5479 = vst.msk [vmem:[%s378] sm:$0x1] %vm5478, %v5475
        %s5480 = sand.u32 %s269, 1
        %s5481 = scalar_lea.sflag [#allocation3], %s5480
        %s5482 = sand.u32 %s269, 1
        %s5483 = scalar_lea.vmem [#allocation2], %s5482
        // Predicated region
        $region65: #{_lambda_.1} parent=63 // pred_check
          %p5484 = pneg %p279
        $region66: #{_lambda_.1} parent=63 // pred_check_branch
          %5486 = sbr.rel (%p5484) target = $region68
        $region67: #{_lambda_.1} parent=63 // pred_region
          %s5488 = ssub.s32 16, 16
          %5489 = vsyncadd %s5481, %s5488
          %s5490 = smul.addr %s25, 16
          %s5491 = scalar_lea.hbm %s11, %s5490
          %s5493 = sshll.u32 %s5483, 4
          %s5494 = int_to_ptr.vmem [resolvable:$true] %s5493
          %5496 = dma.vmem_to_hbm [thread:$0]  %s5494, 16, %s5491, %s5481
        $region68: #{_lambda_.1} parent=63 // pred_fallthru
          _
      $region64: #{_lambda_.1} parent=5 // pred_fallthru
        _
      %p5497 = scmp.le.s32.totalorder 2, %s20
      // Predicated region
      $region69: #{_lambda_.1} parent=5 // pred_check
        %p5498 = pneg %p5497
      $region70: #{_lambda_.1} parent=5 // pred_check_branch
        %5500 = sbr.rel (%p5498) target = $region72
      $region71: #{_lambda_.1} parent=5 // pred_region
        %s5501 = ssub.s32 %s20, 2
        // Predicated region
        $region73: #{_lambda_.1} parent=71 // pred_check
          %p5502 = pneg %p285
        $region74: #{_lambda_.1} parent=71 // pred_check_branch
          %5504 = sbr.rel (%p5502) target = $region76
        $region75: #{_lambda_.1} parent=71 // pred_region
          %s5505 = sand.u32 %s270, 1
          %s5506 = scalar_lea.sflag [#allocation3], %s5505
          %s5507 = sand.u32 %s270, 1
          %s5508 = scalar_lea.vmem [#allocation2], %s5507
          %5509 = dma.done %s5506, 16
        $region76: #{_lambda_.1} parent=71 // pred_fallthru
          _
      $region72: #{_lambda_.1} parent=5 // pred_fallthru
        _
    $region6: #{_lambda_.1} parent=1 // loop_footer
      %s24 = sadd.s32 1, %s20
    $region7: #{_lambda_.1} parent=1 // loop_footer_branch
      %19 = sbr.rel target = $region3
    $region8: #{_lambda_.1} parent=1 // loop_exit
      _
    %5510 = vsyncpa [#allocation3], 1
    %s5511 = scalar_lea.sflag [#allocation3], 1
    %5512 = vsyncpa %s5511, 1

</llo_original>
